<compile_context>
chip_gen: v7x
topology: tpu7x:2x2x1
jax: 0.10.0
libtpu: 0.0.40
codegen_flags: <defaults>
</compile_context>

<pallas_src>
import jax
import jax.numpy as jnp
import numpy as np
from jax.experimental import pallas as pl
from jax.experimental.pallas import tpu as pltpu


# ----------------------------------------------------------------------------
# Pallas kernel (built per-config so unused inputs/branches are not traced)
# ----------------------------------------------------------------------------
def _make_down_kernel(*, cin, cout, num_groups, with_groups):
    cpg = cout // num_groups  # channels per group

    def kernel(*refs):
        if with_groups:
            (x_ref, w1_ref, w2_ref, par_ref, gmask_ref, o_ref, pad_ref) = refs
        else:
            (x_ref, w1_ref, w2_ref, par_ref, o_ref, pad_ref) = refs
            gmask_ref = None

        nb, hp, wp, _ = x_ref.shape
        p = hp * wp
        m = nb * p
        cmax = pad_ref.shape[-1]

        # Packed per-channel params: one (k, Cout) array instead of k inputs.
        if with_groups:
            b1 = par_ref[0:1, :]
            g1, be1 = par_ref[1:2, :], par_ref[2:3, :]
            b2 = par_ref[3:4, :]
            g2, be2 = par_ref[4:5, :], par_ref[5:6, :]
        else:  # bias is exactly cancelled by per-channel GroupNorm -> dropped
            g1, be1 = par_ref[0:1, :], par_ref[1:2, :]
            g2, be2 = par_ref[2:3, :], par_ref[3:4, :]

        # Zero only the 1-pixel border of the SHARED pad scratch, once per
        # step (serves both convs; the interior is fully overwritten).
        zrow = jnp.zeros((nb, 1, wp + 2, cmax), jnp.bfloat16)
        zcol = jnp.zeros((nb, hp + 2, 1, cmax), jnp.bfloat16)
        pad_ref[:, 0:1, :, :] = zrow
        pad_ref[:, hp + 1:hp + 2, :, :] = zrow
        pad_ref[:, :, 0:1, :] = zcol
        pad_ref[:, :, wp + 1:wp + 2, :] = zcol

        # ---- MaxPool2d(2): the four 2x2 window taps were pre-gathered onto
        # the channel axis in the wrapper, so pooling is four lane slices.
        xv = x_ref[...]
        pooled = jnp.maximum(
            jnp.maximum(xv[..., 0 * cin:1 * cin], xv[..., 1 * cin:2 * cin]),
            jnp.maximum(xv[..., 2 * cin:3 * cin], xv[..., 3 * cin:4 * cin]))

        def conv3x3(src_bf16, c, w_ref):
            # "SAME" 3x3 conv as one im2col matmul (M = Nb*Hp*Wp, K = 9*c),
            # bf16 operands, f32 accumulation on the MXU.
            pad_ref[:, 1:hp + 1, 1:wp + 1, :c] = src_bf16
            patches = [pad_ref[:, dy:dy + hp, dx:dx + wp, :c]
                       for dy in range(3) for dx in range(3)]
            cols = jnp.concatenate(patches, axis=-1).reshape(m, 9 * c)
            return jnp.dot(cols, w_ref[...], preferred_element_type=jnp.float32)

        def group_sum(stat):  # (nb, 1, cout) -> group-aggregated stat
            if cpg == 1:
                return stat
            return jnp.dot(stat.reshape(nb, cout), gmask_ref[...],
                           preferred_element_type=jnp.float32).reshape(nb, 1, cout)

        def group_norm(h3, gamma, beta):
            # Per-sample, per-group stats; two-pass variance; fused affine.
            inv_count = 1.0 / float(p * cpg)
            mean = group_sum(jnp.sum(h3, axis=1, keepdims=True)) * inv_count
            cen = h3 - mean
            var = group_sum(jnp.sum(cen * cen, axis=1, keepdims=True)) * inv_count
            scale = jax.lax.rsqrt(var + 1e-5) * gamma       # fused GN affine
            return cen * scale + beta

        def leaky(h):
            return jnp.where(h > 0, h, 0.2 * h)

        # ---- DoubleConv -----------------------------------------------------
        h = conv3x3(pooled, cin, w1_ref)                    # (M, Cout) f32
        if with_groups:
            h = h + b1                  # bias only when GN does not cancel it
        h = leaky(group_norm(h.reshape(nb, p, cout), g1, be1))
        # Dropout(0.5) is identity at inference time.
        # TODO(synk): training-mode dropout (pltpu.prng_* mask + 2x scale).
        h = conv3x3(h.reshape(nb, hp, wp, cout).astype(jnp.bfloat16), cout, w2_ref)
        if with_groups:
            h = h + b2
        h = leaky(group_norm(h.reshape(nb, p, cout), g2, be2))  # (nb, P, Cout)

        # Writeback as (nb, Cout, P): per-sample 2D minor transpose (static
        # unroll over the small nb); wrapper reshape to NCHW is then free.
        for s in range(nb):
            o_ref[s] = h[s].T

    return kernel


# ----------------------------------------------------------------------------
# Wrapper helpers (glue: layout, param prep, tiling heuristics)
# ----------------------------------------------------------------------------
def standardize_weight(w):
    # Weight standardization exactly as in the PyTorch Conv2d subclass.
    # torch.Tensor.std(dim=1) is unbiased -> ddof=1 here (verified).
    wm = jnp.mean(w, axis=(1, 2, 3), keepdims=True)
    wc = w - wm
    std = jnp.std(wc.reshape(w.shape[0], -1), axis=1, ddof=1)
    std = std.reshape(-1, 1, 1, 1) + 1e-5
    return wc / std


def weight_to_matmul_form(w):
    # (O, I, 3, 3) -> (9*I, O), row index = (dy*3 + dx)*I + c
    return jnp.transpose(w, (2, 3, 1, 0)).reshape(-1, w.shape[0])


def _num_tensorcores():
    try:
        return max(1, int(getattr(jax.devices()[0], "num_cores", 1) or 1))
    except Exception:
        return 1


def _pick_batch_block(n, p, num_cores=1):
    # Prefer: (1) a grid whose length is a multiple of the TensorCore count
    # (keeps all v7x cores busy), (2) 128-512 matmul rows per step, (3) >=2
    # steps for pipelining, (4) larger M otherwise.
    best_d, best_key = 1, None
    for d in range(1, n + 1):
        if n % d:
            continue
        steps = n // d
        mrows = d * p
        key = (steps % num_cores == 0,
               128 <= mrows <= 512,
               steps >= 2,
               mrows if mrows <= 512 else -mrows)
        if best_key is None or key > best_key:
            best_d, best_key = d, key
    assert n % best_d == 0
    return best_d


def _padded_bytes(shape, dtype):
    # VMEM footprint estimate with lane (128) / sublane (8*32bit packing) pad.
    itemsize = np.dtype(dtype).itemsize
    sub = {4: 8, 2: 16, 1: 32}.get(itemsize, 8)
    dims = list(shape) if len(shape) >= 2 else [1] + list(shape)
    dims[-1] = -(-dims[-1] // 128) * 128
    dims[-2] = -(-dims[-2] // sub) * sub
    total = itemsize
    for d in dims:
        total *= d
    return total


# ----------------------------------------------------------------------------
# Forward wrapper
# ----------------------------------------------------------------------------
def down_forward(x_nchw, params, *, num_groups=32):
    (w1, b1, g1, be1, w2, b2, g2, be2) = params
    cout = w1.shape[0]
    n, cin, hgt, wid = x_nchw.shape
    assert hgt % 2 == 0 and wid % 2 == 0
    assert cout % num_groups == 0
    hp, wp = hgt // 2, wid // 2
    p = hp * wp
    cpg = cout // num_groups
    with_groups = cpg > 1
    cmax = max(cin, cout)

    # Layout glue: NCHW -> NHWC, gather the four 2x2 pool taps onto channels,
    # cast to bf16 (halves input DMA; max() commutes with monotone rounding).
    x = jnp.transpose(x_nchw, (0, 2, 3, 1))
    xw = (x.reshape(n, hp, 2, wp, 2, cin)
           .transpose(0, 1, 3, 2, 4, 5)
           .reshape(n, hp, wp, 4 * cin)
           .astype(jnp.bfloat16))

    # Weight standardization stays in f32; matmul operands stored as bf16.
    w1m = weight_to_matmul_form(standardize_weight(w1)).astype(jnp.bfloat16)
    w2m = weight_to_matmul_form(standardize_weight(w2)).astype(jnp.bfloat16)

    if with_groups:
        par = jnp.stack([b1, g1, be1, b2, g2, be2]).astype(jnp.float32)
        gidx = jnp.arange(cout) // cpg
        gmask = (gidx[:, None] == gidx[None, :]).astype(jnp.float32)
    else:
        # cpg == 1: conv biases are cancelled by GroupNorm -> not shipped.
        par = jnp.stack([g1, be1, g2, be2]).astype(jnp.float32)
        gmask = None

    nb = _pick_batch_block(n, p, _num_tensorcores())
    grid = (n // nb,)

    kernel = _make_down_kernel(cin=cin, cout=cout, num_groups=num_groups,
                               with_groups=with_groups)

    def full_spec(a):
        return pl.BlockSpec(a.shape, lambda i: (0,) * a.ndim)

    in_specs = [pl.BlockSpec((nb, hp, wp, 4 * cin), lambda i: (i, 0, 0, 0)),
                full_spec(w1m), full_spec(w2m), full_spec(par)]
    inputs = [xw, w1m, w2m, par]
    if with_groups:
        in_specs.append(full_spec(gmask))
        inputs.append(gmask)

    # VMEM budget derived from actual (padded) buffer sizes, with headroom.
    est = (2 * _padded_bytes((nb, hp, wp, 4 * cin), jnp.bfloat16)
           + 2 * _padded_bytes((nb, cout, p), jnp.float32)
           + 2 * _padded_bytes(w1m.shape, jnp.bfloat16)
           + 2 * _padded_bytes(w2m.shape, jnp.bfloat16)
           + 2 * _padded_bytes(par.shape, jnp.float32)
           + (2 * _padded_bytes(gmask.shape, jnp.float32) if with_groups else 0)
           + _padded_bytes((nb, hp + 2, wp + 2, cmax), jnp.bfloat16))
    vmem_limit = int(min(max(4 * est, 32 * 1024 * 1024), 96 * 1024 * 1024))

    out = pl.pallas_call(
        kernel,
        out_shape=jax.ShapeDtypeStruct((n, cout, p), jnp.float32),
        grid_spec=pltpu.PrefetchScalarGridSpec(
            num_scalar_prefetch=0,
            grid=grid,
            in_specs=in_specs,
            out_specs=pl.BlockSpec((nb, cout, p), lambda i: (i, 0, 0)),
            scratch_shapes=[pltpu.VMEM((nb, hp + 2, wp + 2, cmax), jnp.bfloat16)]),
        compiler_params=pltpu.CompilerParams(
            dimension_semantics=("parallel",),
            vmem_limit_bytes=vmem_limit),
    )(*inputs)

    # (N, Cout, Hp*Wp) -> NCHW: a free reshape, no transpose needed.
    return out.reshape(n, cout, hp, wp)


# ----------------------------------------------------------------------------
# Pure-JAX reference (mirrors the PyTorch forward, eval mode, full f32)
# ----------------------------------------------------------------------------
def down_reference(x, params, *, num_groups=32):
    (w1, b1, g1, be1, w2, b2, g2, be2) = params
    N, C, H, W = x.shape
    xp = x.reshape(N, C, H // 2, 2, W // 2, 2).max(axis=(3, 5))

    def ws_conv(h, w, b):
        ww = standardize_weight(w)
        y = jax.lax.conv_general_dilated(
            h, ww, (1, 1), 'SAME',
            dimension_numbers=('NCHW', 'OIHW', 'NCHW'),
            precision=jax.lax.Precision.HIGHEST)
        return y + b.reshape(1, -1, 1, 1)

    def gn(h, gamma, beta):
        n, c, hh, ww = h.shape
        hg = h.reshape(n, num_groups, c // num_groups, hh, ww)
        mean = hg.mean(axis=(2, 3, 4), keepdims=True)
        var = hg.var(axis=(2, 3, 4), keepdims=True)
        hn = ((hg - mean) / jnp.sqrt(var + 1e-5)).reshape(n, c, hh, ww)
        return hn * gamma.reshape(1, -1, 1, 1) + beta.reshape(1, -1, 1, 1)

    def leaky(h):
        return jnp.where(h > 0, h, 0.2 * h)

    h = leaky(gn(ws_conv(xp, w1, b1), g1, be1))
    h = leaky(gn(ws_conv(h, w2, b2), g2, be2))
    return h


# ----------------------------------------------------------------------------
if __name__ == "__main__":
    N, Cin, H, W = 2, 4, 16, 16
    Cout, num_groups = 32, 32

    key = jax.random.PRNGKey(0)
    ks = jax.random.split(key, 9)
    w1 = 0.1 * jax.random.normal(ks[0], (Cout, Cin, 3, 3), jnp.float32)
    b1 = 0.1 * jax.random.normal(ks[1], (Cout,), jnp.float32)
    g1 = 1.0 + 0.1 * jax.random.normal(ks[2], (Cout,), jnp.float32)
    be1 = 0.1 * jax.random.normal(ks[3], (Cout,), jnp.float32)
    w2 = 0.1 * jax.random.normal(ks[4], (Cout, Cout, 3, 3), jnp.float32)
    b2 = 0.1 * jax.random.normal(ks[5], (Cout,), jnp.float32)
    g2 = 1.0 + 0.1 * jax.random.normal(ks[6], (Cout,), jnp.float32)
    be2 = 0.1 * jax.random.normal(ks[7], (Cout,), jnp.float32)
    params = (w1, b1, g1, be1, w2, b2, g2, be2)

    x = jax.random.normal(ks[8], (N, Cin, H, W), jnp.float32)     # NCHW input

    out = jax.block_until_ready(down_forward(x, params, num_groups=num_groups))
    ref = jax.block_until_ready(down_reference(x, params, num_groups=num_groups))

    assert out.shape == (N, Cout, H // 2, W // 2), out.shape
    err = float(np.max(np.abs(np.asarray(out) - np.asarray(ref))))
    # bf16 MXU operands vs. the f32 reference: ~1e-2-level agreement expected.
    assert np.allclose(np.asarray(out), np.asarray(ref), rtol=2e-2, atol=2e-2), (
        "max abs diff = %g" % err)

    print("KERNEL_OK")
</pallas_src>

<mosaic_0001>
module attributes {stable_mosaic.version = 11 : i64} {
  func.func @kernel(%arg0: i32, %arg1: memref<2x8x8x16xbf16, #tpu.memory_space<vmem>>, %arg2: memref<36x32xbf16, #tpu.memory_space<vmem>>, %arg3: memref<288x32xbf16, #tpu.memory_space<vmem>>, %arg4: memref<4x32xf32, #tpu.memory_space<vmem>>, %arg5: memref<2x32x64xf32, #tpu.memory_space<vmem>>, %arg6: memref<2x10x10x32xbf16, #tpu.memory_space<vmem>>) attributes {dimension_semantics = [#tpu.dimension_semantics<parallel>], iteration_bounds = array<i64: 1>, scalar_prefetch = 0 : i64, scratch_operands = 1 : i64, tpu.core_type = #tpu.core_type<tc>, window_params = [{transform_indices = @transform_0, window_bounds = array<i64: 2, 8, 8, 16>}, {pipeline_mode = #tpu.pipeline_mode<synchronous>, transform_indices = @transform_1, window_bounds = array<i64: 36, 32>}, {pipeline_mode = #tpu.pipeline_mode<synchronous>, transform_indices = @transform_2, window_bounds = array<i64: 288, 32>}, {pipeline_mode = #tpu.pipeline_mode<synchronous>, transform_indices = @transform_3, window_bounds = array<i64: 4, 32>}, {transform_indices = @transform_4, window_bounds = array<i64: 2, 32, 64>}]} {
    %c0 = arith.constant 0 : index
    %c0_0 = arith.constant 0 : index
    %0 = vector.load %arg4[%c0, %c0_0] : memref<4x32xf32, #tpu.memory_space<vmem>>, vector<1x32xf32>
    %c1 = arith.constant 1 : index
    %c0_1 = arith.constant 0 : index
    %1 = vector.load %arg4[%c1, %c0_1] : memref<4x32xf32, #tpu.memory_space<vmem>>, vector<1x32xf32>
    %c2 = arith.constant 2 : index
    %c0_2 = arith.constant 0 : index
    %2 = vector.load %arg4[%c2, %c0_2] : memref<4x32xf32, #tpu.memory_space<vmem>>, vector<1x32xf32>
    %c3 = arith.constant 3 : index
    %c0_3 = arith.constant 0 : index
    %3 = vector.load %arg4[%c3, %c0_3] : memref<4x32xf32, #tpu.memory_space<vmem>>, vector<1x32xf32>
    %cst = arith.constant 0.000000e+00 : bf16
    %4 = vector.broadcast %cst : bf16 to vector<2x1x10x32xbf16>
    %cst_4 = arith.constant 0.000000e+00 : bf16
    %5 = vector.broadcast %cst_4 : bf16 to vector<2x10x1x32xbf16>
    %c0_5 = arith.constant 0 : index
    %c0_6 = arith.constant 0 : index
    %c0_7 = arith.constant 0 : index
    %c0_8 = arith.constant 0 : index
    %6 = vector.load %arg6[%c0_5, %c0_6, %c0_7, %c0_8] : memref<2x10x10x32xbf16, #tpu.memory_space<vmem>>, vector<2x1x10x32xbf16>
    tpu.vector_store %arg6[%c0_5, %c0_6, %c0_7, %c0_8], %4 {strides = array<i32>} : memref<2x10x10x32xbf16, #tpu.memory_space<vmem>>, vector<2x1x10x32xbf16>,
    %c0_9 = arith.constant 0 : index
    %c9 = arith.constant 9 : index
    %c0_10 = arith.constant 0 : index
    %c0_11 = arith.constant 0 : index
    %7 = vector.load %arg6[%c0_9, %c9, %c0_10, %c0_11] : memref<2x10x10x32xbf16, #tpu.memory_space<vmem>>, vector<2x1x10x32xbf16>
    tpu.vector_store %arg6[%c0_9, %c9, %c0_10, %c0_11], %4 {strides = array<i32>} : memref<2x10x10x32xbf16, #tpu.memory_space<vmem>>, vector<2x1x10x32xbf16>,
    %c0_12 = arith.constant 0 : index
    %c0_13 = arith.constant 0 : index
    %c0_14 = arith.constant 0 : index
    %c0_15 = arith.constant 0 : index
    %8 = vector.load %arg6[%c0_12, %c0_13, %c0_14, %c0_15] : memref<2x10x10x32xbf16, #tpu.memory_space<vmem>>, vector<2x10x1x32xbf16>
    tpu.vector_store %arg6[%c0_12, %c0_13, %c0_14, %c0_15], %5 {strides = array<i32>} : memref<2x10x10x32xbf16, #tpu.memory_space<vmem>>, vector<2x10x1x32xbf16>,
    %c0_16 = arith.constant 0 : index
    %c0_17 = arith.constant 0 : index
    %c9_18 = arith.constant 9 : index
    %c0_19 = arith.constant 0 : index
    %9 = vector.load %arg6[%c0_16, %c0_17, %c9_18, %c0_19] : memref<2x10x10x32xbf16, #tpu.memory_space<vmem>>, vector<2x10x1x32xbf16>
    tpu.vector_store %arg6[%c0_16, %c0_17, %c9_18, %c0_19], %5 {strides = array<i32>} : memref<2x10x10x32xbf16, #tpu.memory_space<vmem>>, vector<2x10x1x32xbf16>,
    %c0_20 = arith.constant 0 : index
    %c0_21 = arith.constant 0 : index
    %c0_22 = arith.constant 0 : index
    %c0_23 = arith.constant 0 : index
    %10 = vector.load %arg1[%c0_20, %c0_21, %c0_22, %c0_23] : memref<2x8x8x16xbf16, #tpu.memory_space<vmem>>, vector<2x8x8x16xbf16>
    %11 = vector.extract_strided_slice %10 {offsets = [0, 0, 0, 0], sizes = [2, 8, 8, 4], strides = [1, 1, 1, 1]} : vector<2x8x8x16xbf16> to vector<2x8x8x4xbf16>
    %12 = vector.extract_strided_slice %10 {offsets = [0, 0, 0, 4], sizes = [2, 8, 8, 4], strides = [1, 1, 1, 1]} : vector<2x8x8x16xbf16> to vector<2x8x8x4xbf16>
    %13 = arith.maximumf %11, %12 : vector<2x8x8x4xbf16>
    %14 = vector.extract_strided_slice %10 {offsets = [0, 0, 0, 8], sizes = [2, 8, 8, 4], strides = [1, 1, 1, 1]} : vector<2x8x8x16xbf16> to vector<2x8x8x4xbf16>
    %15 = vector.extract_strided_slice %10 {offsets = [0, 0, 0, 12], sizes = [2, 8, 8, 4], strides = [1, 1, 1, 1]} : vector<2x8x8x16xbf16> to vector<2x8x8x4xbf16>
    %16 = arith.maximumf %14, %15 : vector<2x8x8x4xbf16>
    %17 = arith.maximumf %13, %16 : vector<2x8x8x4xbf16>
    %c0_24 = arith.constant 0 : index
    %c1_25 = arith.constant 1 : index
    %c1_26 = arith.constant 1 : index
    %c0_27 = arith.constant 0 : index
    %18 = vector.load %arg6[%c0_24, %c1_25, %c1_26, %c0_27] : memref<2x10x10x32xbf16, #tpu.memory_space<vmem>>, vector<2x8x8x4xbf16>
    tpu.vector_store %arg6[%c0_24, %c1_25, %c1_26, %c0_27], %17 {strides = array<i32>} : memref<2x10x10x32xbf16, #tpu.memory_space<vmem>>, vector<2x8x8x4xbf16>,
    %c0_28 = arith.constant 0 : index
    %c0_29 = arith.constant 0 : index
    %c0_30 = arith.constant 0 : index
    %c0_31 = arith.constant 0 : index
    %19 = vector.load %arg6[%c0_28, %c0_29, %c0_30, %c0_31] : memref<2x10x10x32xbf16, #tpu.memory_space<vmem>>, vector<2x8x8x4xbf16>
    %c0_32 = arith.constant 0 : index
    %c0_33 = arith.constant 0 : index
    %c1_34 = arith.constant 1 : index
    %c0_35 = arith.constant 0 : index
    %20 = vector.load %arg6[%c0_32, %c0_33, %c1_34, %c0_35] : memref<2x10x10x32xbf16, #tpu.memory_space<vmem>>, vector<2x8x8x4xbf16>
    %c0_36 = arith.constant 0 : index
    %c0_37 = arith.constant 0 : index
    %c2_38 = arith.constant 2 : index
    %c0_39 = arith.constant 0 : index
    %21 = vector.load %arg6[%c0_36, %c0_37, %c2_38, %c0_39] : memref<2x10x10x32xbf16, #tpu.memory_space<vmem>>, vector<2x8x8x4xbf16>
    %c0_40 = arith.constant 0 : index
    %c1_41 = arith.constant 1 : index
    %c0_42 = arith.constant 0 : index
    %c0_43 = arith.constant 0 : index
    %22 = vector.load %arg6[%c0_40, %c1_41, %c0_42, %c0_43] : memref<2x10x10x32xbf16, #tpu.memory_space<vmem>>, vector<2x8x8x4xbf16>
    %c0_44 = arith.constant 0 : index
    %c1_45 = arith.constant 1 : index
    %c1_46 = arith.constant 1 : index
    %c0_47 = arith.constant 0 : index
    %23 = vector.load %arg6[%c0_44, %c1_45, %c1_46, %c0_47] : memref<2x10x10x32xbf16, #tpu.memory_space<vmem>>, vector<2x8x8x4xbf16>
    %c0_48 = arith.constant 0 : index
    %c1_49 = arith.constant 1 : index
    %c2_50 = arith.constant 2 : index
    %c0_51 = arith.constant 0 : index
    %24 = vector.load %arg6[%c0_48, %c1_49, %c2_50, %c0_51] : memref<2x10x10x32xbf16, #tpu.memory_space<vmem>>, vector<2x8x8x4xbf16>
    %c0_52 = arith.constant 0 : index
    %c2_53 = arith.constant 2 : index
    %c0_54 = arith.constant 0 : index
    %c0_55 = arith.constant 0 : index
    %25 = vector.load %arg6[%c0_52, %c2_53, %c0_54, %c0_55] : memref<2x10x10x32xbf16, #tpu.memory_space<vmem>>, vector<2x8x8x4xbf16>
    %c0_56 = arith.constant 0 : index
    %c2_57 = arith.constant 2 : index
    %c1_58 = arith.constant 1 : index
    %c0_59 = arith.constant 0 : index
    %26 = vector.load %arg6[%c0_56, %c2_57, %c1_58, %c0_59] : memref<2x10x10x32xbf16, #tpu.memory_space<vmem>>, vector<2x8x8x4xbf16>
    %c0_60 = arith.constant 0 : index
    %c2_61 = arith.constant 2 : index
    %c2_62 = arith.constant 2 : index
    %c0_63 = arith.constant 0 : index
    %27 = vector.load %arg6[%c0_60, %c2_61, %c2_62, %c0_63] : memref<2x10x10x32xbf16, #tpu.memory_space<vmem>>, vector<2x8x8x4xbf16>
    %28 = tpu.concatenate %19, %20, %21, %22, %23, %24, %25, %26, %27 in 3 : vector<2x8x8x4xbf16>, vector<2x8x8x4xbf16>, vector<2x8x8x4xbf16>, vector<2x8x8x4xbf16>, vector<2x8x8x4xbf16>, vector<2x8x8x4xbf16>, vector<2x8x8x4xbf16>, vector<2x8x8x4xbf16>, vector<2x8x8x4xbf16> -> vector<2x8x8x36xbf16>
    %29 = vector.shape_cast %28 : vector<2x8x8x36xbf16> to vector<128x36xbf16>
    %c0_64 = arith.constant 0 : index
    %c0_65 = arith.constant 0 : index
    %30 = vector.load %arg2[%c0_64, %c0_65] : memref<36x32xbf16, #tpu.memory_space<vmem>>, vector<36x32xbf16>
    %cst_66 = arith.constant dense<0.000000e+00> : vector<128x32xf32>
    %31 = tpu.matmul %29, %30, %cst_66 {dimension_numbers = #tpu.dot_dimension_numbers<[1], [0], [0], [1], [0, 0, 1, 1], [], []>} : vector<128x36xbf16>, vector<36x32xbf16>, vector<128x32xf32> -> vector<128x32xf32>
    %32 = vector.shape_cast %31 : vector<128x32xf32> to vector<2x64x32xf32>
    %cst_67 = arith.constant dense<0.000000e+00> : vector<2x32xf32>
    %33 = vector.multi_reduction <add>, %32, %cst_67 [1] : vector<2x64x32xf32> to vector<2x32xf32>
    %34 = vector.shape_cast %33 : vector<2x32xf32> to vector<2x1x32xf32>
    %cst_68 = arith.constant 1.562500e-02 : f32
    %35 = vector.broadcast %cst_68 : f32 to vector<2x1x32xf32>
    %36 = arith.mulf %34, %35 : vector<2x1x32xf32>
    %37 = vector.broadcast %36 : vector<2x1x32xf32> to vector<2x64x32xf32>
    %38 = arith.subf %32, %37 : vector<2x64x32xf32>
    %39 = arith.mulf %38, %38 : vector<2x64x32xf32>
    %cst_69 = arith.constant dense<0.000000e+00> : vector<2x32xf32>
    %40 = vector.multi_reduction <add>, %39, %cst_69 [1] : vector<2x64x32xf32> to vector<2x32xf32>
    %41 = vector.shape_cast %40 : vector<2x32xf32> to vector<2x1x32xf32>
    %cst_70 = arith.constant 1.562500e-02 : f32
    %42 = vector.broadcast %cst_70 : f32 to vector<2x1x32xf32>
    %43 = arith.mulf %41, %42 : vector<2x1x32xf32>
    %cst_71 = arith.constant 9.99999974E-6 : f32
    %44 = vector.broadcast %cst_71 : f32 to vector<2x1x32xf32>
    %45 = arith.addf %43, %44 : vector<2x1x32xf32>
    %46 = math.rsqrt %45 : vector<2x1x32xf32>
    %47 = vector.shape_cast %0 : vector<1x32xf32> to vector<1x1x32xf32>
    %48 = vector.broadcast %47 : vector<1x1x32xf32> to vector<2x1x32xf32>
    %49 = arith.mulf %46, %48 : vector<2x1x32xf32>
    %50 = vector.broadcast %49 : vector<2x1x32xf32> to vector<2x64x32xf32>
    %51 = arith.mulf %38, %50 : vector<2x64x32xf32>
    %52 = vector.shape_cast %1 : vector<1x32xf32> to vector<1x1x32xf32>
    %53 = vector.broadcast %52 : vector<1x1x32xf32> to vector<2x64x32xf32>
    %54 = arith.addf %51, %53 : vector<2x64x32xf32>
    %cst_72 = arith.constant 0.000000e+00 : f32
    %55 = vector.broadcast %cst_72 : f32 to vector<2x64x32xf32>
    %56 = arith.cmpf ogt, %54, %55 : vector<2x64x32xf32>
    %cst_73 = arith.constant 2.000000e-01 : f32
    %57 = vector.broadcast %cst_73 : f32 to vector<2x64x32xf32>
    %58 = arith.mulf %57, %54 : vector<2x64x32xf32>
    %59 = arith.select %56, %54, %58 : vector<2x64x32xi1>, vector<2x64x32xf32>
    %60 = vector.shape_cast %59 : vector<2x64x32xf32> to vector<2x8x8x32xf32>
    %61 = arith.truncf %60 : vector<2x8x8x32xf32> to vector<2x8x8x32xbf16>
    %c0_74 = arith.constant 0 : index
    %c1_75 = arith.constant 1 : index
    %c1_76 = arith.constant 1 : index
    %c0_77 = arith.constant 0 : index
    %62 = vector.load %arg6[%c0_74, %c1_75, %c1_76, %c0_77] : memref<2x10x10x32xbf16, #tpu.memory_space<vmem>>, vector<2x8x8x32xbf16>
    tpu.vector_store %arg6[%c0_74, %c1_75, %c1_76, %c0_77], %61 {strides = array<i32>} : memref<2x10x10x32xbf16, #tpu.memory_space<vmem>>, vector<2x8x8x32xbf16>,
    %c0_78 = arith.constant 0 : index
    %c0_79 = arith.constant 0 : index
    %c0_80 = arith.constant 0 : index
    %c0_81 = arith.constant 0 : index
    %63 = vector.load %arg6[%c0_78, %c0_79, %c0_80, %c0_81] : memref<2x10x10x32xbf16, #tpu.memory_space<vmem>>, vector<2x8x8x32xbf16>
    %c0_82 = arith.constant 0 : index
    %c0_83 = arith.constant 0 : index
    %c1_84 = arith.constant 1 : index
    %c0_85 = arith.constant 0 : index
    %64 = vector.load %arg6[%c0_82, %c0_83, %c1_84, %c0_85] : memref<2x10x10x32xbf16, #tpu.memory_space<vmem>>, vector<2x8x8x32xbf16>
    %c0_86 = arith.constant 0 : index
    %c0_87 = arith.constant 0 : index
    %c2_88 = arith.constant 2 : index
    %c0_89 = arith.constant 0 : index
    %65 = vector.load %arg6[%c0_86, %c0_87, %c2_88, %c0_89] : memref<2x10x10x32xbf16, #tpu.memory_space<vmem>>, vector<2x8x8x32xbf16>
    %c0_90 = arith.constant 0 : index
    %c1_91 = arith.constant 1 : index
    %c0_92 = arith.constant 0 : index
    %c0_93 = arith.constant 0 : index
    %66 = vector.load %arg6[%c0_90, %c1_91, %c0_92, %c0_93] : memref<2x10x10x32xbf16, #tpu.memory_space<vmem>>, vector<2x8x8x32xbf16>
    %c0_94 = arith.constant 0 : index
    %c1_95 = arith.constant 1 : index
    %c1_96 = arith.constant 1 : index
    %c0_97 = arith.constant 0 : index
    %67 = vector.load %arg6[%c0_94, %c1_95, %c1_96, %c0_97] : memref<2x10x10x32xbf16, #tpu.memory_space<vmem>>, vector<2x8x8x32xbf16>
    %c0_98 = arith.constant 0 : index
    %c1_99 = arith.constant 1 : index
    %c2_100 = arith.constant 2 : index
    %c0_101 = arith.constant 0 : index
    %68 = vector.load %arg6[%c0_98, %c1_99, %c2_100, %c0_101] : memref<2x10x10x32xbf16, #tpu.memory_space<vmem>>, vector<2x8x8x32xbf16>
    %c0_102 = arith.constant 0 : index
    %c2_103 = arith.constant 2 : index
    %c0_104 = arith.constant 0 : index
    %c0_105 = arith.constant 0 : index
    %69 = vector.load %arg6[%c0_102, %c2_103, %c0_104, %c0_105] : memref<2x10x10x32xbf16, #tpu.memory_space<vmem>>, vector<2x8x8x32xbf16>
    %c0_106 = arith.constant 0 : index
    %c2_107 = arith.constant 2 : index
    %c1_108 = arith.constant 1 : index
    %c0_109 = arith.constant 0 : index
    %70 = vector.load %arg6[%c0_106, %c2_107, %c1_108, %c0_109] : memref<2x10x10x32xbf16, #tpu.memory_space<vmem>>, vector<2x8x8x32xbf16>
    %c0_110 = arith.constant 0 : index
    %c2_111 = arith.constant 2 : index
    %c2_112 = arith.constant 2 : index
    %c0_113 = arith.constant 0 : index
    %71 = vector.load %arg6[%c0_110, %c2_111, %c2_112, %c0_113] : memref<2x10x10x32xbf16, #tpu.memory_space<vmem>>, vector<2x8x8x32xbf16>
    %72 = tpu.concatenate %63, %64, %65, %66, %67, %68, %69, %70, %71 in 3 : vector<2x8x8x32xbf16>, vector<2x8x8x32xbf16>, vector<2x8x8x32xbf16>, vector<2x8x8x32xbf16>, vector<2x8x8x32xbf16>, vector<2x8x8x32xbf16>, vector<2x8x8x32xbf16>, vector<2x8x8x32xbf16>, vector<2x8x8x32xbf16> -> vector<2x8x8x288xbf16>
    %73 = vector.shape_cast %72 : vector<2x8x8x288xbf16> to vector<128x288xbf16>
    %c0_114 = arith.constant 0 : index
    %c0_115 = arith.constant 0 : index
    %74 = vector.load %arg3[%c0_114, %c0_115] : memref<288x32xbf16, #tpu.memory_space<vmem>>, vector<288x32xbf16>
    %cst_116 = arith.constant dense<0.000000e+00> : vector<128x32xf32>
    %75 = tpu.matmul %73, %74, %cst_116 {dimension_numbers = #tpu.dot_dimension_numbers<[1], [0], [0], [1], [0, 0, 1, 1], [], []>} : vector<128x288xbf16>, vector<288x32xbf16>, vector<128x32xf32> -> vector<128x32xf32>
    %76 = vector.shape_cast %75 : vector<128x32xf32> to vector<2x64x32xf32>
    %cst_117 = arith.constant dense<0.000000e+00> : vector<2x32xf32>
    %77 = vector.multi_reduction <add>, %76, %cst_117 [1] : vector<2x64x32xf32> to vector<2x32xf32>
    %78 = vector.shape_cast %77 : vector<2x32xf32> to vector<2x1x32xf32>
    %cst_118 = arith.constant 1.562500e-02 : f32
    %79 = vector.broadcast %cst_118 : f32 to vector<2x1x32xf32>
    %80 = arith.mulf %78, %79 : vector<2x1x32xf32>
    %81 = vector.broadcast %80 : vector<2x1x32xf32> to vector<2x64x32xf32>
    %82 = arith.subf %76, %81 : vector<2x64x32xf32>
    %83 = arith.mulf %82, %82 : vector<2x64x32xf32>
    %cst_119 = arith.constant dense<0.000000e+00> : vector<2x32xf32>
    %84 = vector.multi_reduction <add>, %83, %cst_119 [1] : vector<2x64x32xf32> to vector<2x32xf32>
    %85 = vector.shape_cast %84 : vector<2x32xf32> to vector<2x1x32xf32>
    %cst_120 = arith.constant 1.562500e-02 : f32
    %86 = vector.broadcast %cst_120 : f32 to vector<2x1x32xf32>
    %87 = arith.mulf %85, %86 : vector<2x1x32xf32>
    %cst_121 = arith.constant 9.99999974E-6 : f32
    %88 = vector.broadcast %cst_121 : f32 to vector<2x1x32xf32>
    %89 = arith.addf %87, %88 : vector<2x1x32xf32>
    %90 = math.rsqrt %89 : vector<2x1x32xf32>
    %91 = vector.shape_cast %2 : vector<1x32xf32> to vector<1x1x32xf32>
    %92 = vector.broadcast %91 : vector<1x1x32xf32> to vector<2x1x32xf32>
    %93 = arith.mulf %90, %92 : vector<2x1x32xf32>
    %94 = vector.broadcast %93 : vector<2x1x32xf32> to vector<2x64x32xf32>
    %95 = arith.mulf %82, %94 : vector<2x64x32xf32>
    %96 = vector.shape_cast %3 : vector<1x32xf32> to vector<1x1x32xf32>
    %97 = vector.broadcast %96 : vector<1x1x32xf32> to vector<2x64x32xf32>
    %98 = arith.addf %95, %97 : vector<2x64x32xf32>
    %cst_122 = arith.constant 0.000000e+00 : f32
    %99 = vector.broadcast %cst_122 : f32 to vector<2x64x32xf32>
    %100 = arith.cmpf ogt, %98, %99 : vector<2x64x32xf32>
    %cst_123 = arith.constant 2.000000e-01 : f32
    %101 = vector.broadcast %cst_123 : f32 to vector<2x64x32xf32>
    %102 = arith.mulf %101, %98 : vector<2x64x32xf32>
    %103 = arith.select %100, %98, %102 : vector<2x64x32xi1>, vector<2x64x32xf32>
    %104 = vector.extract_strided_slice %103 {offsets = [0, 0, 0], sizes = [1, 64, 32], strides = [1, 1, 1]} : vector<2x64x32xf32> to vector<1x64x32xf32>
    %105 = vector.shape_cast %104 : vector<1x64x32xf32> to vector<64x32xf32>
    %106 = tpu.transpose %105, [1, 0] : vector<64x32xf32> -> vector<32x64xf32>
    %c0_124 = arith.constant 0 : index
    %c0_125 = arith.constant 0 : index
    %c0_126 = arith.constant 0 : index
    %107 = vector.load %arg5[%c0_124, %c0_125, %c0_126] : memref<2x32x64xf32, #tpu.memory_space<vmem>>, vector<1x32x64xf32>
    %108 = vector.shape_cast %107 : vector<1x32x64xf32> to vector<32x64xf32>
    %109 = vector.shape_cast %106 : vector<32x64xf32> to vector<1x32x64xf32>
    tpu.vector_store %arg5[%c0_124, %c0_125, %c0_126], %109 {strides = array<i32>} : memref<2x32x64xf32, #tpu.memory_space<vmem>>, vector<1x32x64xf32>,
    %110 = vector.extract_strided_slice %103 {offsets = [1, 0, 0], sizes = [1, 64, 32], strides = [1, 1, 1]} : vector<2x64x32xf32> to vector<1x64x32xf32>
    %111 = vector.shape_cast %110 : vector<1x64x32xf32> to vector<64x32xf32>
    %112 = tpu.transpose %111, [1, 0] : vector<64x32xf32> -> vector<32x64xf32>
    %c1_127 = arith.constant 1 : index
    %c0_128 = arith.constant 0 : index
    %c0_129 = arith.constant 0 : index
    %113 = vector.load %arg5[%c1_127, %c0_128, %c0_129] : memref<2x32x64xf32, #tpu.memory_space<vmem>>, vector<1x32x64xf32>
    %114 = vector.shape_cast %113 : vector<1x32x64xf32> to vector<32x64xf32>
    %115 = vector.shape_cast %112 : vector<32x64xf32> to vector<1x32x64xf32>
    tpu.vector_store %arg5[%c1_127, %c0_128, %c0_129], %115 {strides = array<i32>} : memref<2x32x64xf32, #tpu.memory_space<vmem>>, vector<1x32x64xf32>,
    return
  }
  func.func @transform_0(%arg0: i32) -> (i32, i32, i32, i32) {
    %c0_i32 = arith.constant 0 : i32
    %c0_i32_0 = arith.constant 0 : i32
    %c0_i32_1 = arith.constant 0 : i32
    %c0_i32_2 = arith.constant 0 : i32
    return %arg0, %c0_i32, %c0_i32_0, %c0_i32_1 : i32, i32, i32, i32
  }
  func.func @transform_1(%arg0: i32) -> (i32, i32) {
    %c0_i32 = arith.constant 0 : i32
    %c0_i32_0 = arith.constant 0 : i32
    %c0_i32_1 = arith.constant 0 : i32
    return %c0_i32, %c0_i32_0 : i32, i32
  }
  func.func @transform_2(%arg0: i32) -> (i32, i32) {
    %c0_i32 = arith.constant 0 : i32
    %c0_i32_0 = arith.constant 0 : i32
    %c0_i32_1 = arith.constant 0 : i32
    return %c0_i32, %c0_i32_0 : i32, i32
  }
  func.func @transform_3(%arg0: i32) -> (i32, i32) {
    %c0_i32 = arith.constant 0 : i32
    %c0_i32_0 = arith.constant 0 : i32
    %c0_i32_1 = arith.constant 0 : i32
    return %c0_i32, %c0_i32_0 : i32, i32
  }
  func.func @transform_4(%arg0: i32) -> (i32, i32, i32) {
    %c0_i32 = arith.constant 0 : i32
    %c0_i32_0 = arith.constant 0 : i32
    %c0_i32_1 = arith.constant 0 : i32
    return %arg0, %c0_i32, %c0_i32_0 : i32, i32, i32
  }
}

</mosaic_0001>

<llo_original>
// kernel: tpu_custom_call.1
$region0: #{tpu_custom_call.1}
  #allocation0 [shape = 'u32[]', space=smem, size = 0x4, offset = 0x4, fixed_abs, tag = 'smem constant byte address 0x4 - core index']
  #allocation1 [shape = 'u32[144,128]{1,0:T(1,128)}', space=vmem, size = 0x12000, scoped, tag = 'internal scratch']
  #allocation2 [shape = 'bf16[2,10,10,32]{3,2,1,0:T(8,128)(2,1)}', space=vmem, size = 0x14000, scoped, tag = 'scratch operand']
  %s0 = inlined_call_operand.vmem [shape: bf16[2,8,8,16], index: 0, kind: input, shape index: {}]
  %s1 = inlined_call_operand.vmem [shape: bf16[36,32], index: 1, kind: input, shape index: {}]
  %s2 = inlined_call_operand.vmem [shape: bf16[288,32], index: 2, kind: input, shape index: {}]
  %s3 = inlined_call_operand.vmem [shape: f32[4,32], index: 3, kind: input, shape index: {}]
  %s4 = inlined_call_operand.hbm [shape: f32[2,32,64], index: 4, kind: output, shape index: {}]
  %s5 = sld [smem:[#allocation0]]
  $region26: #{tpu_custom_call.1} parent=0
    _
  %s7 = ssub.s32 1, %s5
  %s8 = scalar_select 0, %s7, %s5
  $region1: #{tpu_custom_call.1} parent=0
    #allocation3 [shape = 'u8[32768]{0}', space=vmem, size = 0x8000, scoped, tag = 'output window, operand 0, single buffered']
    #allocation4 [shape = 's32[1]{0}', space=sflag, size = 0x4, scoped, tag = 'scoped memory for tpu_custom_call.1']
    %9 = vsyncpa [#allocation4], 0
    // Predicated region
    $region2: #{tpu_custom_call.1} parent=1 // pred_check
      _
    $region3: #{tpu_custom_call.1} parent=1 // pred_check_branch
      %11 = sbr.rel (0) target = $region5
    $region4: #{tpu_custom_call.1} parent=1 // pred_region
      _
    $region5: #{tpu_custom_call.1} parent=1 // pred_fallthru
      _
    // Predicated region
    $region6: #{tpu_custom_call.1} parent=1 // pred_check
      _
    $region7: #{tpu_custom_call.1} parent=1 // pred_check_branch
      %13 = sbr.rel (0) target = $region9
    $region8: #{tpu_custom_call.1} parent=1 // pred_region
      _
    $region9: #{tpu_custom_call.1} parent=1 // pred_fallthru
      _
    // Predicated region
    $region10: #{tpu_custom_call.1} parent=1 // pred_check
      _
    $region11: #{tpu_custom_call.1} parent=1 // pred_check_branch
      %15 = sbr.rel (0) target = $region13
    $region12: #{tpu_custom_call.1} parent=1 // pred_region
      _
    $region13: #{tpu_custom_call.1} parent=1 // pred_fallthru
      _
    // Predicated region
    $region14: #{tpu_custom_call.1} parent=1 // pred_check
      _
    $region15: #{tpu_custom_call.1} parent=1 // pred_check_branch
      %17 = sbr.rel (0) target = $region17
    $region16: #{tpu_custom_call.1} parent=1 // pred_region
      _
    $region17: #{tpu_custom_call.1} parent=1 // pred_fallthru
      _
    %v19 = vld [vmem:[%s3] sm:$0x1]
    %v20 = vld [vmem:[%s3 + $0x1] sm:$0x1]
    %v21 = vld [vmem:[%s3 + $0x2] sm:$0x1]
    %v22 = vld [vmem:[%s3 + $0x3] sm:$0x1]
    %vm23 = vcmask 257024
    %24 = vst.msk [vmem:[#allocation2] sm:$0xf] %vm23, 0
    %vm25 = vcmask 253952
    %26 = vst.msk [vmem:[#allocation2 + $0x4] sm:$0x1] %vm25, 0
    %27 = vst.msk [vmem:[#allocation2 + $0x50] sm:$0xf] %vm23, 0
    %28 = vst.msk [vmem:[#allocation2 + $0x54] sm:$0x1] %vm25, 0
    %s29 = scalar_lea.vmem [#allocation2], 72
    %30 = vst.msk [vmem:[%s29] sm:$0xf] %vm23, 0
    %31 = vst.msk [vmem:[%s29 + $0x4] sm:$0x1] %vm25, 0
    %32 = vst.msk [vmem:[%s29 + $0x50] sm:$0xf] %vm23, 0
    %33 = vst.msk [vmem:[%s29 + $0x54] sm:$0x1] %vm25, 0
    %vm34 = vcmask 253952
    %vm35 = vsmask.f32 256
    %vm36 = vmand %vm34, %vm35
    %v37 = vld [vmem:[#allocation2] sm:$0x1]
    %v38 = vsel %vm36, 0, %v37
    %39 = vst [vmem:[#allocation2] sm:$0x1] %v38
    %v40 = vld [vmem:[#allocation2 + $0x8] sm:$0x1]
    %v41 = vsel %vm36, 0, %v40
    %42 = vst [vmem:[#allocation2 + $0x8] sm:$0x1] %v41
    %v43 = vld [vmem:[#allocation2 + $0x10] sm:$0x1]
    %v44 = vsel %vm36, 0, %v43
    %45 = vst [vmem:[#allocation2 + $0x10] sm:$0x1] %v44
    %v46 = vld [vmem:[#allocation2 + $0x18] sm:$0x1]
    %v47 = vsel %vm36, 0, %v46
    %48 = vst [vmem:[#allocation2 + $0x18] sm:$0x1] %v47
    %v49 = vld [vmem:[#allocation2 + $0x20] sm:$0x1]
    %v50 = vsel %vm36, 0, %v49
    %51 = vst [vmem:[#allocation2 + $0x20] sm:$0x1] %v50
    %v52 = vld [vmem:[#allocation2 + $0x28] sm:$0x1]
    %v53 = vsel %vm36, 0, %v52
    %54 = vst [vmem:[#allocation2 + $0x28] sm:$0x1] %v53
    %v55 = vld [vmem:[#allocation2 + $0x30] sm:$0x1]
    %v56 = vsel %vm36, 0, %v55
    %57 = vst [vmem:[#allocation2 + $0x30] sm:$0x1] %v56
    %v58 = vld [vmem:[#allocation2 + $0x38] sm:$0x1]
    %v59 = vsel %vm36, 0, %v58
    %60 = vst [vmem:[#allocation2 + $0x38] sm:$0x1] %v59
    %v61 = vld [vmem:[#allocation2 + $0x40] sm:$0x1]
    %v62 = vsel %vm36, 0, %v61
    %63 = vst [vmem:[#allocation2 + $0x40] sm:$0x1] %v62
    %v64 = vld [vmem:[#allocation2 + $0x48] sm:$0x1]
    %v65 = vsel %vm36, 0, %v64
    %66 = vst [vmem:[#allocation2 + $0x48] sm:$0x1] %v65
    %v67 = vld [vmem:[#allocation2 + $0x50] sm:$0x1]
    %v68 = vsel %vm36, 0, %v67
    %69 = vst [vmem:[#allocation2 + $0x50] sm:$0x1] %v68
    %v70 = vld [vmem:[#allocation2 + $0x58] sm:$0x1]
    %v71 = vsel %vm36, 0, %v70
    %72 = vst [vmem:[#allocation2 + $0x58] sm:$0x1] %v71
    %v73 = vld [vmem:[#allocation2 + $0x60] sm:$0x1]
    %v74 = vsel %vm36, 0, %v73
    %75 = vst [vmem:[#allocation2 + $0x60] sm:$0x1] %v74
    %v76 = vld [vmem:[#allocation2 + $0x68] sm:$0x1]
    %v77 = vsel %vm36, 0, %v76
    %78 = vst [vmem:[#allocation2 + $0x68] sm:$0x1] %v77
    %v79 = vld [vmem:[#allocation2 + $0x70] sm:$0x1]
    %v80 = vsel %vm36, 0, %v79
    %81 = vst [vmem:[#allocation2 + $0x70] sm:$0x1] %v80
    %v82 = vld [vmem:[#allocation2 + $0x78] sm:$0x1]
    %v83 = vsel %vm36, 0, %v82
    %84 = vst [vmem:[#allocation2 + $0x78] sm:$0x1] %v83
    %v85 = vld [vmem:[#allocation2 + $0x80] sm:$0x1]
    %v86 = vsel %vm36, 0, %v85
    %87 = vst [vmem:[#allocation2 + $0x80] sm:$0x1] %v86
    %v88 = vld [vmem:[#allocation2 + $0x88] sm:$0x1]
    %v89 = vsel %vm36, 0, %v88
    %90 = vst [vmem:[#allocation2 + $0x88] sm:$0x1] %v89
    %v91 = vld [vmem:[#allocation2 + $0x90] sm:$0x1]
    %v92 = vsel %vm36, 0, %v91
    %93 = vst [vmem:[#allocation2 + $0x90] sm:$0x1] %v92
    %v94 = vld [vmem:[#allocation2 + $0x98] sm:$0x1]
    %v95 = vsel %vm36, 0, %v94
    %96 = vst [vmem:[#allocation2 + $0x98] sm:$0x1] %v95
    %vm97 = vsmask.f32 7938
    %vm98 = vmand %vm34, %vm97
    %v99 = vld [vmem:[#allocation2 + $0x4] sm:$0x1]
    %v100 = vsel %vm98, 0, %v99
    %101 = vst [vmem:[#allocation2 + $0x4] sm:$0x1] %v100
    %v102 = vld [vmem:[#allocation2 + $0xc] sm:$0x1]
    %v103 = vsel %vm98, 0, %v102
    %104 = vst [vmem:[#allocation2 + $0xc] sm:$0x1] %v103
    %v105 = vld [vmem:[#allocation2 + $0x14] sm:$0x1]
    %v106 = vsel %vm98, 0, %v105
    %107 = vst [vmem:[#allocation2 + $0x14] sm:$0x1] %v106
    %v108 = vld [vmem:[#allocation2 + $0x1c] sm:$0x1]
    %v109 = vsel %vm98, 0, %v108
    %110 = vst [vmem:[#allocation2 + $0x1c] sm:$0x1] %v109
    %v111 = vld [vmem:[#allocation2 + $0x24] sm:$0x1]
    %v112 = vsel %vm98, 0, %v111
    %113 = vst [vmem:[#allocation2 + $0x24] sm:$0x1] %v112
    %v114 = vld [vmem:[#allocation2 + $0x2c] sm:$0x1]
    %v115 = vsel %vm98, 0, %v114
    %116 = vst [vmem:[#allocation2 + $0x2c] sm:$0x1] %v115
    %v117 = vld [vmem:[#allocation2 + $0x34] sm:$0x1]
    %v118 = vsel %vm98, 0, %v117
    %119 = vst [vmem:[#allocation2 + $0x34] sm:$0x1] %v118
    %v120 = vld [vmem:[#allocation2 + $0x3c] sm:$0x1]
    %v121 = vsel %vm98, 0, %v120
    %122 = vst [vmem:[#allocation2 + $0x3c] sm:$0x1] %v121
    %v123 = vld [vmem:[#allocation2 + $0x44] sm:$0x1]
    %v124 = vsel %vm98, 0, %v123
    %125 = vst [vmem:[#allocation2 + $0x44] sm:$0x1] %v124
    %v126 = vld [vmem:[#allocation2 + $0x4c] sm:$0x1]
    %v127 = vsel %vm98, 0, %v126
    %128 = vst [vmem:[#allocation2 + $0x4c] sm:$0x1] %v127
    %v129 = vld [vmem:[#allocation2 + $0x54] sm:$0x1]
    %v130 = vsel %vm98, 0, %v129
    %131 = vst [vmem:[#allocation2 + $0x54] sm:$0x1] %v130
    %v132 = vld [vmem:[#allocation2 + $0x5c] sm:$0x1]
    %v133 = vsel %vm98, 0, %v132
    %134 = vst [vmem:[#allocation2 + $0x5c] sm:$0x1] %v133
    %v135 = vld [vmem:[#allocation2 + $0x64] sm:$0x1]
    %v136 = vsel %vm98, 0, %v135
    %137 = vst [vmem:[#allocation2 + $0x64] sm:$0x1] %v136
    %v138 = vld [vmem:[#allocation2 + $0x6c] sm:$0x1]
    %v139 = vsel %vm98, 0, %v138
    %140 = vst [vmem:[#allocation2 + $0x6c] sm:$0x1] %v139
    %v141 = vld [vmem:[#allocation2 + $0x74] sm:$0x1]
    %v142 = vsel %vm98, 0, %v141
    %143 = vst [vmem:[#allocation2 + $0x74] sm:$0x1] %v142
    %v144 = vld [vmem:[#allocation2 + $0x7c] sm:$0x1]
    %v145 = vsel %vm98, 0, %v144
    %146 = vst [vmem:[#allocation2 + $0x7c] sm:$0x1] %v145
    %v147 = vld [vmem:[#allocation2 + $0x84] sm:$0x1]
    %v148 = vsel %vm98, 0, %v147
    %149 = vst [vmem:[#allocation2 + $0x84] sm:$0x1] %v148
    %v150 = vld [vmem:[#allocation2 + $0x8c] sm:$0x1]
    %v151 = vsel %vm98, 0, %v150
    %152 = vst [vmem:[#allocation2 + $0x8c] sm:$0x1] %v151
    %v153 = vld [vmem:[#allocation2 + $0x94] sm:$0x1]
    %v154 = vsel %vm98, 0, %v153
    %155 = vst [vmem:[#allocation2 + $0x94] sm:$0x1] %v154
    %v156 = vld [vmem:[#allocation2 + $0x9c] sm:$0x1]
    %v157 = vsel %vm98, 0, %v156
    %158 = vst [vmem:[#allocation2 + $0x9c] sm:$0x1] %v157
    %v159 = vld [vmem:[%s0] sm:$0xf]
    %v160 = vld [vmem:[%s0 + $0x4] sm:$0xf]
    %v161 = vld [vmem:[%s0 + $0x8] sm:$0xf]
    %v162 = vld [vmem:[%s0 + $0xc] sm:$0xf]
    %v163 = vld [vmem:[%s0 + $0x10] sm:$0xf]
    %v164 = vld [vmem:[%s0 + $0x14] sm:$0xf]
    %v165 = vld [vmem:[%s0 + $0x18] sm:$0xf]
    %v166 = vld [vmem:[%s0 + $0x1c] sm:$0xf]
    %v167 = vld [vmem:[%s0 + $0x20] sm:$0xf]
    %v168 = vld [vmem:[%s0 + $0x24] sm:$0xf]
    %v169 = vld [vmem:[%s0 + $0x28] sm:$0xf]
    %v170 = vld [vmem:[%s0 + $0x2c] sm:$0xf]
    %v171 = vld [vmem:[%s0 + $0x30] sm:$0xf]
    %v172 = vld [vmem:[%s0 + $0x34] sm:$0xf]
    %v173 = vld [vmem:[%s0 + $0x38] sm:$0xf]
    %v174 = vld [vmem:[%s0 + $0x3c] sm:$0xf]
    %191 = vrot.lane.b32.xlu0 %v159, 124
    %v192 = vpop.permute.xlu0 %191
    %193 = vrot.lane.b32.xlu0 %v160, 124
    %v194 = vpop.permute.xlu0 %193
    %195 = vrot.lane.b32.xlu0 %v161, 124
    %v196 = vpop.permute.xlu0 %195
    %197 = vrot.lane.b32.xlu0 %v162, 124
    %v198 = vpop.permute.xlu0 %197
    %199 = vrot.lane.b32.xlu0 %v163, 124
    %v200 = vpop.permute.xlu0 %199
    %201 = vrot.lane.b32.xlu0 %v164, 124
    %v202 = vpop.permute.xlu0 %201
    %203 = vrot.lane.b32.xlu0 %v165, 124
    %v204 = vpop.permute.xlu0 %203
    %205 = vrot.lane.b32.xlu0 %v166, 124
    %v206 = vpop.permute.xlu0 %205
    %207 = vrot.lane.b32.xlu0 %v167, 124
    %v208 = vpop.permute.xlu0 %207
    %209 = vrot.lane.b32.xlu0 %v168, 124
    %v210 = vpop.permute.xlu0 %209
    %211 = vrot.lane.b32.xlu0 %v169, 124
    %v212 = vpop.permute.xlu0 %211
    %213 = vrot.lane.b32.xlu0 %v170, 124
    %v214 = vpop.permute.xlu0 %213
    %215 = vrot.lane.b32.xlu0 %v171, 124
    %v216 = vpop.permute.xlu0 %215
    %217 = vrot.lane.b32.xlu0 %v172, 124
    %v218 = vpop.permute.xlu0 %217
    %219 = vrot.lane.b32.xlu0 %v173, 124
    %v220 = vpop.permute.xlu0 %219
    %221 = vrot.lane.b32.xlu0 %v174, 124
    %v222 = vpop.permute.xlu0 %221
    %v239 = vmax.bf16 %v159, %v192
    %v240 = vmax.bf16 %v160, %v194
    %v241 = vmax.bf16 %v161, %v196
    %v242 = vmax.bf16 %v162, %v198
    %v243 = vmax.bf16 %v163, %v200
    %v244 = vmax.bf16 %v164, %v202
    %v245 = vmax.bf16 %v165, %v204
    %v246 = vmax.bf16 %v166, %v206
    %v247 = vmax.bf16 %v167, %v208
    %v248 = vmax.bf16 %v168, %v210
    %v249 = vmax.bf16 %v169, %v212
    %v250 = vmax.bf16 %v170, %v214
    %v251 = vmax.bf16 %v171, %v216
    %v252 = vmax.bf16 %v172, %v218
    %v253 = vmax.bf16 %v173, %v220
    %v254 = vmax.bf16 %v174, %v222
    %271 = vrot.lane.b32.xlu0 %v239, 120
    %v272 = vpop.permute.xlu0 %271
    %273 = vrot.lane.b32.xlu0 %v240, 120
    %v274 = vpop.permute.xlu0 %273
    %275 = vrot.lane.b32.xlu0 %v241, 120
    %v276 = vpop.permute.xlu0 %275
    %277 = vrot.lane.b32.xlu0 %v242, 120
    %v278 = vpop.permute.xlu0 %277
    %279 = vrot.lane.b32.xlu0 %v243, 120
    %v280 = vpop.permute.xlu0 %279
    %281 = vrot.lane.b32.xlu0 %v244, 120
    %v282 = vpop.permute.xlu0 %281
    %283 = vrot.lane.b32.xlu0 %v245, 120
    %v284 = vpop.permute.xlu0 %283
    %285 = vrot.lane.b32.xlu0 %v246, 120
    %v286 = vpop.permute.xlu0 %285
    %287 = vrot.lane.b32.xlu0 %v247, 120
    %v288 = vpop.permute.xlu0 %287
    %289 = vrot.lane.b32.xlu0 %v248, 120
    %v290 = vpop.permute.xlu0 %289
    %291 = vrot.lane.b32.xlu0 %v249, 120
    %v292 = vpop.permute.xlu0 %291
    %293 = vrot.lane.b32.xlu0 %v250, 120
    %v294 = vpop.permute.xlu0 %293
    %295 = vrot.lane.b32.xlu0 %v251, 120
    %v296 = vpop.permute.xlu0 %295
    %297 = vrot.lane.b32.xlu0 %v252, 120
    %v298 = vpop.permute.xlu0 %297
    %299 = vrot.lane.b32.xlu0 %v253, 120
    %v300 = vpop.permute.xlu0 %299
    %301 = vrot.lane.b32.xlu0 %v254, 120
    %v302 = vpop.permute.xlu0 %301
    %v319 = vmax.bf16 %v239, %v272
    %v320 = vmax.bf16 %v240, %v274
    %v321 = vmax.bf16 %v241, %v276
    %v322 = vmax.bf16 %v242, %v278
    %v323 = vmax.bf16 %v243, %v280
    %v324 = vmax.bf16 %v244, %v282
    %v325 = vmax.bf16 %v245, %v284
    %v326 = vmax.bf16 %v246, %v286
    %v327 = vmax.bf16 %v247, %v288
    %v328 = vmax.bf16 %v248, %v290
    %v329 = vmax.bf16 %v249, %v292
    %v330 = vmax.bf16 %v250, %v294
    %v331 = vmax.bf16 %v251, %v296
    %v332 = vmax.bf16 %v252, %v298
    %v333 = vmax.bf16 %v253, %v300
    %v334 = vmax.bf16 %v254, %v302
    %v336 = vshrl.u32 %v319, 16
    %v338 = vrot.slane %v336, 7
    %v339 = vshll.u32 %v319, 16
    %v341 = vor.u32 %v338, %v339
    %v342 = vrot.slane %v338, 4
    %v344 = vshrl.u32 %v320, 16
    %v346 = vrot.slane %v344, 7
    %v347 = vshll.u32 %v320, 16
    %v349 = vor.u32 %v346, %v347
    %v350 = vrot.slane %v346, 4
    %v352 = vshrl.u32 %v321, 16
    %v354 = vrot.slane %v352, 7
    %v355 = vshll.u32 %v321, 16
    %v357 = vor.u32 %v354, %v355
    %v358 = vrot.slane %v354, 4
    %v360 = vshrl.u32 %v322, 16
    %v362 = vrot.slane %v360, 7
    %v363 = vshll.u32 %v322, 16
    %v365 = vor.u32 %v362, %v363
    %v366 = vrot.slane %v362, 4
    %v368 = vshrl.u32 %v323, 16
    %v370 = vrot.slane %v368, 7
    %v371 = vshll.u32 %v323, 16
    %v373 = vor.u32 %v370, %v371
    %v374 = vrot.slane %v370, 4
    %v376 = vshrl.u32 %v324, 16
    %v378 = vrot.slane %v376, 7
    %v379 = vshll.u32 %v324, 16
    %v381 = vor.u32 %v378, %v379
    %v382 = vrot.slane %v378, 4
    %v384 = vshrl.u32 %v325, 16
    %v386 = vrot.slane %v384, 7
    %v387 = vshll.u32 %v325, 16
    %v389 = vor.u32 %v386, %v387
    %v390 = vrot.slane %v386, 4
    %v392 = vshrl.u32 %v326, 16
    %v394 = vrot.slane %v392, 7
    %v395 = vshll.u32 %v326, 16
    %v397 = vor.u32 %v394, %v395
    %v398 = vrot.slane %v394, 4
    %v400 = vshrl.u32 %v327, 16
    %v402 = vrot.slane %v400, 7
    %v403 = vshll.u32 %v327, 16
    %v405 = vor.u32 %v402, %v403
    %v406 = vrot.slane %v402, 4
    %v408 = vshrl.u32 %v328, 16
    %v410 = vrot.slane %v408, 7
    %v411 = vshll.u32 %v328, 16
    %v413 = vor.u32 %v410, %v411
    %v414 = vrot.slane %v410, 4
    %v416 = vshrl.u32 %v329, 16
    %v418 = vrot.slane %v416, 7
    %v419 = vshll.u32 %v329, 16
    %v421 = vor.u32 %v418, %v419
    %v422 = vrot.slane %v418, 4
    %v424 = vshrl.u32 %v330, 16
    %v426 = vrot.slane %v424, 7
    %v427 = vshll.u32 %v330, 16
    %v429 = vor.u32 %v426, %v427
    %v430 = vrot.slane %v426, 4
    %v432 = vshrl.u32 %v331, 16
    %v434 = vrot.slane %v432, 7
    %v435 = vshll.u32 %v331, 16
    %v437 = vor.u32 %v434, %v435
    %v438 = vrot.slane %v434, 4
    %v440 = vshrl.u32 %v332, 16
    %v442 = vrot.slane %v440, 7
    %v443 = vshll.u32 %v332, 16
    %v445 = vor.u32 %v442, %v443
    %v446 = vrot.slane %v442, 4
    %v448 = vshrl.u32 %v333, 16
    %v450 = vrot.slane %v448, 7
    %v451 = vshll.u32 %v333, 16
    %v453 = vor.u32 %v450, %v451
    %v454 = vrot.slane %v450, 4
    %v456 = vshrl.u32 %v334, 16
    %v458 = vrot.slane %v456, 7
    %v459 = vshll.u32 %v334, 16
    %v461 = vor.u32 %v458, %v459
    %v462 = vrot.slane %v458, 4
    %s495 = scalar_lea.vmem [#allocation2], 8
    %vm496 = vcmask 27648
    %vm497 = vmand %vm496, %vm97
    %v498 = vld [vmem:[%s495] sm:$0xf]
    %v499 = vsel %vm497, %v341, %v498
    %500 = vst [vmem:[%s495] sm:$0xf] %v499
    %vm501 = vcmask 24576
    %vm502 = vmand %vm501, %vm35
    %v503 = vld [vmem:[%s495 + $0x4] sm:$0x1]
    %v504 = vsel %vm502, %v342, %v503
    %505 = vst [vmem:[%s495 + $0x4] sm:$0x1] %v504
    %v506 = vld [vmem:[%s495 + $0x8] sm:$0xf]
    %v507 = vsel %vm497, %v349, %v506
    %508 = vst [vmem:[%s495 + $0x8] sm:$0xf] %v507
    %v509 = vld [vmem:[%s495 + $0xc] sm:$0x1]
    %v510 = vsel %vm502, %v350, %v509
    %511 = vst [vmem:[%s495 + $0xc] sm:$0x1] %v510
    %v512 = vld [vmem:[%s495 + $0x10] sm:$0xf]
    %v513 = vsel %vm497, %v357, %v512
    %514 = vst [vmem:[%s495 + $0x10] sm:$0xf] %v513
    %v515 = vld [vmem:[%s495 + $0x14] sm:$0x1]
    %v516 = vsel %vm502, %v358, %v515
    %517 = vst [vmem:[%s495 + $0x14] sm:$0x1] %v516
    %v518 = vld [vmem:[%s495 + $0x18] sm:$0xf]
    %v519 = vsel %vm497, %v365, %v518
    %520 = vst [vmem:[%s495 + $0x18] sm:$0xf] %v519
    %v521 = vld [vmem:[%s495 + $0x1c] sm:$0x1]
    %v522 = vsel %vm502, %v366, %v521
    %523 = vst [vmem:[%s495 + $0x1c] sm:$0x1] %v522
    %v524 = vld [vmem:[%s495 + $0x20] sm:$0xf]
    %v525 = vsel %vm497, %v373, %v524
    %526 = vst [vmem:[%s495 + $0x20] sm:$0xf] %v525
    %v527 = vld [vmem:[%s495 + $0x24] sm:$0x1]
    %v528 = vsel %vm502, %v374, %v527
    %529 = vst [vmem:[%s495 + $0x24] sm:$0x1] %v528
    %v530 = vld [vmem:[%s495 + $0x28] sm:$0xf]
    %v531 = vsel %vm497, %v381, %v530
    %532 = vst [vmem:[%s495 + $0x28] sm:$0xf] %v531
    %v533 = vld [vmem:[%s495 + $0x2c] sm:$0x1]
    %v534 = vsel %vm502, %v382, %v533
    %535 = vst [vmem:[%s495 + $0x2c] sm:$0x1] %v534
    %v536 = vld [vmem:[%s495 + $0x30] sm:$0xf]
    %v537 = vsel %vm497, %v389, %v536
    %538 = vst [vmem:[%s495 + $0x30] sm:$0xf] %v537
    %v539 = vld [vmem:[%s495 + $0x34] sm:$0x1]
    %v540 = vsel %vm502, %v390, %v539
    %541 = vst [vmem:[%s495 + $0x34] sm:$0x1] %v540
    %v542 = vld [vmem:[%s495 + $0x38] sm:$0xf]
    %v543 = vsel %vm497, %v397, %v542
    %544 = vst [vmem:[%s495 + $0x38] sm:$0xf] %v543
    %v545 = vld [vmem:[%s495 + $0x3c] sm:$0x1]
    %v546 = vsel %vm502, %v398, %v545
    %547 = vst [vmem:[%s495 + $0x3c] sm:$0x1] %v546
    %v548 = vld [vmem:[%s495 + $0x50] sm:$0xf]
    %v549 = vsel %vm497, %v405, %v548
    %550 = vst [vmem:[%s495 + $0x50] sm:$0xf] %v549
    %v551 = vld [vmem:[%s495 + $0x54] sm:$0x1]
    %v552 = vsel %vm502, %v406, %v551
    %553 = vst [vmem:[%s495 + $0x54] sm:$0x1] %v552
    %v554 = vld [vmem:[%s495 + $0x58] sm:$0xf]
    %v555 = vsel %vm497, %v413, %v554
    %556 = vst [vmem:[%s495 + $0x58] sm:$0xf] %v555
    %v557 = vld [vmem:[%s495 + $0x5c] sm:$0x1]
    %v558 = vsel %vm502, %v414, %v557
    %559 = vst [vmem:[%s495 + $0x5c] sm:$0x1] %v558
    %v560 = vld [vmem:[%s495 + $0x60] sm:$0xf]
    %v561 = vsel %vm497, %v421, %v560
    %562 = vst [vmem:[%s495 + $0x60] sm:$0xf] %v561
    %v563 = vld [vmem:[%s495 + $0x64] sm:$0x1]
    %v564 = vsel %vm502, %v422, %v563
    %565 = vst [vmem:[%s495 + $0x64] sm:$0x1] %v564
    %v566 = vld [vmem:[%s495 + $0x68] sm:$0xf]
    %v567 = vsel %vm497, %v429, %v566
    %568 = vst [vmem:[%s495 + $0x68] sm:$0xf] %v567
    %v569 = vld [vmem:[%s495 + $0x6c] sm:$0x1]
    %v570 = vsel %vm502, %v430, %v569
    %571 = vst [vmem:[%s495 + $0x6c] sm:$0x1] %v570
    %v572 = vld [vmem:[%s495 + $0x70] sm:$0xf]
    %v573 = vsel %vm497, %v437, %v572
    %574 = vst [vmem:[%s495 + $0x70] sm:$0xf] %v573
    %v575 = vld [vmem:[%s495 + $0x74] sm:$0x1]
    %v576 = vsel %vm502, %v438, %v575
    %577 = vst [vmem:[%s495 + $0x74] sm:$0x1] %v576
    %v578 = vld [vmem:[%s495 + $0x78] sm:$0xf]
    %v579 = vsel %vm497, %v445, %v578
    %580 = vst [vmem:[%s495 + $0x78] sm:$0xf] %v579
    %v581 = vld [vmem:[%s495 + $0x7c] sm:$0x1]
    %v582 = vsel %vm502, %v446, %v581
    %583 = vst [vmem:[%s495 + $0x7c] sm:$0x1] %v582
    %v584 = vld [vmem:[%s495 + $0x80] sm:$0xf]
    %v585 = vsel %vm497, %v453, %v584
    %586 = vst [vmem:[%s495 + $0x80] sm:$0xf] %v585
    %v587 = vld [vmem:[%s495 + $0x84] sm:$0x1]
    %v588 = vsel %vm502, %v454, %v587
    %589 = vst [vmem:[%s495 + $0x84] sm:$0x1] %v588
    %v590 = vld [vmem:[%s495 + $0x88] sm:$0xf]
    %v591 = vsel %vm497, %v461, %v590
    %592 = vst [vmem:[%s495 + $0x88] sm:$0xf] %v591
    %v593 = vld [vmem:[%s495 + $0x8c] sm:$0x1]
    %v594 = vsel %vm502, %v462, %v593
    %595 = vst [vmem:[%s495 + $0x8c] sm:$0x1] %v594
    %v596 = vld [vmem:[#allocation2] sm:$0xf]
    %v597 = vld [vmem:[#allocation2 + $0x8] sm:$0xf]
    %v598 = vld [vmem:[#allocation2 + $0x10] sm:$0xf]
    %v599 = vld [vmem:[#allocation2 + $0x18] sm:$0xf]
    %v600 = vld [vmem:[#allocation2 + $0x20] sm:$0xf]
    %v601 = vld [vmem:[#allocation2 + $0x28] sm:$0xf]
    %v602 = vld [vmem:[#allocation2 + $0x30] sm:$0xf]
    %v603 = vld [vmem:[#allocation2 + $0x38] sm:$0xf]
    %v604 = vld [vmem:[#allocation2 + $0x50] sm:$0xf]
    %v605 = vld [vmem:[#allocation2 + $0x58] sm:$0xf]
    %v606 = vld [vmem:[#allocation2 + $0x60] sm:$0xf]
    %v607 = vld [vmem:[#allocation2 + $0x68] sm:$0xf]
    %v608 = vld [vmem:[#allocation2 + $0x70] sm:$0xf]
    %v609 = vld [vmem:[#allocation2 + $0x78] sm:$0xf]
    %v610 = vld [vmem:[#allocation2 + $0x80] sm:$0xf]
    %v611 = vld [vmem:[#allocation2 + $0x88] sm:$0xf]
    %v612 = vld [vmem:[#allocation2 + $0x4] sm:$0x1]
    %v613 = vld [vmem:[#allocation2 + $0xc] sm:$0x1]
    %v614 = vld [vmem:[#allocation2 + $0x14] sm:$0x1]
    %v615 = vld [vmem:[#allocation2 + $0x1c] sm:$0x1]
    %v616 = vld [vmem:[#allocation2 + $0x24] sm:$0x1]
    %v617 = vld [vmem:[#allocation2 + $0x2c] sm:$0x1]
    %v618 = vld [vmem:[#allocation2 + $0x34] sm:$0x1]
    %v619 = vld [vmem:[#allocation2 + $0x3c] sm:$0x1]
    %v620 = vld [vmem:[#allocation2 + $0x54] sm:$0x1]
    %v621 = vld [vmem:[#allocation2 + $0x5c] sm:$0x1]
    %v622 = vld [vmem:[#allocation2 + $0x64] sm:$0x1]
    %v623 = vld [vmem:[#allocation2 + $0x6c] sm:$0x1]
    %v624 = vld [vmem:[#allocation2 + $0x74] sm:$0x1]
    %v625 = vld [vmem:[#allocation2 + $0x7c] sm:$0x1]
    %v626 = vld [vmem:[#allocation2 + $0x84] sm:$0x1]
    %v627 = vld [vmem:[#allocation2 + $0x8c] sm:$0x1]
    %v628 = vld [vmem:[#allocation2] sm:$0xe]
    %v629 = vld [vmem:[#allocation2 + $0x8] sm:$0xe]
    %v630 = vld [vmem:[#allocation2 + $0x10] sm:$0xe]
    %v631 = vld [vmem:[#allocation2 + $0x18] sm:$0xe]
    %v632 = vld [vmem:[#allocation2 + $0x20] sm:$0xe]
    %v633 = vld [vmem:[#allocation2 + $0x28] sm:$0xe]
    %v634 = vld [vmem:[#allocation2 + $0x30] sm:$0xe]
    %v635 = vld [vmem:[#allocation2 + $0x38] sm:$0xe]
    %v636 = vld [vmem:[#allocation2 + $0x50] sm:$0xe]
    %v637 = vld [vmem:[#allocation2 + $0x58] sm:$0xe]
    %v638 = vld [vmem:[#allocation2 + $0x60] sm:$0xe]
    %v639 = vld [vmem:[#allocation2 + $0x68] sm:$0xe]
    %v640 = vld [vmem:[#allocation2 + $0x70] sm:$0xe]
    %v641 = vld [vmem:[#allocation2 + $0x78] sm:$0xe]
    %v642 = vld [vmem:[#allocation2 + $0x80] sm:$0xe]
    %v643 = vld [vmem:[#allocation2 + $0x88] sm:$0xe]
    %v644 = vld [vmem:[%s495] sm:$0xf]
    %v645 = vld [vmem:[%s495 + $0x8] sm:$0xf]
    %v646 = vld [vmem:[%s495 + $0x10] sm:$0xf]
    %v647 = vld [vmem:[%s495 + $0x18] sm:$0xf]
    %v648 = vld [vmem:[%s495 + $0x20] sm:$0xf]
    %v649 = vld [vmem:[%s495 + $0x28] sm:$0xf]
    %v650 = vld [vmem:[%s495 + $0x30] sm:$0xf]
    %v651 = vld [vmem:[%s495 + $0x38] sm:$0xf]
    %v652 = vld [vmem:[%s495 + $0x50] sm:$0xf]
    %v653 = vld [vmem:[%s495 + $0x58] sm:$0xf]
    %v654 = vld [vmem:[%s495 + $0x60] sm:$0xf]
    %v655 = vld [vmem:[%s495 + $0x68] sm:$0xf]
    %v656 = vld [vmem:[%s495 + $0x70] sm:$0xf]
    %v657 = vld [vmem:[%s495 + $0x78] sm:$0xf]
    %v658 = vld [vmem:[%s495 + $0x80] sm:$0xf]
    %v659 = vld [vmem:[%s495 + $0x88] sm:$0xf]
    %v660 = vld [vmem:[%s495 + $0x4] sm:$0x1]
    %v661 = vld [vmem:[%s495 + $0xc] sm:$0x1]
    %v662 = vld [vmem:[%s495 + $0x14] sm:$0x1]
    %v663 = vld [vmem:[%s495 + $0x1c] sm:$0x1]
    %v664 = vld [vmem:[%s495 + $0x24] sm:$0x1]
    %v665 = vld [vmem:[%s495 + $0x2c] sm:$0x1]
    %v666 = vld [vmem:[%s495 + $0x34] sm:$0x1]
    %v667 = vld [vmem:[%s495 + $0x3c] sm:$0x1]
    %v668 = vld [vmem:[%s495 + $0x54] sm:$0x1]
    %v669 = vld [vmem:[%s495 + $0x5c] sm:$0x1]
    %v670 = vld [vmem:[%s495 + $0x64] sm:$0x1]
    %v671 = vld [vmem:[%s495 + $0x6c] sm:$0x1]
    %v672 = vld [vmem:[%s495 + $0x74] sm:$0x1]
    %v673 = vld [vmem:[%s495 + $0x7c] sm:$0x1]
    %v674 = vld [vmem:[%s495 + $0x84] sm:$0x1]
    %v675 = vld [vmem:[%s495 + $0x8c] sm:$0x1]
    %v676 = vld [vmem:[%s495] sm:$0xe]
    %v677 = vld [vmem:[%s495 + $0x8] sm:$0xe]
    %v678 = vld [vmem:[%s495 + $0x10] sm:$0xe]
    %v679 = vld [vmem:[%s495 + $0x18] sm:$0xe]
    %v680 = vld [vmem:[%s495 + $0x20] sm:$0xe]
    %v681 = vld [vmem:[%s495 + $0x28] sm:$0xe]
    %v682 = vld [vmem:[%s495 + $0x30] sm:$0xe]
    %v683 = vld [vmem:[%s495 + $0x38] sm:$0xe]
    %v684 = vld [vmem:[%s495 + $0x50] sm:$0xe]
    %v685 = vld [vmem:[%s495 + $0x58] sm:$0xe]
    %v686 = vld [vmem:[%s495 + $0x60] sm:$0xe]
    %v687 = vld [vmem:[%s495 + $0x68] sm:$0xe]
    %v688 = vld [vmem:[%s495 + $0x70] sm:$0xe]
    %v689 = vld [vmem:[%s495 + $0x78] sm:$0xe]
    %v690 = vld [vmem:[%s495 + $0x80] sm:$0xe]
    %v691 = vld [vmem:[%s495 + $0x88] sm:$0xe]
    %s692 = scalar_lea.vmem [#allocation2], 16
    %v693 = vld [vmem:[%s692] sm:$0xf]
    %v694 = vld [vmem:[%s692 + $0x8] sm:$0xf]
    %v695 = vld [vmem:[%s692 + $0x10] sm:$0xf]
    %v696 = vld [vmem:[%s692 + $0x18] sm:$0xf]
    %v697 = vld [vmem:[%s692 + $0x20] sm:$0xf]
    %v698 = vld [vmem:[%s692 + $0x28] sm:$0xf]
    %v699 = vld [vmem:[%s692 + $0x30] sm:$0xf]
    %v700 = vld [vmem:[%s692 + $0x38] sm:$0xf]
    %v701 = vld [vmem:[%s692 + $0x50] sm:$0xf]
    %v702 = vld [vmem:[%s692 + $0x58] sm:$0xf]
    %v703 = vld [vmem:[%s692 + $0x60] sm:$0xf]
    %v704 = vld [vmem:[%s692 + $0x68] sm:$0xf]
    %v705 = vld [vmem:[%s692 + $0x70] sm:$0xf]
    %v706 = vld [vmem:[%s692 + $0x78] sm:$0xf]
    %v707 = vld [vmem:[%s692 + $0x80] sm:$0xf]
    %v708 = vld [vmem:[%s692 + $0x88] sm:$0xf]
    %v709 = vld [vmem:[%s692 + $0x4] sm:$0x1]
    %v710 = vld [vmem:[%s692 + $0xc] sm:$0x1]
    %v711 = vld [vmem:[%s692 + $0x14] sm:$0x1]
    %v712 = vld [vmem:[%s692 + $0x1c] sm:$0x1]
    %v713 = vld [vmem:[%s692 + $0x24] sm:$0x1]
    %v714 = vld [vmem:[%s692 + $0x2c] sm:$0x1]
    %v715 = vld [vmem:[%s692 + $0x34] sm:$0x1]
    %v716 = vld [vmem:[%s692 + $0x3c] sm:$0x1]
    %v717 = vld [vmem:[%s692 + $0x54] sm:$0x1]
    %v718 = vld [vmem:[%s692 + $0x5c] sm:$0x1]
    %v719 = vld [vmem:[%s692 + $0x64] sm:$0x1]
    %v720 = vld [vmem:[%s692 + $0x6c] sm:$0x1]
    %v721 = vld [vmem:[%s692 + $0x74] sm:$0x1]
    %v722 = vld [vmem:[%s692 + $0x7c] sm:$0x1]
    %v723 = vld [vmem:[%s692 + $0x84] sm:$0x1]
    %v724 = vld [vmem:[%s692 + $0x8c] sm:$0x1]
    %v725 = vld [vmem:[%s692] sm:$0xe]
    %v726 = vld [vmem:[%s692 + $0x8] sm:$0xe]
    %v727 = vld [vmem:[%s692 + $0x10] sm:$0xe]
    %v728 = vld [vmem:[%s692 + $0x18] sm:$0xe]
    %v729 = vld [vmem:[%s692 + $0x20] sm:$0xe]
    %v730 = vld [vmem:[%s692 + $0x28] sm:$0xe]
    %v731 = vld [vmem:[%s692 + $0x30] sm:$0xe]
    %v732 = vld [vmem:[%s692 + $0x38] sm:$0xe]
    %v733 = vld [vmem:[%s692 + $0x50] sm:$0xe]
    %v734 = vld [vmem:[%s692 + $0x58] sm:$0xe]
    %v735 = vld [vmem:[%s692 + $0x60] sm:$0xe]
    %v736 = vld [vmem:[%s692 + $0x68] sm:$0xe]
    %v737 = vld [vmem:[%s692 + $0x70] sm:$0xe]
    %v738 = vld [vmem:[%s692 + $0x78] sm:$0xe]
    %v739 = vld [vmem:[%s692 + $0x80] sm:$0xe]
    %v740 = vld [vmem:[%s692 + $0x88] sm:$0xe]
    %v773 = vunpack.c.l.b16 %v596
    %v774 = vunpack.c.l.b16 %v612
    %v775 = vunpack.c.l.b16 %v597
    %v776 = vunpack.c.l.b16 %v613
    %v777 = vunpack.c.l.b16 %v598
    %v778 = vunpack.c.l.b16 %v614
    %v779 = vunpack.c.l.b16 %v599
    %v780 = vunpack.c.l.b16 %v615
    %v781 = vunpack.c.l.b16 %v600
    %v782 = vunpack.c.l.b16 %v616
    %v783 = vunpack.c.l.b16 %v601
    %v784 = vunpack.c.l.b16 %v617
    %v785 = vunpack.c.l.b16 %v602
    %v786 = vunpack.c.l.b16 %v618
    %v787 = vunpack.c.l.b16 %v603
    %v788 = vunpack.c.l.b16 %v619
    %v789 = vunpack.c.l.b16 %v604
    %v790 = vunpack.c.l.b16 %v620
    %v791 = vunpack.c.l.b16 %v605
    %v792 = vunpack.c.l.b16 %v621
    %v793 = vunpack.c.l.b16 %v606
    %v794 = vunpack.c.l.b16 %v622
    %v795 = vunpack.c.l.b16 %v607
    %v796 = vunpack.c.l.b16 %v623
    %v797 = vunpack.c.l.b16 %v608
    %v798 = vunpack.c.l.b16 %v624
    %v799 = vunpack.c.l.b16 %v609
    %v800 = vunpack.c.l.b16 %v625
    %v801 = vunpack.c.l.b16 %v610
    %v802 = vunpack.c.l.b16 %v626
    %v803 = vunpack.c.l.b16 %v611
    %v804 = vunpack.c.l.b16 %v627
    %v805 = vpack.c.b16 %v774, %v773
    %v806 = vpack.c.b16 %v776, %v775
    %v807 = vpack.c.b16 %v778, %v777
    %v808 = vpack.c.b16 %v780, %v779
    %v809 = vpack.c.b16 %v782, %v781
    %v810 = vpack.c.b16 %v784, %v783
    %v811 = vpack.c.b16 %v786, %v785
    %v812 = vpack.c.b16 %v788, %v787
    %v813 = vpack.c.b16 %v790, %v789
    %v814 = vpack.c.b16 %v792, %v791
    %v815 = vpack.c.b16 %v794, %v793
    %v816 = vpack.c.b16 %v796, %v795
    %v817 = vpack.c.b16 %v798, %v797
    %v818 = vpack.c.b16 %v800, %v799
    %v819 = vpack.c.b16 %v802, %v801
    %v820 = vpack.c.b16 %v804, %v803
    %v822 = vshrl.u32 %v805, 16
    %v824 = vshll.u32 %v805, 16
    %v826 = vrot.slane %v824, 1
    %v827 = vor.u32 %v822, %v826
    %v829 = vshrl.u32 %v806, 16
    %v831 = vshll.u32 %v806, 16
    %v833 = vrot.slane %v831, 1
    %v834 = vor.u32 %v829, %v833
    %v836 = vshrl.u32 %v807, 16
    %v838 = vshll.u32 %v807, 16
    %v840 = vrot.slane %v838, 1
    %v841 = vor.u32 %v836, %v840
    %v843 = vshrl.u32 %v808, 16
    %v845 = vshll.u32 %v808, 16
    %v847 = vrot.slane %v845, 1
    %v848 = vor.u32 %v843, %v847
    %v850 = vshrl.u32 %v809, 16
    %v852 = vshll.u32 %v809, 16
    %v854 = vrot.slane %v852, 1
    %v855 = vor.u32 %v850, %v854
    %v857 = vshrl.u32 %v810, 16
    %v859 = vshll.u32 %v810, 16
    %v861 = vrot.slane %v859, 1
    %v862 = vor.u32 %v857, %v861
    %v864 = vshrl.u32 %v811, 16
    %v866 = vshll.u32 %v811, 16
    %v868 = vrot.slane %v866, 1
    %v869 = vor.u32 %v864, %v868
    %v871 = vshrl.u32 %v812, 16
    %v873 = vshll.u32 %v812, 16
    %v875 = vrot.slane %v873, 1
    %v876 = vor.u32 %v871, %v875
    %v878 = vshrl.u32 %v813, 16
    %v880 = vshll.u32 %v813, 16
    %v882 = vrot.slane %v880, 1
    %v883 = vor.u32 %v878, %v882
    %v885 = vshrl.u32 %v814, 16
    %v887 = vshll.u32 %v814, 16
    %v889 = vrot.slane %v887, 1
    %v890 = vor.u32 %v885, %v889
    %v892 = vshrl.u32 %v815, 16
    %v894 = vshll.u32 %v815, 16
    %v896 = vrot.slane %v894, 1
    %v897 = vor.u32 %v892, %v896
    %v899 = vshrl.u32 %v816, 16
    %v901 = vshll.u32 %v816, 16
    %v903 = vrot.slane %v901, 1
    %v904 = vor.u32 %v899, %v903
    %v906 = vshrl.u32 %v817, 16
    %v908 = vshll.u32 %v817, 16
    %v910 = vrot.slane %v908, 1
    %v911 = vor.u32 %v906, %v910
    %v913 = vshrl.u32 %v818, 16
    %v915 = vshll.u32 %v818, 16
    %v917 = vrot.slane %v915, 1
    %v918 = vor.u32 %v913, %v917
    %v920 = vshrl.u32 %v819, 16
    %v922 = vshll.u32 %v819, 16
    %v924 = vrot.slane %v922, 1
    %v925 = vor.u32 %v920, %v924
    %v927 = vshrl.u32 %v820, 16
    %v929 = vshll.u32 %v820, 16
    %v931 = vrot.slane %v929, 1
    %v932 = vor.u32 %v927, %v931
    %933 = vrot.lane.b32.xlu0 %v827, 4
    %v934 = vpop.permute.xlu0 %933
    %935 = vrot.lane.b32.xlu0 %v834, 4
    %v936 = vpop.permute.xlu0 %935
    %937 = vrot.lane.b32.xlu0 %v841, 4
    %v938 = vpop.permute.xlu0 %937
    %939 = vrot.lane.b32.xlu0 %v848, 4
    %v940 = vpop.permute.xlu0 %939
    %941 = vrot.lane.b32.xlu0 %v855, 4
    %v942 = vpop.permute.xlu0 %941
    %943 = vrot.lane.b32.xlu0 %v862, 4
    %v944 = vpop.permute.xlu0 %943
    %945 = vrot.lane.b32.xlu0 %v869, 4
    %v946 = vpop.permute.xlu0 %945
    %947 = vrot.lane.b32.xlu0 %v876, 4
    %v948 = vpop.permute.xlu0 %947
    %949 = vrot.lane.b32.xlu0 %v883, 4
    %v950 = vpop.permute.xlu0 %949
    %951 = vrot.lane.b32.xlu0 %v890, 4
    %v952 = vpop.permute.xlu0 %951
    %953 = vrot.lane.b32.xlu0 %v897, 4
    %v954 = vpop.permute.xlu0 %953
    %955 = vrot.lane.b32.xlu0 %v904, 4
    %v956 = vpop.permute.xlu0 %955
    %957 = vrot.lane.b32.xlu0 %v911, 4
    %v958 = vpop.permute.xlu0 %957
    %959 = vrot.lane.b32.xlu0 %v918, 4
    %v960 = vpop.permute.xlu0 %959
    %961 = vrot.lane.b32.xlu0 %v925, 4
    %v962 = vpop.permute.xlu0 %961
    %963 = vrot.lane.b32.xlu0 %v932, 4
    %v964 = vpop.permute.xlu0 %963
    %v981 = vunpack.c.l.b16 %v628
    %v982 = vunpack.c.l.b16 %v629
    %v983 = vunpack.c.l.b16 %v630
    %v984 = vunpack.c.l.b16 %v631
    %v985 = vunpack.c.l.b16 %v632
    %v986 = vunpack.c.l.b16 %v633
    %v987 = vunpack.c.l.b16 %v634
    %v988 = vunpack.c.l.b16 %v635
    %v989 = vunpack.c.l.b16 %v636
    %v990 = vunpack.c.l.b16 %v637
    %v991 = vunpack.c.l.b16 %v638
    %v992 = vunpack.c.l.b16 %v639
    %v993 = vunpack.c.l.b16 %v640
    %v994 = vunpack.c.l.b16 %v641
    %v995 = vunpack.c.l.b16 %v642
    %v996 = vunpack.c.l.b16 %v643
    %v997 = vpack.c.b16 %v774, %v981
    %v998 = vpack.c.b16 %v776, %v982
    %v999 = vpack.c.b16 %v778, %v983
    %v1000 = vpack.c.b16 %v780, %v984
    %v1001 = vpack.c.b16 %v782, %v985
    %v1002 = vpack.c.b16 %v784, %v986
    %v1003 = vpack.c.b16 %v786, %v987
    %v1004 = vpack.c.b16 %v788, %v988
    %v1005 = vpack.c.b16 %v790, %v989
    %v1006 = vpack.c.b16 %v792, %v990
    %v1007 = vpack.c.b16 %v794, %v991
    %v1008 = vpack.c.b16 %v796, %v992
    %v1009 = vpack.c.b16 %v798, %v993
    %v1010 = vpack.c.b16 %v800, %v994
    %v1011 = vpack.c.b16 %v802, %v995
    %v1012 = vpack.c.b16 %v804, %v996
    %v1013 = vrot.slane %v997, 1
    %v1014 = vrot.slane %v998, 1
    %v1015 = vrot.slane %v999, 1
    %v1016 = vrot.slane %v1000, 1
    %v1017 = vrot.slane %v1001, 1
    %v1018 = vrot.slane %v1002, 1
    %v1019 = vrot.slane %v1003, 1
    %v1020 = vrot.slane %v1004, 1
    %v1021 = vrot.slane %v1005, 1
    %v1022 = vrot.slane %v1006, 1
    %v1023 = vrot.slane %v1007, 1
    %v1024 = vrot.slane %v1008, 1
    %v1025 = vrot.slane %v1009, 1
    %v1026 = vrot.slane %v1010, 1
    %v1027 = vrot.slane %v1011, 1
    %v1028 = vrot.slane %v1012, 1
    %1029 = vrot.lane.b32.xlu0 %v1013, 8
    %v1030 = vpop.permute.xlu0 %1029
    %1031 = vrot.lane.b32.xlu0 %v1014, 8
    %v1032 = vpop.permute.xlu0 %1031
    %1033 = vrot.lane.b32.xlu0 %v1015, 8
    %v1034 = vpop.permute.xlu0 %1033
    %1035 = vrot.lane.b32.xlu0 %v1016, 8
    %v1036 = vpop.permute.xlu0 %1035
    %1037 = vrot.lane.b32.xlu0 %v1017, 8
    %v1038 = vpop.permute.xlu0 %1037
    %1039 = vrot.lane.b32.xlu0 %v1018, 8
    %v1040 = vpop.permute.xlu0 %1039
    %1041 = vrot.lane.b32.xlu0 %v1019, 8
    %v1042 = vpop.permute.xlu0 %1041
    %1043 = vrot.lane.b32.xlu0 %v1020, 8
    %v1044 = vpop.permute.xlu0 %1043
    %1045 = vrot.lane.b32.xlu0 %v1021, 8
    %v1046 = vpop.permute.xlu0 %1045
    %1047 = vrot.lane.b32.xlu0 %v1022, 8
    %v1048 = vpop.permute.xlu0 %1047
    %1049 = vrot.lane.b32.xlu0 %v1023, 8
    %v1050 = vpop.permute.xlu0 %1049
    %1051 = vrot.lane.b32.xlu0 %v1024, 8
    %v1052 = vpop.permute.xlu0 %1051
    %1053 = vrot.lane.b32.xlu0 %v1025, 8
    %v1054 = vpop.permute.xlu0 %1053
    %1055 = vrot.lane.b32.xlu0 %v1026, 8
    %v1056 = vpop.permute.xlu0 %1055
    %1057 = vrot.lane.b32.xlu0 %v1027, 8
    %v1058 = vpop.permute.xlu0 %1057
    %1059 = vrot.lane.b32.xlu0 %v1028, 8
    %v1060 = vpop.permute.xlu0 %1059
    %v1077 = vunpack.c.l.b16 %v644
    %v1078 = vunpack.c.l.b16 %v645
    %v1079 = vunpack.c.l.b16 %v646
    %v1080 = vunpack.c.l.b16 %v647
    %v1081 = vunpack.c.l.b16 %v648
    %v1082 = vunpack.c.l.b16 %v649
    %v1083 = vunpack.c.l.b16 %v650
    %v1084 = vunpack.c.l.b16 %v651
    %v1085 = vunpack.c.l.b16 %v652
    %v1086 = vunpack.c.l.b16 %v653
    %v1087 = vunpack.c.l.b16 %v654
    %v1088 = vunpack.c.l.b16 %v655
    %v1089 = vunpack.c.l.b16 %v656
    %v1090 = vunpack.c.l.b16 %v657
    %v1091 = vunpack.c.l.b16 %v658
    %v1092 = vunpack.c.l.b16 %v659
    %v1093 = vpack.c.b16 %v1077, %v1077
    %v1094 = vpack.c.b16 %v1078, %v1078
    %v1095 = vpack.c.b16 %v1079, %v1079
    %v1096 = vpack.c.b16 %v1080, %v1080
    %v1097 = vpack.c.b16 %v1081, %v1081
    %v1098 = vpack.c.b16 %v1082, %v1082
    %v1099 = vpack.c.b16 %v1083, %v1083
    %v1100 = vpack.c.b16 %v1084, %v1084
    %v1101 = vpack.c.b16 %v1085, %v1085
    %v1102 = vpack.c.b16 %v1086, %v1086
    %v1103 = vpack.c.b16 %v1087, %v1087
    %v1104 = vpack.c.b16 %v1088, %v1088
    %v1105 = vpack.c.b16 %v1089, %v1089
    %v1106 = vpack.c.b16 %v1090, %v1090
    %v1107 = vpack.c.b16 %v1091, %v1091
    %v1108 = vpack.c.b16 %v1092, %v1092
    %1109 = vrot.lane.b32.xlu0 %v1093, 12
    %v1110 = vpop.permute.xlu0 %1109
    %1111 = vrot.lane.b32.xlu0 %v1094, 12
    %v1112 = vpop.permute.xlu0 %1111
    %1113 = vrot.lane.b32.xlu0 %v1095, 12
    %v1114 = vpop.permute.xlu0 %1113
    %1115 = vrot.lane.b32.xlu0 %v1096, 12
    %v1116 = vpop.permute.xlu0 %1115
    %1117 = vrot.lane.b32.xlu0 %v1097, 12
    %v1118 = vpop.permute.xlu0 %1117
    %1119 = vrot.lane.b32.xlu0 %v1098, 12
    %v1120 = vpop.permute.xlu0 %1119
    %1121 = vrot.lane.b32.xlu0 %v1099, 12
    %v1122 = vpop.permute.xlu0 %1121
    %1123 = vrot.lane.b32.xlu0 %v1100, 12
    %v1124 = vpop.permute.xlu0 %1123
    %1125 = vrot.lane.b32.xlu0 %v1101, 12
    %v1126 = vpop.permute.xlu0 %1125
    %1127 = vrot.lane.b32.xlu0 %v1102, 12
    %v1128 = vpop.permute.xlu0 %1127
    %1129 = vrot.lane.b32.xlu0 %v1103, 12
    %v1130 = vpop.permute.xlu0 %1129
    %1131 = vrot.lane.b32.xlu0 %v1104, 12
    %v1132 = vpop.permute.xlu0 %1131
    %1133 = vrot.lane.b32.xlu0 %v1105, 12
    %v1134 = vpop.permute.xlu0 %1133
    %1135 = vrot.lane.b32.xlu0 %v1106, 12
    %v1136 = vpop.permute.xlu0 %1135
    %1137 = vrot.lane.b32.xlu0 %v1107, 12
    %v1138 = vpop.permute.xlu0 %1137
    %1139 = vrot.lane.b32.xlu0 %v1108, 12
    %v1140 = vpop.permute.xlu0 %1139
    %v1157 = vunpack.c.l.b16 %v660
    %v1158 = vunpack.c.l.b16 %v661
    %v1159 = vunpack.c.l.b16 %v662
    %v1160 = vunpack.c.l.b16 %v663
    %v1161 = vunpack.c.l.b16 %v664
    %v1162 = vunpack.c.l.b16 %v665
    %v1163 = vunpack.c.l.b16 %v666
    %v1164 = vunpack.c.l.b16 %v667
    %v1165 = vunpack.c.l.b16 %v668
    %v1166 = vunpack.c.l.b16 %v669
    %v1167 = vunpack.c.l.b16 %v670
    %v1168 = vunpack.c.l.b16 %v671
    %v1169 = vunpack.c.l.b16 %v672
    %v1170 = vunpack.c.l.b16 %v673
    %v1171 = vunpack.c.l.b16 %v674
    %v1172 = vunpack.c.l.b16 %v675
    %v1173 = vpack.c.b16 %v1157, %v1077
    %v1174 = vpack.c.b16 %v1158, %v1078
    %v1175 = vpack.c.b16 %v1159, %v1079
    %v1176 = vpack.c.b16 %v1160, %v1080
    %v1177 = vpack.c.b16 %v1161, %v1081
    %v1178 = vpack.c.b16 %v1162, %v1082
    %v1179 = vpack.c.b16 %v1163, %v1083
    %v1180 = vpack.c.b16 %v1164, %v1084
    %v1181 = vpack.c.b16 %v1165, %v1085
    %v1182 = vpack.c.b16 %v1166, %v1086
    %v1183 = vpack.c.b16 %v1167, %v1087
    %v1184 = vpack.c.b16 %v1168, %v1088
    %v1185 = vpack.c.b16 %v1169, %v1089
    %v1186 = vpack.c.b16 %v1170, %v1090
    %v1187 = vpack.c.b16 %v1171, %v1091
    %v1188 = vpack.c.b16 %v1172, %v1092
    %v1190 = vshrl.u32 %v1173, 16
    %v1192 = vshll.u32 %v1173, 16
    %v1194 = vrot.slane %v1192, 1
    %v1195 = vor.u32 %v1190, %v1194
    %v1197 = vshrl.u32 %v1174, 16
    %v1199 = vshll.u32 %v1174, 16
    %v1201 = vrot.slane %v1199, 1
    %v1202 = vor.u32 %v1197, %v1201
    %v1204 = vshrl.u32 %v1175, 16
    %v1206 = vshll.u32 %v1175, 16
    %v1208 = vrot.slane %v1206, 1
    %v1209 = vor.u32 %v1204, %v1208
    %v1211 = vshrl.u32 %v1176, 16
    %v1213 = vshll.u32 %v1176, 16
    %v1215 = vrot.slane %v1213, 1
    %v1216 = vor.u32 %v1211, %v1215
    %v1218 = vshrl.u32 %v1177, 16
    %v1220 = vshll.u32 %v1177, 16
    %v1222 = vrot.slane %v1220, 1
    %v1223 = vor.u32 %v1218, %v1222
    %v1225 = vshrl.u32 %v1178, 16
    %v1227 = vshll.u32 %v1178, 16
    %v1229 = vrot.slane %v1227, 1
    %v1230 = vor.u32 %v1225, %v1229
    %v1232 = vshrl.u32 %v1179, 16
    %v1234 = vshll.u32 %v1179, 16
    %v1236 = vrot.slane %v1234, 1
    %v1237 = vor.u32 %v1232, %v1236
    %v1239 = vshrl.u32 %v1180, 16
    %v1241 = vshll.u32 %v1180, 16
    %v1243 = vrot.slane %v1241, 1
    %v1244 = vor.u32 %v1239, %v1243
    %v1246 = vshrl.u32 %v1181, 16
    %v1248 = vshll.u32 %v1181, 16
    %v1250 = vrot.slane %v1248, 1
    %v1251 = vor.u32 %v1246, %v1250
    %v1253 = vshrl.u32 %v1182, 16
    %v1255 = vshll.u32 %v1182, 16
    %v1257 = vrot.slane %v1255, 1
    %v1258 = vor.u32 %v1253, %v1257
    %v1260 = vshrl.u32 %v1183, 16
    %v1262 = vshll.u32 %v1183, 16
    %v1264 = vrot.slane %v1262, 1
    %v1265 = vor.u32 %v1260, %v1264
    %v1267 = vshrl.u32 %v1184, 16
    %v1269 = vshll.u32 %v1184, 16
    %v1271 = vrot.slane %v1269, 1
    %v1272 = vor.u32 %v1267, %v1271
    %v1274 = vshrl.u32 %v1185, 16
    %v1276 = vshll.u32 %v1185, 16
    %v1278 = vrot.slane %v1276, 1
    %v1279 = vor.u32 %v1274, %v1278
    %v1281 = vshrl.u32 %v1186, 16
    %v1283 = vshll.u32 %v1186, 16
    %v1285 = vrot.slane %v1283, 1
    %v1286 = vor.u32 %v1281, %v1285
    %v1288 = vshrl.u32 %v1187, 16
    %v1290 = vshll.u32 %v1187, 16
    %v1292 = vrot.slane %v1290, 1
    %v1293 = vor.u32 %v1288, %v1292
    %v1295 = vshrl.u32 %v1188, 16
    %v1297 = vshll.u32 %v1188, 16
    %v1299 = vrot.slane %v1297, 1
    %v1300 = vor.u32 %v1295, %v1299
    %1301 = vrot.lane.b32.xlu0 %v1195, 16
    %v1302 = vpop.permute.xlu0 %1301
    %1303 = vrot.lane.b32.xlu0 %v1202, 16
    %v1304 = vpop.permute.xlu0 %1303
    %1305 = vrot.lane.b32.xlu0 %v1209, 16
    %v1306 = vpop.permute.xlu0 %1305
    %1307 = vrot.lane.b32.xlu0 %v1216, 16
    %v1308 = vpop.permute.xlu0 %1307
    %1309 = vrot.lane.b32.xlu0 %v1223, 16
    %v1310 = vpop.permute.xlu0 %1309
    %1311 = vrot.lane.b32.xlu0 %v1230, 16
    %v1312 = vpop.permute.xlu0 %1311
    %1313 = vrot.lane.b32.xlu0 %v1237, 16
    %v1314 = vpop.permute.xlu0 %1313
    %1315 = vrot.lane.b32.xlu0 %v1244, 16
    %v1316 = vpop.permute.xlu0 %1315
    %1317 = vrot.lane.b32.xlu0 %v1251, 16
    %v1318 = vpop.permute.xlu0 %1317
    %1319 = vrot.lane.b32.xlu0 %v1258, 16
    %v1320 = vpop.permute.xlu0 %1319
    %1321 = vrot.lane.b32.xlu0 %v1265, 16
    %v1322 = vpop.permute.xlu0 %1321
    %1323 = vrot.lane.b32.xlu0 %v1272, 16
    %v1324 = vpop.permute.xlu0 %1323
    %1325 = vrot.lane.b32.xlu0 %v1279, 16
    %v1326 = vpop.permute.xlu0 %1325
    %1327 = vrot.lane.b32.xlu0 %v1286, 16
    %v1328 = vpop.permute.xlu0 %1327
    %1329 = vrot.lane.b32.xlu0 %v1293, 16
    %v1330 = vpop.permute.xlu0 %1329
    %1331 = vrot.lane.b32.xlu0 %v1300, 16
    %v1332 = vpop.permute.xlu0 %1331
    %v1349 = vunpack.c.l.b16 %v676
    %v1350 = vunpack.c.l.b16 %v677
    %v1351 = vunpack.c.l.b16 %v678
    %v1352 = vunpack.c.l.b16 %v679
    %v1353 = vunpack.c.l.b16 %v680
    %v1354 = vunpack.c.l.b16 %v681
    %v1355 = vunpack.c.l.b16 %v682
    %v1356 = vunpack.c.l.b16 %v683
    %v1357 = vunpack.c.l.b16 %v684
    %v1358 = vunpack.c.l.b16 %v685
    %v1359 = vunpack.c.l.b16 %v686
    %v1360 = vunpack.c.l.b16 %v687
    %v1361 = vunpack.c.l.b16 %v688
    %v1362 = vunpack.c.l.b16 %v689
    %v1363 = vunpack.c.l.b16 %v690
    %v1364 = vunpack.c.l.b16 %v691
    %v1365 = vpack.c.b16 %v1157, %v1349
    %v1366 = vpack.c.b16 %v1158, %v1350
    %v1367 = vpack.c.b16 %v1159, %v1351
    %v1368 = vpack.c.b16 %v1160, %v1352
    %v1369 = vpack.c.b16 %v1161, %v1353
    %v1370 = vpack.c.b16 %v1162, %v1354
    %v1371 = vpack.c.b16 %v1163, %v1355
    %v1372 = vpack.c.b16 %v1164, %v1356
    %v1373 = vpack.c.b16 %v1165, %v1357
    %v1374 = vpack.c.b16 %v1166, %v1358
    %v1375 = vpack.c.b16 %v1167, %v1359
    %v1376 = vpack.c.b16 %v1168, %v1360
    %v1377 = vpack.c.b16 %v1169, %v1361
    %v1378 = vpack.c.b16 %v1170, %v1362
    %v1379 = vpack.c.b16 %v1171, %v1363
    %v1380 = vpack.c.b16 %v1172, %v1364
    %v1381 = vrot.slane %v1365, 1
    %v1382 = vrot.slane %v1366, 1
    %v1383 = vrot.slane %v1367, 1
    %v1384 = vrot.slane %v1368, 1
    %v1385 = vrot.slane %v1369, 1
    %v1386 = vrot.slane %v1370, 1
    %v1387 = vrot.slane %v1371, 1
    %v1388 = vrot.slane %v1372, 1
    %v1389 = vrot.slane %v1373, 1
    %v1390 = vrot.slane %v1374, 1
    %v1391 = vrot.slane %v1375, 1
    %v1392 = vrot.slane %v1376, 1
    %v1393 = vrot.slane %v1377, 1
    %v1394 = vrot.slane %v1378, 1
    %v1395 = vrot.slane %v1379, 1
    %v1396 = vrot.slane %v1380, 1
    %1397 = vrot.lane.b32.xlu0 %v1381, 20
    %v1398 = vpop.permute.xlu0 %1397
    %1399 = vrot.lane.b32.xlu0 %v1382, 20
    %v1400 = vpop.permute.xlu0 %1399
    %1401 = vrot.lane.b32.xlu0 %v1383, 20
    %v1402 = vpop.permute.xlu0 %1401
    %1403 = vrot.lane.b32.xlu0 %v1384, 20
    %v1404 = vpop.permute.xlu0 %1403
    %1405 = vrot.lane.b32.xlu0 %v1385, 20
    %v1406 = vpop.permute.xlu0 %1405
    %1407 = vrot.lane.b32.xlu0 %v1386, 20
    %v1408 = vpop.permute.xlu0 %1407
    %1409 = vrot.lane.b32.xlu0 %v1387, 20
    %v1410 = vpop.permute.xlu0 %1409
    %1411 = vrot.lane.b32.xlu0 %v1388, 20
    %v1412 = vpop.permute.xlu0 %1411
    %1413 = vrot.lane.b32.xlu0 %v1389, 20
    %v1414 = vpop.permute.xlu0 %1413
    %1415 = vrot.lane.b32.xlu0 %v1390, 20
    %v1416 = vpop.permute.xlu0 %1415
    %1417 = vrot.lane.b32.xlu0 %v1391, 20
    %v1418 = vpop.permute.xlu0 %1417
    %1419 = vrot.lane.b32.xlu0 %v1392, 20
    %v1420 = vpop.permute.xlu0 %1419
    %1421 = vrot.lane.b32.xlu0 %v1393, 20
    %v1422 = vpop.permute.xlu0 %1421
    %1423 = vrot.lane.b32.xlu0 %v1394, 20
    %v1424 = vpop.permute.xlu0 %1423
    %1425 = vrot.lane.b32.xlu0 %v1395, 20
    %v1426 = vpop.permute.xlu0 %1425
    %1427 = vrot.lane.b32.xlu0 %v1396, 20
    %v1428 = vpop.permute.xlu0 %1427
    %v1445 = vunpack.c.l.b16 %v693
    %v1446 = vunpack.c.l.b16 %v694
    %v1447 = vunpack.c.l.b16 %v695
    %v1448 = vunpack.c.l.b16 %v696
    %v1449 = vunpack.c.l.b16 %v697
    %v1450 = vunpack.c.l.b16 %v698
    %v1451 = vunpack.c.l.b16 %v699
    %v1452 = vunpack.c.l.b16 %v700
    %v1453 = vunpack.c.l.b16 %v701
    %v1454 = vunpack.c.l.b16 %v702
    %v1455 = vunpack.c.l.b16 %v703
    %v1456 = vunpack.c.l.b16 %v704
    %v1457 = vunpack.c.l.b16 %v705
    %v1458 = vunpack.c.l.b16 %v706
    %v1459 = vunpack.c.l.b16 %v707
    %v1460 = vunpack.c.l.b16 %v708
    %v1461 = vpack.c.b16 %v1445, %v1445
    %v1462 = vpack.c.b16 %v1446, %v1446
    %v1463 = vpack.c.b16 %v1447, %v1447
    %v1464 = vpack.c.b16 %v1448, %v1448
    %v1465 = vpack.c.b16 %v1449, %v1449
    %v1466 = vpack.c.b16 %v1450, %v1450
    %v1467 = vpack.c.b16 %v1451, %v1451
    %v1468 = vpack.c.b16 %v1452, %v1452
    %v1469 = vpack.c.b16 %v1453, %v1453
    %v1470 = vpack.c.b16 %v1454, %v1454
    %v1471 = vpack.c.b16 %v1455, %v1455
    %v1472 = vpack.c.b16 %v1456, %v1456
    %v1473 = vpack.c.b16 %v1457, %v1457
    %v1474 = vpack.c.b16 %v1458, %v1458
    %v1475 = vpack.c.b16 %v1459, %v1459
    %v1476 = vpack.c.b16 %v1460, %v1460
    %1477 = vrot.lane.b32.xlu0 %v1461, 24
    %v1478 = vpop.permute.xlu0 %1477
    %1479 = vrot.lane.b32.xlu0 %v1462, 24
    %v1480 = vpop.permute.xlu0 %1479
    %1481 = vrot.lane.b32.xlu0 %v1463, 24
    %v1482 = vpop.permute.xlu0 %1481
    %1483 = vrot.lane.b32.xlu0 %v1464, 24
    %v1484 = vpop.permute.xlu0 %1483
    %1485 = vrot.lane.b32.xlu0 %v1465, 24
    %v1486 = vpop.permute.xlu0 %1485
    %1487 = vrot.lane.b32.xlu0 %v1466, 24
    %v1488 = vpop.permute.xlu0 %1487
    %1489 = vrot.lane.b32.xlu0 %v1467, 24
    %v1490 = vpop.permute.xlu0 %1489
    %1491 = vrot.lane.b32.xlu0 %v1468, 24
    %v1492 = vpop.permute.xlu0 %1491
    %1493 = vrot.lane.b32.xlu0 %v1469, 24
    %v1494 = vpop.permute.xlu0 %1493
    %1495 = vrot.lane.b32.xlu0 %v1470, 24
    %v1496 = vpop.permute.xlu0 %1495
    %1497 = vrot.lane.b32.xlu0 %v1471, 24
    %v1498 = vpop.permute.xlu0 %1497
    %1499 = vrot.lane.b32.xlu0 %v1472, 24
    %v1500 = vpop.permute.xlu0 %1499
    %1501 = vrot.lane.b32.xlu0 %v1473, 24
    %v1502 = vpop.permute.xlu0 %1501
    %1503 = vrot.lane.b32.xlu0 %v1474, 24
    %v1504 = vpop.permute.xlu0 %1503
    %1505 = vrot.lane.b32.xlu0 %v1475, 24
    %v1506 = vpop.permute.xlu0 %1505
    %1507 = vrot.lane.b32.xlu0 %v1476, 24
    %v1508 = vpop.permute.xlu0 %1507
    %v1525 = vunpack.c.l.b16 %v709
    %v1526 = vunpack.c.l.b16 %v710
    %v1527 = vunpack.c.l.b16 %v711
    %v1528 = vunpack.c.l.b16 %v712
    %v1529 = vunpack.c.l.b16 %v713
    %v1530 = vunpack.c.l.b16 %v714
    %v1531 = vunpack.c.l.b16 %v715
    %v1532 = vunpack.c.l.b16 %v716
    %v1533 = vunpack.c.l.b16 %v717
    %v1534 = vunpack.c.l.b16 %v718
    %v1535 = vunpack.c.l.b16 %v719
    %v1536 = vunpack.c.l.b16 %v720
    %v1537 = vunpack.c.l.b16 %v721
    %v1538 = vunpack.c.l.b16 %v722
    %v1539 = vunpack.c.l.b16 %v723
    %v1540 = vunpack.c.l.b16 %v724
    %v1541 = vpack.c.b16 %v1525, %v1445
    %v1542 = vpack.c.b16 %v1526, %v1446
    %v1543 = vpack.c.b16 %v1527, %v1447
    %v1544 = vpack.c.b16 %v1528, %v1448
    %v1545 = vpack.c.b16 %v1529, %v1449
    %v1546 = vpack.c.b16 %v1530, %v1450
    %v1547 = vpack.c.b16 %v1531, %v1451
    %v1548 = vpack.c.b16 %v1532, %v1452
    %v1549 = vpack.c.b16 %v1533, %v1453
    %v1550 = vpack.c.b16 %v1534, %v1454
    %v1551 = vpack.c.b16 %v1535, %v1455
    %v1552 = vpack.c.b16 %v1536, %v1456
    %v1553 = vpack.c.b16 %v1537, %v1457
    %v1554 = vpack.c.b16 %v1538, %v1458
    %v1555 = vpack.c.b16 %v1539, %v1459
    %v1556 = vpack.c.b16 %v1540, %v1460
    %v1558 = vshrl.u32 %v1541, 16
    %v1560 = vshll.u32 %v1541, 16
    %v1562 = vrot.slane %v1560, 1
    %v1563 = vor.u32 %v1558, %v1562
    %v1565 = vshrl.u32 %v1542, 16
    %v1567 = vshll.u32 %v1542, 16
    %v1569 = vrot.slane %v1567, 1
    %v1570 = vor.u32 %v1565, %v1569
    %v1572 = vshrl.u32 %v1543, 16
    %v1574 = vshll.u32 %v1543, 16
    %v1576 = vrot.slane %v1574, 1
    %v1577 = vor.u32 %v1572, %v1576
    %v1579 = vshrl.u32 %v1544, 16
    %v1581 = vshll.u32 %v1544, 16
    %v1583 = vrot.slane %v1581, 1
    %v1584 = vor.u32 %v1579, %v1583
    %v1586 = vshrl.u32 %v1545, 16
    %v1588 = vshll.u32 %v1545, 16
    %v1590 = vrot.slane %v1588, 1
    %v1591 = vor.u32 %v1586, %v1590
    %v1593 = vshrl.u32 %v1546, 16
    %v1595 = vshll.u32 %v1546, 16
    %v1597 = vrot.slane %v1595, 1
    %v1598 = vor.u32 %v1593, %v1597
    %v1600 = vshrl.u32 %v1547, 16
    %v1602 = vshll.u32 %v1547, 16
    %v1604 = vrot.slane %v1602, 1
    %v1605 = vor.u32 %v1600, %v1604
    %v1607 = vshrl.u32 %v1548, 16
    %v1609 = vshll.u32 %v1548, 16
    %v1611 = vrot.slane %v1609, 1
    %v1612 = vor.u32 %v1607, %v1611
    %v1614 = vshrl.u32 %v1549, 16
    %v1616 = vshll.u32 %v1549, 16
    %v1618 = vrot.slane %v1616, 1
    %v1619 = vor.u32 %v1614, %v1618
    %v1621 = vshrl.u32 %v1550, 16
    %v1623 = vshll.u32 %v1550, 16
    %v1625 = vrot.slane %v1623, 1
    %v1626 = vor.u32 %v1621, %v1625
    %v1628 = vshrl.u32 %v1551, 16
    %v1630 = vshll.u32 %v1551, 16
    %v1632 = vrot.slane %v1630, 1
    %v1633 = vor.u32 %v1628, %v1632
    %v1635 = vshrl.u32 %v1552, 16
    %v1637 = vshll.u32 %v1552, 16
    %v1639 = vrot.slane %v1637, 1
    %v1640 = vor.u32 %v1635, %v1639
    %v1642 = vshrl.u32 %v1553, 16
    %v1644 = vshll.u32 %v1553, 16
    %v1646 = vrot.slane %v1644, 1
    %v1647 = vor.u32 %v1642, %v1646
    %v1649 = vshrl.u32 %v1554, 16
    %v1651 = vshll.u32 %v1554, 16
    %v1653 = vrot.slane %v1651, 1
    %v1654 = vor.u32 %v1649, %v1653
    %v1656 = vshrl.u32 %v1555, 16
    %v1658 = vshll.u32 %v1555, 16
    %v1660 = vrot.slane %v1658, 1
    %v1661 = vor.u32 %v1656, %v1660
    %v1663 = vshrl.u32 %v1556, 16
    %v1665 = vshll.u32 %v1556, 16
    %v1667 = vrot.slane %v1665, 1
    %v1668 = vor.u32 %v1663, %v1667
    %1669 = vrot.lane.b32.xlu0 %v1563, 28
    %v1670 = vpop.permute.xlu0 %1669
    %1671 = vrot.lane.b32.xlu0 %v1570, 28
    %v1672 = vpop.permute.xlu0 %1671
    %1673 = vrot.lane.b32.xlu0 %v1577, 28
    %v1674 = vpop.permute.xlu0 %1673
    %1675 = vrot.lane.b32.xlu0 %v1584, 28
    %v1676 = vpop.permute.xlu0 %1675
    %1677 = vrot.lane.b32.xlu0 %v1591, 28
    %v1678 = vpop.permute.xlu0 %1677
    %1679 = vrot.lane.b32.xlu0 %v1598, 28
    %v1680 = vpop.permute.xlu0 %1679
    %1681 = vrot.lane.b32.xlu0 %v1605, 28
    %v1682 = vpop.permute.xlu0 %1681
    %1683 = vrot.lane.b32.xlu0 %v1612, 28
    %v1684 = vpop.permute.xlu0 %1683
    %1685 = vrot.lane.b32.xlu0 %v1619, 28
    %v1686 = vpop.permute.xlu0 %1685
    %1687 = vrot.lane.b32.xlu0 %v1626, 28
    %v1688 = vpop.permute.xlu0 %1687
    %1689 = vrot.lane.b32.xlu0 %v1633, 28
    %v1690 = vpop.permute.xlu0 %1689
    %1691 = vrot.lane.b32.xlu0 %v1640, 28
    %v1692 = vpop.permute.xlu0 %1691
    %1693 = vrot.lane.b32.xlu0 %v1647, 28
    %v1694 = vpop.permute.xlu0 %1693
    %1695 = vrot.lane.b32.xlu0 %v1654, 28
    %v1696 = vpop.permute.xlu0 %1695
    %1697 = vrot.lane.b32.xlu0 %v1661, 28
    %v1698 = vpop.permute.xlu0 %1697
    %1699 = vrot.lane.b32.xlu0 %v1668, 28
    %v1700 = vpop.permute.xlu0 %1699
    %v1717 = vunpack.c.l.b16 %v725
    %v1718 = vunpack.c.l.b16 %v726
    %v1719 = vunpack.c.l.b16 %v727
    %v1720 = vunpack.c.l.b16 %v728
    %v1721 = vunpack.c.l.b16 %v729
    %v1722 = vunpack.c.l.b16 %v730
    %v1723 = vunpack.c.l.b16 %v731
    %v1724 = vunpack.c.l.b16 %v732
    %v1725 = vunpack.c.l.b16 %v733
    %v1726 = vunpack.c.l.b16 %v734
    %v1727 = vunpack.c.l.b16 %v735
    %v1728 = vunpack.c.l.b16 %v736
    %v1729 = vunpack.c.l.b16 %v737
    %v1730 = vunpack.c.l.b16 %v738
    %v1731 = vunpack.c.l.b16 %v739
    %v1732 = vunpack.c.l.b16 %v740
    %v1733 = vpack.c.b16 %v1525, %v1717
    %v1734 = vpack.c.b16 %v1526, %v1718
    %v1735 = vpack.c.b16 %v1527, %v1719
    %v1736 = vpack.c.b16 %v1528, %v1720
    %v1737 = vpack.c.b16 %v1529, %v1721
    %v1738 = vpack.c.b16 %v1530, %v1722
    %v1739 = vpack.c.b16 %v1531, %v1723
    %v1740 = vpack.c.b16 %v1532, %v1724
    %v1741 = vpack.c.b16 %v1533, %v1725
    %v1742 = vpack.c.b16 %v1534, %v1726
    %v1743 = vpack.c.b16 %v1535, %v1727
    %v1744 = vpack.c.b16 %v1536, %v1728
    %v1745 = vpack.c.b16 %v1537, %v1729
    %v1746 = vpack.c.b16 %v1538, %v1730
    %v1747 = vpack.c.b16 %v1539, %v1731
    %v1748 = vpack.c.b16 %v1540, %v1732
    %v1749 = vrot.slane %v1733, 1
    %v1750 = vrot.slane %v1734, 1
    %v1751 = vrot.slane %v1735, 1
    %v1752 = vrot.slane %v1736, 1
    %v1753 = vrot.slane %v1737, 1
    %v1754 = vrot.slane %v1738, 1
    %v1755 = vrot.slane %v1739, 1
    %v1756 = vrot.slane %v1740, 1
    %v1757 = vrot.slane %v1741, 1
    %v1758 = vrot.slane %v1742, 1
    %v1759 = vrot.slane %v1743, 1
    %v1760 = vrot.slane %v1744, 1
    %v1761 = vrot.slane %v1745, 1
    %v1762 = vrot.slane %v1746, 1
    %v1763 = vrot.slane %v1747, 1
    %v1764 = vrot.slane %v1748, 1
    %1765 = vrot.lane.b32.xlu0 %v1749, 32
    %v1766 = vpop.permute.xlu0 %1765
    %1767 = vrot.lane.b32.xlu0 %v1750, 32
    %v1768 = vpop.permute.xlu0 %1767
    %1769 = vrot.lane.b32.xlu0 %v1751, 32
    %v1770 = vpop.permute.xlu0 %1769
    %1771 = vrot.lane.b32.xlu0 %v1752, 32
    %v1772 = vpop.permute.xlu0 %1771
    %1773 = vrot.lane.b32.xlu0 %v1753, 32
    %v1774 = vpop.permute.xlu0 %1773
    %1775 = vrot.lane.b32.xlu0 %v1754, 32
    %v1776 = vpop.permute.xlu0 %1775
    %1777 = vrot.lane.b32.xlu0 %v1755, 32
    %v1778 = vpop.permute.xlu0 %1777
    %1779 = vrot.lane.b32.xlu0 %v1756, 32
    %v1780 = vpop.permute.xlu0 %1779
    %1781 = vrot.lane.b32.xlu0 %v1757, 32
    %v1782 = vpop.permute.xlu0 %1781
    %1783 = vrot.lane.b32.xlu0 %v1758, 32
    %v1784 = vpop.permute.xlu0 %1783
    %1785 = vrot.lane.b32.xlu0 %v1759, 32
    %v1786 = vpop.permute.xlu0 %1785
    %1787 = vrot.lane.b32.xlu0 %v1760, 32
    %v1788 = vpop.permute.xlu0 %1787
    %1789 = vrot.lane.b32.xlu0 %v1761, 32
    %v1790 = vpop.permute.xlu0 %1789
    %1791 = vrot.lane.b32.xlu0 %v1762, 32
    %v1792 = vpop.permute.xlu0 %1791
    %1793 = vrot.lane.b32.xlu0 %v1763, 32
    %v1794 = vpop.permute.xlu0 %1793
    %1795 = vrot.lane.b32.xlu0 %v1764, 32
    %v1796 = vpop.permute.xlu0 %1795
    %vm1797 = vcmask 31744
    %v1800 = vsel %vm1797, %v596, %v934
    %v1803 = vsel %vm1797, %v597, %v936
    %v1806 = vsel %vm1797, %v598, %v938
    %v1809 = vsel %vm1797, %v599, %v940
    %v1812 = vsel %vm1797, %v600, %v942
    %v1815 = vsel %vm1797, %v601, %v944
    %v1818 = vsel %vm1797, %v602, %v946
    %v1821 = vsel %vm1797, %v603, %v948
    %v1824 = vsel %vm1797, %v604, %v950
    %v1827 = vsel %vm1797, %v605, %v952
    %v1830 = vsel %vm1797, %v606, %v954
    %v1833 = vsel %vm1797, %v607, %v956
    %v1836 = vsel %vm1797, %v608, %v958
    %v1839 = vsel %vm1797, %v609, %v960
    %v1842 = vsel %vm1797, %v610, %v962
    %v1845 = vsel %vm1797, %v611, %v964
    %vm1846 = vcmask 64512
    %v1848 = vsel %vm1846, %v1800, %v1030
    %v1850 = vsel %vm1846, %v1803, %v1032
    %v1852 = vsel %vm1846, %v1806, %v1034
    %v1854 = vsel %vm1846, %v1809, %v1036
    %v1856 = vsel %vm1846, %v1812, %v1038
    %v1858 = vsel %vm1846, %v1815, %v1040
    %v1860 = vsel %vm1846, %v1818, %v1042
    %v1862 = vsel %vm1846, %v1821, %v1044
    %v1864 = vsel %vm1846, %v1824, %v1046
    %v1866 = vsel %vm1846, %v1827, %v1048
    %v1868 = vsel %vm1846, %v1830, %v1050
    %v1870 = vsel %vm1846, %v1833, %v1052
    %v1872 = vsel %vm1846, %v1836, %v1054
    %v1874 = vsel %vm1846, %v1839, %v1056
    %v1876 = vsel %vm1846, %v1842, %v1058
    %v1878 = vsel %vm1846, %v1845, %v1060
    %vm1879 = vcmask 97280
    %v1881 = vsel %vm1879, %v1848, %v1110
    %v1883 = vsel %vm1879, %v1850, %v1112
    %v1885 = vsel %vm1879, %v1852, %v1114
    %v1887 = vsel %vm1879, %v1854, %v1116
    %v1889 = vsel %vm1879, %v1856, %v1118
    %v1891 = vsel %vm1879, %v1858, %v1120
    %v1893 = vsel %vm1879, %v1860, %v1122
    %v1895 = vsel %vm1879, %v1862, %v1124
    %v1897 = vsel %vm1879, %v1864, %v1126
    %v1899 = vsel %vm1879, %v1866, %v1128
    %v1901 = vsel %vm1879, %v1868, %v1130
    %v1903 = vsel %vm1879, %v1870, %v1132
    %v1905 = vsel %vm1879, %v1872, %v1134
    %v1907 = vsel %vm1879, %v1874, %v1136
    %v1909 = vsel %vm1879, %v1876, %v1138
    %v1911 = vsel %vm1879, %v1878, %v1140
    %vm1912 = vcmask 130048
    %v1914 = vsel %vm1912, %v1881, %v1302
    %v1916 = vsel %vm1912, %v1883, %v1304
    %v1918 = vsel %vm1912, %v1885, %v1306
    %v1920 = vsel %vm1912, %v1887, %v1308
    %v1922 = vsel %vm1912, %v1889, %v1310
    %v1924 = vsel %vm1912, %v1891, %v1312
    %v1926 = vsel %vm1912, %v1893, %v1314
    %v1928 = vsel %vm1912, %v1895, %v1316
    %v1930 = vsel %vm1912, %v1897, %v1318
    %v1932 = vsel %vm1912, %v1899, %v1320
    %v1934 = vsel %vm1912, %v1901, %v1322
    %v1936 = vsel %vm1912, %v1903, %v1324
    %v1938 = vsel %vm1912, %v1905, %v1326
    %v1940 = vsel %vm1912, %v1907, %v1328
    %v1942 = vsel %vm1912, %v1909, %v1330
    %v1944 = vsel %vm1912, %v1911, %v1332
    %vm1945 = vcmask 162816
    %v1947 = vsel %vm1945, %v1914, %v1398
    %v1949 = vsel %vm1945, %v1916, %v1400
    %v1951 = vsel %vm1945, %v1918, %v1402
    %v1953 = vsel %vm1945, %v1920, %v1404
    %v1955 = vsel %vm1945, %v1922, %v1406
    %v1957 = vsel %vm1945, %v1924, %v1408
    %v1959 = vsel %vm1945, %v1926, %v1410
    %v1961 = vsel %vm1945, %v1928, %v1412
    %v1963 = vsel %vm1945, %v1930, %v1414
    %v1965 = vsel %vm1945, %v1932, %v1416
    %v1967 = vsel %vm1945, %v1934, %v1418
    %v1969 = vsel %vm1945, %v1936, %v1420
    %v1971 = vsel %vm1945, %v1938, %v1422
    %v1973 = vsel %vm1945, %v1940, %v1424
    %v1975 = vsel %vm1945, %v1942, %v1426
    %v1977 = vsel %vm1945, %v1944, %v1428
    %vm1978 = vcmask 195584
    %v1980 = vsel %vm1978, %v1947, %v1478
    %v1982 = vsel %vm1978, %v1949, %v1480
    %v1984 = vsel %vm1978, %v1951, %v1482
    %v1986 = vsel %vm1978, %v1953, %v1484
    %v1988 = vsel %vm1978, %v1955, %v1486
    %v1990 = vsel %vm1978, %v1957, %v1488
    %v1992 = vsel %vm1978, %v1959, %v1490
    %v1994 = vsel %vm1978, %v1961, %v1492
    %v1996 = vsel %vm1978, %v1963, %v1494
    %v1998 = vsel %vm1978, %v1965, %v1496
    %v2000 = vsel %vm1978, %v1967, %v1498
    %v2002 = vsel %vm1978, %v1969, %v1500
    %v2004 = vsel %vm1978, %v1971, %v1502
    %v2006 = vsel %vm1978, %v1973, %v1504
    %v2008 = vsel %vm1978, %v1975, %v1506
    %v2010 = vsel %vm1978, %v1977, %v1508
    %vm2011 = vcmask 228352
    %v2013 = vsel %vm2011, %v1980, %v1670
    %v2015 = vsel %vm2011, %v1982, %v1672
    %v2017 = vsel %vm2011, %v1984, %v1674
    %v2019 = vsel %vm2011, %v1986, %v1676
    %v2021 = vsel %vm2011, %v1988, %v1678
    %v2023 = vsel %vm2011, %v1990, %v1680
    %v2025 = vsel %vm2011, %v1992, %v1682
    %v2027 = vsel %vm2011, %v1994, %v1684
    %v2029 = vsel %vm2011, %v1996, %v1686
    %v2031 = vsel %vm2011, %v1998, %v1688
    %v2033 = vsel %vm2011, %v2000, %v1690
    %v2035 = vsel %vm2011, %v2002, %v1692
    %v2037 = vsel %vm2011, %v2004, %v1694
    %v2039 = vsel %vm2011, %v2006, %v1696
    %v2041 = vsel %vm2011, %v2008, %v1698
    %v2043 = vsel %vm2011, %v2010, %v1700
    %vm2044 = vcmask 261120
    %v2046 = vsel %vm2044, %v2013, %v1766
    %v2048 = vsel %vm2044, %v2015, %v1768
    %v2050 = vsel %vm2044, %v2017, %v1770
    %v2052 = vsel %vm2044, %v2019, %v1772
    %v2054 = vsel %vm2044, %v2021, %v1774
    %v2056 = vsel %vm2044, %v2023, %v1776
    %v2058 = vsel %vm2044, %v2025, %v1778
    %v2060 = vsel %vm2044, %v2027, %v1780
    %v2062 = vsel %vm2044, %v2029, %v1782
    %v2064 = vsel %vm2044, %v2031, %v1784
    %v2066 = vsel %vm2044, %v2033, %v1786
    %v2068 = vsel %vm2044, %v2035, %v1788
    %v2070 = vsel %vm2044, %v2037, %v1790
    %v2072 = vsel %vm2044, %v2039, %v1792
    %v2074 = vsel %vm2044, %v2041, %v1794
    %v2076 = vsel %vm2044, %v2043, %v1796
    %v2077 = vld [vmem:[%s1] sm:$0xf]
    %v2078 = vld [vmem:[%s1 + $0x4] sm:$0xf]
    %v2079 = vld [vmem:[%s1 + $0x8] sm:$0xf]
    %v2080 = vld [vmem:[%s1 + $0xc] sm:$0xf]
    %v2081 = vld [vmem:[%s1 + $0x10] sm:$0x3]
    %v2098 = vunpack.c.l.b16 %v2046
    %v2099 = vunpack.c.l.b16 %v2048
    %v2100 = vunpack.c.l.b16 %v2050
    %v2101 = vunpack.c.l.b16 %v2052
    %v2102 = vunpack.c.l.b16 %v2054
    %v2103 = vunpack.c.l.b16 %v2056
    %v2104 = vunpack.c.l.b16 %v2058
    %v2105 = vunpack.c.l.b16 %v2060
    %v2106 = vunpack.c.l.b16 %v2062
    %v2107 = vunpack.c.l.b16 %v2064
    %v2108 = vunpack.c.l.b16 %v2066
    %v2109 = vunpack.c.l.b16 %v2068
    %v2110 = vunpack.c.l.b16 %v2070
    %v2111 = vunpack.c.l.b16 %v2072
    %v2112 = vunpack.c.l.b16 %v2074
    %v2113 = vunpack.c.l.b16 %v2076
    %v2114 = vpack.c.b16 %v2099, %v2098
    %v2115 = vpack.c.b16 %v2101, %v2100
    %v2116 = vpack.c.b16 %v2103, %v2102
    %v2117 = vpack.c.b16 %v2105, %v2104
    %v2118 = vpack.c.b16 %v2107, %v2106
    %v2119 = vpack.c.b16 %v2109, %v2108
    %v2120 = vpack.c.b16 %v2111, %v2110
    %v2121 = vpack.c.b16 %v2113, %v2112
    %v2127 = vunpack.c.l.b16 %v2077
    %v2128 = vunpack.c.l.b16 %v2078
    %v2129 = vunpack.c.l.b16 %v2079
    %v2130 = vunpack.c.l.b16 %v2080
    %v2131 = vunpack.c.l.b16 %v2081
    %v2132 = vpack.c.b16 %v2128, %v2127
    %v2133 = vpack.c.b16 %v2130, %v2129
    %v2134 = vpack.c.b16 %v2131, %v2131
    %vm2137 = vcmask 293888
    %v2139 = vsel %vm2137, %v2114, 0
    %v2142 = vsel %vm2137, %v2115, 0
    %v2145 = vsel %vm2137, %v2116, 0
    %v2148 = vsel %vm2137, %v2117, 0
    %v2151 = vsel %vm2137, %v2118, 0
    %v2154 = vsel %vm2137, %v2119, 0
    %v2157 = vsel %vm2137, %v2120, 0
    %v2160 = vsel %vm2137, %v2121, 0
    %vm2162 = vcmask 1041408
    %v2164 = vsel %vm2162, %v2134, 0
    %2166 = vmatprep.subr.bf16.mxu0 0
    %2167 = vmatpush1.bf16.msra.mxu0 %v2132
    %2168 = vmatprep.subr.bf16.mxu0 0
    %2169 = vmatpush1.bf16.msra.mxu0 %v2133
    %2170 = vmatprep.subr.bf16.mxu0 0
    %2171 = vmatpush1.bf16.msra.mxu0 %v2164
    %2172 = vmatprep.subr.bf16.mxu0 0
    %2173 = vmatpush1.bf16.msra.mxu0 0
    %2174 = vmatprep.subr.bf16.mxu0 0
    %2175 = vmatpush1.bf16.msra.mxu0 0
    %2176 = vmatprep.subr.bf16.mxu0 0
    %2177 = vmatpush1.bf16.msra.mxu0 0
    %2178 = vmatprep.subr.bf16.mxu0 0
    %2179 = vmatpush1.bf16.msra.mxu0 0
    %2180 = vmatprep.subr.bf16.mxu0 0
    %2181 = vmatpush1.bf16.msra.mxu0 0
    %2182 = vmatprep.subr.bf16.mxu0 0
    %2183 = vmatpush1.bf16.msra.mxu0 0
    %2184 = vmatprep.subr.bf16.mxu0 0
    %2185 = vmatpush1.bf16.msra.mxu0 0
    %2186 = vmatprep.subr.bf16.mxu0 0
    %2187 = vmatpush1.bf16.msra.mxu0 0
    %2188 = vmatprep.subr.bf16.mxu0 0
    %2189 = vmatpush1.bf16.msra.mxu0 0
    %2190 = vmatprep.subr.bf16.mxu0 0
    %2191 = vmatpush1.bf16.msra.mxu0 0
    %2192 = vmatprep.subr.bf16.mxu0 0
    %2193 = vmatpush1.bf16.msra.mxu0 0
    %2194 = vmatprep.subr.bf16.mxu0 0
    %2195 = vmatpush1.bf16.msra.mxu0 0
    %2196 = vmatprep.subr.bf16.mxu0 0
    %2197 = vmatpush1.bf16.msra.mxu0 0
    %2198 = vmatprep.mubr.bf16.mxu0 0
    %2199 = vmatmul.mubr.bf16.gmra.mrb[0].mxu0 %v2139
    %v2200 = vpop.f32.mrb[0].mxu0
    %v2201 = vadd.f32 0.0, %v2200
    %v2202 = vpop.f32.mrb[0].mxu0
    %v2203 = vpop.f32.mrb[0].mxu0
    %v2204 = vadd.f32 0.0, %v2203
    %v2205 = vpop.f32.mrb[0].mxu0
    %2206 = vmatprep.mubr.bf16.mxu0 0
    %2207 = vmatmul.mubr.bf16.gmra.mrb[0].mxu0 %v2142
    %v2208 = vpop.f32.mrb[0].mxu0
    %v2209 = vadd.f32 0.0, %v2208
    %v2210 = vpop.f32.mrb[0].mxu0
    %v2211 = vpop.f32.mrb[0].mxu0
    %v2212 = vadd.f32 0.0, %v2211
    %v2213 = vpop.f32.mrb[0].mxu0
    %2214 = vmatprep.mubr.bf16.mxu0 0
    %2215 = vmatmul.mubr.bf16.gmra.mrb[0].mxu0 %v2145
    %v2216 = vpop.f32.mrb[0].mxu0
    %v2217 = vadd.f32 0.0, %v2216
    %v2218 = vpop.f32.mrb[0].mxu0
    %v2219 = vpop.f32.mrb[0].mxu0
    %v2220 = vadd.f32 0.0, %v2219
    %v2221 = vpop.f32.mrb[0].mxu0
    %2222 = vmatprep.mubr.bf16.mxu0 0
    %2223 = vmatmul.mubr.bf16.gmra.mrb[0].mxu0 %v2148
    %v2224 = vpop.f32.mrb[0].mxu0
    %v2225 = vadd.f32 0.0, %v2224
    %v2226 = vpop.f32.mrb[0].mxu0
    %v2227 = vpop.f32.mrb[0].mxu0
    %v2228 = vadd.f32 0.0, %v2227
    %v2229 = vpop.f32.mrb[0].mxu0
    %2230 = vmatprep.mubr.bf16.mxu0 0
    %2231 = vmatmul.mubr.bf16.gmra.mrb[0].mxu0 %v2151
    %v2232 = vpop.f32.mrb[0].mxu0
    %v2233 = vadd.f32 0.0, %v2232
    %v2234 = vpop.f32.mrb[0].mxu0
    %v2235 = vpop.f32.mrb[0].mxu0
    %v2236 = vadd.f32 0.0, %v2235
    %v2237 = vpop.f32.mrb[0].mxu0
    %2238 = vmatprep.mubr.bf16.mxu0 0
    %2239 = vmatmul.mubr.bf16.gmra.mrb[0].mxu0 %v2154
    %v2240 = vpop.f32.mrb[0].mxu0
    %v2241 = vadd.f32 0.0, %v2240
    %v2242 = vpop.f32.mrb[0].mxu0
    %v2243 = vpop.f32.mrb[0].mxu0
    %v2244 = vadd.f32 0.0, %v2243
    %v2245 = vpop.f32.mrb[0].mxu0
    %2246 = vmatprep.mubr.bf16.mxu0 0
    %2247 = vmatmul.mubr.bf16.gmra.mrb[0].mxu0 %v2157
    %v2248 = vpop.f32.mrb[0].mxu0
    %v2249 = vadd.f32 0.0, %v2248
    %v2250 = vpop.f32.mrb[0].mxu0
    %v2251 = vpop.f32.mrb[0].mxu0
    %v2252 = vadd.f32 0.0, %v2251
    %v2253 = vpop.f32.mrb[0].mxu0
    %2254 = vmatprep.mubr.bf16.mxu0 0
    %2255 = vmatmul.mubr.bf16.gmra.mrb[0].mxu0 %v2160
    %v2256 = vpop.f32.mrb[0].mxu0
    %v2257 = vadd.f32 0.0, %v2256
    %v2258 = vpop.f32.mrb[0].mxu0
    %v2259 = vpop.f32.mrb[0].mxu0
    %v2260 = vadd.f32 0.0, %v2259
    %v2261 = vpop.f32.mrb[0].mxu0
    %2262 = vdwg.mxu0
    %v2263 = vsel %vm2044, %v2201, 0.0
    %v2264 = vsel %vm2044, %v2204, 0.0
    %v2265 = vadd.f32 %v2263, %v2264
    %v2266 = vsel %vm2044, %v2209, 0.0
    %v2267 = vadd.f32 %v2265, %v2266
    %v2268 = vsel %vm2044, %v2212, 0.0
    %v2269 = vadd.f32 %v2267, %v2268
    %v2270 = vsel %vm2044, %v2217, 0.0
    %v2271 = vadd.f32 %v2269, %v2270
    %v2272 = vsel %vm2044, %v2220, 0.0
    %v2273 = vadd.f32 %v2271, %v2272
    %v2274 = vsel %vm2044, %v2225, 0.0
    %v2275 = vadd.f32 %v2273, %v2274
    %v2276 = vsel %vm2044, %v2228, 0.0
    %v2277 = vadd.f32 %v2275, %v2276
    %v2278 = vrot.slane %v2277, 4
    %v2279 = vadd.f32 %v2277, %v2278
    %v2280 = vrot.slane %v2279, 2
    %v2281 = vadd.f32 %v2279, %v2280
    %v2282 = vrot.slane %v2281, 1
    %v2283 = vadd.f32 %v2281, %v2282
    %v2284 = vsel %vm2044, %v2233, 0.0
    %v2285 = vsel %vm2044, %v2236, 0.0
    %v2286 = vadd.f32 %v2284, %v2285
    %v2287 = vsel %vm2044, %v2241, 0.0
    %v2288 = vadd.f32 %v2286, %v2287
    %v2289 = vsel %vm2044, %v2244, 0.0
    %v2290 = vadd.f32 %v2288, %v2289
    %v2291 = vsel %vm2044, %v2249, 0.0
    %v2292 = vadd.f32 %v2290, %v2291
    %v2293 = vsel %vm2044, %v2252, 0.0
    %v2294 = vadd.f32 %v2292, %v2293
    %v2295 = vsel %vm2044, %v2257, 0.0
    %v2296 = vadd.f32 %v2294, %v2295
    %v2297 = vsel %vm2044, %v2260, 0.0
    %v2298 = vadd.f32 %v2296, %v2297
    %v2299 = vrot.slane %v2298, 4
    %v2300 = vadd.f32 %v2298, %v2299
    %v2301 = vrot.slane %v2300, 2
    %v2302 = vadd.f32 %v2300, %v2301
    %v2303 = vrot.slane %v2302, 1
    %v2304 = vadd.f32 %v2302, %v2303
    %v2305 = vmul.f32 %v2283, 0.015625
    %v2306 = vmul.f32 %v2304, 0.015625
    %v2307 = vsub.f32 %v2201, %v2305
    %v2308 = vsub.f32 %v2204, %v2305
    %v2309 = vsub.f32 %v2209, %v2305
    %v2310 = vsub.f32 %v2212, %v2305
    %v2311 = vsub.f32 %v2217, %v2305
    %v2312 = vsub.f32 %v2220, %v2305
    %v2313 = vsub.f32 %v2225, %v2305
    %v2314 = vsub.f32 %v2228, %v2305
    %v2315 = vsub.f32 %v2233, %v2306
    %v2316 = vsub.f32 %v2236, %v2306
    %v2317 = vsub.f32 %v2241, %v2306
    %v2318 = vsub.f32 %v2244, %v2306
    %v2319 = vsub.f32 %v2249, %v2306
    %v2320 = vsub.f32 %v2252, %v2306
    %v2321 = vsub.f32 %v2257, %v2306
    %v2322 = vsub.f32 %v2260, %v2306
    %v2323 = vmul.f32 %v2307, %v2307
    %v2324 = vmul.f32 %v2308, %v2308
    %v2325 = vmul.f32 %v2309, %v2309
    %v2326 = vmul.f32 %v2310, %v2310
    %v2327 = vmul.f32 %v2311, %v2311
    %v2328 = vmul.f32 %v2312, %v2312
    %v2329 = vmul.f32 %v2313, %v2313
    %v2330 = vmul.f32 %v2314, %v2314
    %v2331 = vmul.f32 %v2315, %v2315
    %v2332 = vmul.f32 %v2316, %v2316
    %v2333 = vmul.f32 %v2317, %v2317
    %v2334 = vmul.f32 %v2318, %v2318
    %v2335 = vmul.f32 %v2319, %v2319
    %v2336 = vmul.f32 %v2320, %v2320
    %v2337 = vmul.f32 %v2321, %v2321
    %v2338 = vmul.f32 %v2322, %v2322
    %v2339 = vsel %vm2044, %v2323, 0.0
    %v2340 = vsel %vm2044, %v2324, 0.0
    %v2341 = vadd.f32 %v2339, %v2340
    %v2342 = vsel %vm2044, %v2325, 0.0
    %v2343 = vadd.f32 %v2341, %v2342
    %v2344 = vsel %vm2044, %v2326, 0.0
    %v2345 = vadd.f32 %v2343, %v2344
    %v2346 = vsel %vm2044, %v2327, 0.0
    %v2347 = vadd.f32 %v2345, %v2346
    %v2348 = vsel %vm2044, %v2328, 0.0
    %v2349 = vadd.f32 %v2347, %v2348
    %v2350 = vsel %vm2044, %v2329, 0.0
    %v2351 = vadd.f32 %v2349, %v2350
    %v2352 = vsel %vm2044, %v2330, 0.0
    %v2353 = vadd.f32 %v2351, %v2352
    %v2354 = vrot.slane %v2353, 4
    %v2355 = vadd.f32 %v2353, %v2354
    %v2356 = vrot.slane %v2355, 2
    %v2357 = vadd.f32 %v2355, %v2356
    %v2358 = vrot.slane %v2357, 1
    %v2359 = vadd.f32 %v2357, %v2358
    %v2360 = vsel %vm2044, %v2331, 0.0
    %v2361 = vsel %vm2044, %v2332, 0.0
    %v2362 = vadd.f32 %v2360, %v2361
    %v2363 = vsel %vm2044, %v2333, 0.0
    %v2364 = vadd.f32 %v2362, %v2363
    %v2365 = vsel %vm2044, %v2334, 0.0
    %v2366 = vadd.f32 %v2364, %v2365
    %v2367 = vsel %vm2044, %v2335, 0.0
    %v2368 = vadd.f32 %v2366, %v2367
    %v2369 = vsel %vm2044, %v2336, 0.0
    %v2370 = vadd.f32 %v2368, %v2369
    %v2371 = vsel %vm2044, %v2337, 0.0
    %v2372 = vadd.f32 %v2370, %v2371
    %v2373 = vsel %vm2044, %v2338, 0.0
    %v2374 = vadd.f32 %v2372, %v2373
    %v2375 = vrot.slane %v2374, 4
    %v2376 = vadd.f32 %v2374, %v2375
    %v2377 = vrot.slane %v2376, 2
    %v2378 = vadd.f32 %v2376, %v2377
    %v2379 = vrot.slane %v2378, 1
    %v2380 = vadd.f32 %v2378, %v2379
    %v2381 = vmul.f32 %v2359, 0.015625
    %v2382 = vmul.f32 %v2380, 0.015625
    %v2383 = vadd.f32 %v2381, 1e-05
    %v2384 = vadd.f32 %v2382, 1e-05
    %v2385 = vrsqrt.pop %v2383
    %v2386 = vrsqrt.pop %v2384
    %v2387 = vmul.f32 %v2385, %v19
    %v2388 = vmul.f32 %v2386, %v19
    %v2389 = vlaneseq
    %v2390 = vshrl.u32 %v2389, 7
    %v2391 = vsub.s32 0, %v2390
    %v2392 = vrot.slane %v2387, %v2391
    %v2393 = vlaneseq
    %v2394 = vshrl.u32 %v2393, 7
    %v2395 = vsub.s32 0, %v2394
    %v2396 = vrot.slane %v2388, %v2395
    %v2397 = vmul.f32 %v2307, %v2392
    %v2398 = vmul.f32 %v2308, %v2392
    %v2399 = vmul.f32 %v2309, %v2392
    %v2400 = vmul.f32 %v2310, %v2392
    %v2401 = vmul.f32 %v2311, %v2392
    %v2402 = vmul.f32 %v2312, %v2392
    %v2403 = vmul.f32 %v2313, %v2392
    %v2404 = vmul.f32 %v2314, %v2392
    %v2405 = vmul.f32 %v2315, %v2396
    %v2406 = vmul.f32 %v2316, %v2396
    %v2407 = vmul.f32 %v2317, %v2396
    %v2408 = vmul.f32 %v2318, %v2396
    %v2409 = vmul.f32 %v2319, %v2396
    %v2410 = vmul.f32 %v2320, %v2396
    %v2411 = vmul.f32 %v2321, %v2396
    %v2412 = vmul.f32 %v2322, %v2396
    %v2413 = vlaneseq
    %v2414 = vshrl.u32 %v2413, 7
    %v2415 = vsub.s32 0, %v2414
    %v2416 = vrot.slane %v20, %v2415
    %v2417 = vadd.f32 %v2397, %v2416
    %v2418 = vadd.f32 %v2398, %v2416
    %v2419 = vadd.f32 %v2399, %v2416
    %v2420 = vadd.f32 %v2400, %v2416
    %v2421 = vadd.f32 %v2401, %v2416
    %v2422 = vadd.f32 %v2402, %v2416
    %v2423 = vadd.f32 %v2403, %v2416
    %v2424 = vadd.f32 %v2404, %v2416
    %v2425 = vadd.f32 %v2405, %v2416
    %v2426 = vadd.f32 %v2406, %v2416
    %v2427 = vadd.f32 %v2407, %v2416
    %v2428 = vadd.f32 %v2408, %v2416
    %v2429 = vadd.f32 %v2409, %v2416
    %v2430 = vadd.f32 %v2410, %v2416
    %v2431 = vadd.f32 %v2411, %v2416
    %v2432 = vadd.f32 %v2412, %v2416
    %vm2433 = vcmp.gt.f32.partialorder %v2417, 0.0
    %vm2434 = vcmp.gt.f32.partialorder %v2418, 0.0
    %vm2435 = vcmp.gt.f32.partialorder %v2419, 0.0
    %vm2436 = vcmp.gt.f32.partialorder %v2420, 0.0
    %vm2437 = vcmp.gt.f32.partialorder %v2421, 0.0
    %vm2438 = vcmp.gt.f32.partialorder %v2422, 0.0
    %vm2439 = vcmp.gt.f32.partialorder %v2423, 0.0
    %vm2440 = vcmp.gt.f32.partialorder %v2424, 0.0
    %vm2441 = vcmp.gt.f32.partialorder %v2425, 0.0
    %vm2442 = vcmp.gt.f32.partialorder %v2426, 0.0
    %vm2443 = vcmp.gt.f32.partialorder %v2427, 0.0
    %vm2444 = vcmp.gt.f32.partialorder %v2428, 0.0
    %vm2445 = vcmp.gt.f32.partialorder %v2429, 0.0
    %vm2446 = vcmp.gt.f32.partialorder %v2430, 0.0
    %vm2447 = vcmp.gt.f32.partialorder %v2431, 0.0
    %vm2448 = vcmp.gt.f32.partialorder %v2432, 0.0
    %v2449 = vmul.f32 %v2417, 0.2
    %v2450 = vmul.f32 %v2418, 0.2
    %v2451 = vmul.f32 %v2419, 0.2
    %v2452 = vmul.f32 %v2420, 0.2
    %v2453 = vmul.f32 %v2421, 0.2
    %v2454 = vmul.f32 %v2422, 0.2
    %v2455 = vmul.f32 %v2423, 0.2
    %v2456 = vmul.f32 %v2424, 0.2
    %v2457 = vmul.f32 %v2425, 0.2
    %v2458 = vmul.f32 %v2426, 0.2
    %v2459 = vmul.f32 %v2427, 0.2
    %v2460 = vmul.f32 %v2428, 0.2
    %v2461 = vmul.f32 %v2429, 0.2
    %v2462 = vmul.f32 %v2430, 0.2
    %v2463 = vmul.f32 %v2431, 0.2
    %v2464 = vmul.f32 %v2432, 0.2
    %v2465 = vsel %vm2433, %v2417, %v2449
    %v2466 = vsel %vm2434, %v2418, %v2450
    %v2467 = vsel %vm2435, %v2419, %v2451
    %v2468 = vsel %vm2436, %v2420, %v2452
    %v2469 = vsel %vm2437, %v2421, %v2453
    %v2470 = vsel %vm2438, %v2422, %v2454
    %v2471 = vsel %vm2439, %v2423, %v2455
    %v2472 = vsel %vm2440, %v2424, %v2456
    %v2473 = vsel %vm2441, %v2425, %v2457
    %v2474 = vsel %vm2442, %v2426, %v2458
    %v2475 = vsel %vm2443, %v2427, %v2459
    %v2476 = vsel %vm2444, %v2428, %v2460
    %v2477 = vsel %vm2445, %v2429, %v2461
    %v2478 = vsel %vm2446, %v2430, %v2462
    %v2479 = vsel %vm2447, %v2431, %v2463
    %v2480 = vsel %vm2448, %v2432, %v2464
    %v2481 = vpack.c.bf16 %v2465, %v2465
    %v2482 = vpack.c.bf16 %v2466, %v2466
    %v2483 = vpack.c.bf16 %v2467, %v2467
    %v2484 = vpack.c.bf16 %v2468, %v2468
    %v2485 = vpack.c.bf16 %v2469, %v2469
    %v2486 = vpack.c.bf16 %v2470, %v2470
    %v2487 = vpack.c.bf16 %v2471, %v2471
    %v2488 = vpack.c.bf16 %v2472, %v2472
    %v2489 = vpack.c.bf16 %v2473, %v2473
    %v2490 = vpack.c.bf16 %v2474, %v2474
    %v2491 = vpack.c.bf16 %v2475, %v2475
    %v2492 = vpack.c.bf16 %v2476, %v2476
    %v2493 = vpack.c.bf16 %v2477, %v2477
    %v2494 = vpack.c.bf16 %v2478, %v2478
    %v2495 = vpack.c.bf16 %v2479, %v2479
    %v2496 = vpack.c.bf16 %v2480, %v2480
    %v2513 = vunpack.c.l.b16 %v2481
    %v2514 = vunpack.c.l.b16 %v2482
    %v2515 = vunpack.c.l.b16 %v2483
    %v2516 = vunpack.c.l.b16 %v2484
    %v2517 = vunpack.c.l.b16 %v2485
    %v2518 = vunpack.c.l.b16 %v2486
    %v2519 = vunpack.c.l.b16 %v2487
    %v2520 = vunpack.c.l.b16 %v2488
    %v2521 = vunpack.c.l.b16 %v2489
    %v2522 = vunpack.c.l.b16 %v2490
    %v2523 = vunpack.c.l.b16 %v2491
    %v2524 = vunpack.c.l.b16 %v2492
    %v2525 = vunpack.c.l.b16 %v2493
    %v2526 = vunpack.c.l.b16 %v2494
    %v2527 = vunpack.c.l.b16 %v2495
    %v2528 = vunpack.c.l.b16 %v2496
    %v2529 = vpack.c.b16 %v2513, %v2513
    %v2530 = vpack.c.b16 %v2514, %v2514
    %v2531 = vpack.c.b16 %v2515, %v2515
    %v2532 = vpack.c.b16 %v2516, %v2516
    %v2533 = vpack.c.b16 %v2517, %v2517
    %v2534 = vpack.c.b16 %v2518, %v2518
    %v2535 = vpack.c.b16 %v2519, %v2519
    %v2536 = vpack.c.b16 %v2520, %v2520
    %v2537 = vpack.c.b16 %v2521, %v2521
    %v2538 = vpack.c.b16 %v2522, %v2522
    %v2539 = vpack.c.b16 %v2523, %v2523
    %v2540 = vpack.c.b16 %v2524, %v2524
    %v2541 = vpack.c.b16 %v2525, %v2525
    %v2542 = vpack.c.b16 %v2526, %v2526
    %v2543 = vpack.c.b16 %v2527, %v2527
    %v2544 = vpack.c.b16 %v2528, %v2528
    %v2546 = vshrl.u32 %v2529, 16
    %v2548 = vrot.slane %v2546, 7
    %v2549 = vshll.u32 %v2529, 16
    %v2551 = vor.u32 %v2548, %v2549
    %v2552 = vrot.slane %v2548, 4
    %v2554 = vshrl.u32 %v2530, 16
    %v2556 = vrot.slane %v2554, 7
    %v2557 = vshll.u32 %v2530, 16
    %v2559 = vor.u32 %v2556, %v2557
    %v2560 = vrot.slane %v2556, 4
    %v2562 = vshrl.u32 %v2531, 16
    %v2564 = vrot.slane %v2562, 7
    %v2565 = vshll.u32 %v2531, 16
    %v2567 = vor.u32 %v2564, %v2565
    %v2568 = vrot.slane %v2564, 4
    %v2570 = vshrl.u32 %v2532, 16
    %v2572 = vrot.slane %v2570, 7
    %v2573 = vshll.u32 %v2532, 16
    %v2575 = vor.u32 %v2572, %v2573
    %v2576 = vrot.slane %v2572, 4
    %v2578 = vshrl.u32 %v2533, 16
    %v2580 = vrot.slane %v2578, 7
    %v2581 = vshll.u32 %v2533, 16
    %v2583 = vor.u32 %v2580, %v2581
    %v2584 = vrot.slane %v2580, 4
    %v2586 = vshrl.u32 %v2534, 16
    %v2588 = vrot.slane %v2586, 7
    %v2589 = vshll.u32 %v2534, 16
    %v2591 = vor.u32 %v2588, %v2589
    %v2592 = vrot.slane %v2588, 4
    %v2594 = vshrl.u32 %v2535, 16
    %v2596 = vrot.slane %v2594, 7
    %v2597 = vshll.u32 %v2535, 16
    %v2599 = vor.u32 %v2596, %v2597
    %v2600 = vrot.slane %v2596, 4
    %v2602 = vshrl.u32 %v2536, 16
    %v2604 = vrot.slane %v2602, 7
    %v2605 = vshll.u32 %v2536, 16
    %v2607 = vor.u32 %v2604, %v2605
    %v2608 = vrot.slane %v2604, 4
    %v2610 = vshrl.u32 %v2537, 16
    %v2612 = vrot.slane %v2610, 7
    %v2613 = vshll.u32 %v2537, 16
    %v2615 = vor.u32 %v2612, %v2613
    %v2616 = vrot.slane %v2612, 4
    %v2618 = vshrl.u32 %v2538, 16
    %v2620 = vrot.slane %v2618, 7
    %v2621 = vshll.u32 %v2538, 16
    %v2623 = vor.u32 %v2620, %v2621
    %v2624 = vrot.slane %v2620, 4
    %v2626 = vshrl.u32 %v2539, 16
    %v2628 = vrot.slane %v2626, 7
    %v2629 = vshll.u32 %v2539, 16
    %v2631 = vor.u32 %v2628, %v2629
    %v2632 = vrot.slane %v2628, 4
    %v2634 = vshrl.u32 %v2540, 16
    %v2636 = vrot.slane %v2634, 7
    %v2637 = vshll.u32 %v2540, 16
    %v2639 = vor.u32 %v2636, %v2637
    %v2640 = vrot.slane %v2636, 4
    %v2642 = vshrl.u32 %v2541, 16
    %v2644 = vrot.slane %v2642, 7
    %v2645 = vshll.u32 %v2541, 16
    %v2647 = vor.u32 %v2644, %v2645
    %v2648 = vrot.slane %v2644, 4
    %v2650 = vshrl.u32 %v2542, 16
    %v2652 = vrot.slane %v2650, 7
    %v2653 = vshll.u32 %v2542, 16
    %v2655 = vor.u32 %v2652, %v2653
    %v2656 = vrot.slane %v2652, 4
    %v2658 = vshrl.u32 %v2543, 16
    %v2660 = vrot.slane %v2658, 7
    %v2661 = vshll.u32 %v2543, 16
    %v2663 = vor.u32 %v2660, %v2661
    %v2664 = vrot.slane %v2660, 4
    %v2666 = vshrl.u32 %v2544, 16
    %v2668 = vrot.slane %v2666, 7
    %v2669 = vshll.u32 %v2544, 16
    %v2671 = vor.u32 %v2668, %v2669
    %v2672 = vrot.slane %v2668, 4
    %vm2705 = vcmask 257024
    %vm2706 = vmand %vm2705, %vm97
    %v2707 = vsel %vm2706, %v2551, %v644
    %2708 = vst [vmem:[%s495] sm:$0xf] %v2707
    %v2709 = vld [vmem:[%s495 + $0x4] sm:$0x1]
    %v2710 = vsel %vm36, %v2552, %v2709
    %2711 = vst [vmem:[%s495 + $0x4] sm:$0x1] %v2710
    %v2712 = vld [vmem:[%s495 + $0x8] sm:$0xf]
    %v2713 = vsel %vm2706, %v2559, %v2712
    %2714 = vst [vmem:[%s495 + $0x8] sm:$0xf] %v2713
    %v2715 = vld [vmem:[%s495 + $0xc] sm:$0x1]
    %v2716 = vsel %vm36, %v2560, %v2715
    %2717 = vst [vmem:[%s495 + $0xc] sm:$0x1] %v2716
    %v2718 = vld [vmem:[%s495 + $0x10] sm:$0xf]
    %v2719 = vsel %vm2706, %v2567, %v2718
    %2720 = vst [vmem:[%s495 + $0x10] sm:$0xf] %v2719
    %v2721 = vld [vmem:[%s495 + $0x14] sm:$0x1]
    %v2722 = vsel %vm36, %v2568, %v2721
    %2723 = vst [vmem:[%s495 + $0x14] sm:$0x1] %v2722
    %v2724 = vld [vmem:[%s495 + $0x18] sm:$0xf]
    %v2725 = vsel %vm2706, %v2575, %v2724
    %2726 = vst [vmem:[%s495 + $0x18] sm:$0xf] %v2725
    %v2727 = vld [vmem:[%s495 + $0x1c] sm:$0x1]
    %v2728 = vsel %vm36, %v2576, %v2727
    %2729 = vst [vmem:[%s495 + $0x1c] sm:$0x1] %v2728
    %v2730 = vld [vmem:[%s495 + $0x20] sm:$0xf]
    %v2731 = vsel %vm2706, %v2583, %v2730
    %2732 = vst [vmem:[%s495 + $0x20] sm:$0xf] %v2731
    %v2733 = vld [vmem:[%s495 + $0x24] sm:$0x1]
    %v2734 = vsel %vm36, %v2584, %v2733
    %2735 = vst [vmem:[%s495 + $0x24] sm:$0x1] %v2734
    %v2736 = vld [vmem:[%s495 + $0x28] sm:$0xf]
    %v2737 = vsel %vm2706, %v2591, %v2736
    %2738 = vst [vmem:[%s495 + $0x28] sm:$0xf] %v2737
    %v2739 = vld [vmem:[%s495 + $0x2c] sm:$0x1]
    %v2740 = vsel %vm36, %v2592, %v2739
    %2741 = vst [vmem:[%s495 + $0x2c] sm:$0x1] %v2740
    %v2742 = vld [vmem:[%s495 + $0x30] sm:$0xf]
    %v2743 = vsel %vm2706, %v2599, %v2742
    %2744 = vst [vmem:[%s495 + $0x30] sm:$0xf] %v2743
    %v2745 = vld [vmem:[%s495 + $0x34] sm:$0x1]
    %v2746 = vsel %vm36, %v2600, %v2745
    %2747 = vst [vmem:[%s495 + $0x34] sm:$0x1] %v2746
    %v2748 = vld [vmem:[%s495 + $0x38] sm:$0xf]
    %v2749 = vsel %vm2706, %v2607, %v2748
    %2750 = vst [vmem:[%s495 + $0x38] sm:$0xf] %v2749
    %v2751 = vld [vmem:[%s495 + $0x3c] sm:$0x1]
    %v2752 = vsel %vm36, %v2608, %v2751
    %2753 = vst [vmem:[%s495 + $0x3c] sm:$0x1] %v2752
    %v2754 = vld [vmem:[%s495 + $0x50] sm:$0xf]
    %v2755 = vsel %vm2706, %v2615, %v2754
    %2756 = vst [vmem:[%s495 + $0x50] sm:$0xf] %v2755
    %v2757 = vld [vmem:[%s495 + $0x54] sm:$0x1]
    %v2758 = vsel %vm36, %v2616, %v2757
    %2759 = vst [vmem:[%s495 + $0x54] sm:$0x1] %v2758
    %v2760 = vld [vmem:[%s495 + $0x58] sm:$0xf]
    %v2761 = vsel %vm2706, %v2623, %v2760
    %2762 = vst [vmem:[%s495 + $0x58] sm:$0xf] %v2761
    %v2763 = vld [vmem:[%s495 + $0x5c] sm:$0x1]
    %v2764 = vsel %vm36, %v2624, %v2763
    %2765 = vst [vmem:[%s495 + $0x5c] sm:$0x1] %v2764
    %v2766 = vld [vmem:[%s495 + $0x60] sm:$0xf]
    %v2767 = vsel %vm2706, %v2631, %v2766
    %2768 = vst [vmem:[%s495 + $0x60] sm:$0xf] %v2767
    %v2769 = vld [vmem:[%s495 + $0x64] sm:$0x1]
    %v2770 = vsel %vm36, %v2632, %v2769
    %2771 = vst [vmem:[%s495 + $0x64] sm:$0x1] %v2770
    %v2772 = vld [vmem:[%s495 + $0x68] sm:$0xf]
    %v2773 = vsel %vm2706, %v2639, %v2772
    %2774 = vst [vmem:[%s495 + $0x68] sm:$0xf] %v2773
    %v2775 = vld [vmem:[%s495 + $0x6c] sm:$0x1]
    %v2776 = vsel %vm36, %v2640, %v2775
    %2777 = vst [vmem:[%s495 + $0x6c] sm:$0x1] %v2776
    %v2778 = vld [vmem:[%s495 + $0x70] sm:$0xf]
    %v2779 = vsel %vm2706, %v2647, %v2778
    %2780 = vst [vmem:[%s495 + $0x70] sm:$0xf] %v2779
    %v2781 = vld [vmem:[%s495 + $0x74] sm:$0x1]
    %v2782 = vsel %vm36, %v2648, %v2781
    %2783 = vst [vmem:[%s495 + $0x74] sm:$0x1] %v2782
    %v2784 = vld [vmem:[%s495 + $0x78] sm:$0xf]
    %v2785 = vsel %vm2706, %v2655, %v2784
    %2786 = vst [vmem:[%s495 + $0x78] sm:$0xf] %v2785
    %v2787 = vld [vmem:[%s495 + $0x7c] sm:$0x1]
    %v2788 = vsel %vm36, %v2656, %v2787
    %2789 = vst [vmem:[%s495 + $0x7c] sm:$0x1] %v2788
    %v2790 = vld [vmem:[%s495 + $0x80] sm:$0xf]
    %v2791 = vsel %vm2706, %v2663, %v2790
    %2792 = vst [vmem:[%s495 + $0x80] sm:$0xf] %v2791
    %v2793 = vld [vmem:[%s495 + $0x84] sm:$0x1]
    %v2794 = vsel %vm36, %v2664, %v2793
    %2795 = vst [vmem:[%s495 + $0x84] sm:$0x1] %v2794
    %v2796 = vld [vmem:[%s495 + $0x88] sm:$0xf]
    %v2797 = vsel %vm2706, %v2671, %v2796
    %2798 = vst [vmem:[%s495 + $0x88] sm:$0xf] %v2797
    %v2799 = vld [vmem:[%s495 + $0x8c] sm:$0x1]
    %v2800 = vsel %vm36, %v2672, %v2799
    %2801 = vst [vmem:[%s495 + $0x8c] sm:$0x1] %v2800
    %v2802 = vld [vmem:[#allocation2] sm:$0xf]
    %v2803 = vld [vmem:[#allocation2 + $0x8] sm:$0xf]
    %v2804 = vld [vmem:[#allocation2 + $0x10] sm:$0xf]
    %v2805 = vld [vmem:[#allocation2 + $0x18] sm:$0xf]
    %v2806 = vld [vmem:[#allocation2 + $0x20] sm:$0xf]
    %v2807 = vld [vmem:[#allocation2 + $0x28] sm:$0xf]
    %v2808 = vld [vmem:[#allocation2 + $0x30] sm:$0xf]
    %v2809 = vld [vmem:[#allocation2 + $0x38] sm:$0xf]
    %v2810 = vld [vmem:[#allocation2 + $0x50] sm:$0xf]
    %v2811 = vld [vmem:[#allocation2 + $0x58] sm:$0xf]
    %v2812 = vld [vmem:[#allocation2 + $0x60] sm:$0xf]
    %v2813 = vld [vmem:[#allocation2 + $0x68] sm:$0xf]
    %v2814 = vld [vmem:[#allocation2 + $0x70] sm:$0xf]
    %v2815 = vld [vmem:[#allocation2 + $0x78] sm:$0xf]
    %v2816 = vld [vmem:[#allocation2 + $0x80] sm:$0xf]
    %v2817 = vld [vmem:[#allocation2 + $0x88] sm:$0xf]
    %v2818 = vld [vmem:[#allocation2 + $0x4] sm:$0x1]
    %v2819 = vld [vmem:[#allocation2 + $0xc] sm:$0x1]
    %v2820 = vld [vmem:[#allocation2 + $0x14] sm:$0x1]
    %v2821 = vld [vmem:[#allocation2 + $0x1c] sm:$0x1]
    %v2822 = vld [vmem:[#allocation2 + $0x24] sm:$0x1]
    %v2823 = vld [vmem:[#allocation2 + $0x2c] sm:$0x1]
    %v2824 = vld [vmem:[#allocation2 + $0x34] sm:$0x1]
    %v2825 = vld [vmem:[#allocation2 + $0x3c] sm:$0x1]
    %v2826 = vld [vmem:[#allocation2 + $0x54] sm:$0x1]
    %v2827 = vld [vmem:[#allocation2 + $0x5c] sm:$0x1]
    %v2828 = vld [vmem:[#allocation2 + $0x64] sm:$0x1]
    %v2829 = vld [vmem:[#allocation2 + $0x6c] sm:$0x1]
    %v2830 = vld [vmem:[#allocation2 + $0x74] sm:$0x1]
    %v2831 = vld [vmem:[#allocation2 + $0x7c] sm:$0x1]
    %v2832 = vld [vmem:[#allocation2 + $0x84] sm:$0x1]
    %v2833 = vld [vmem:[#allocation2 + $0x8c] sm:$0x1]
    %v2834 = vld [vmem:[#allocation2] sm:$0xe]
    %v2835 = vld [vmem:[#allocation2 + $0x8] sm:$0xe]
    %v2836 = vld [vmem:[#allocation2 + $0x10] sm:$0xe]
    %v2837 = vld [vmem:[#allocation2 + $0x18] sm:$0xe]
    %v2838 = vld [vmem:[#allocation2 + $0x20] sm:$0xe]
    %v2839 = vld [vmem:[#allocation2 + $0x28] sm:$0xe]
    %v2840 = vld [vmem:[#allocation2 + $0x30] sm:$0xe]
    %v2841 = vld [vmem:[#allocation2 + $0x38] sm:$0xe]
    %v2842 = vld [vmem:[#allocation2 + $0x50] sm:$0xe]
    %v2843 = vld [vmem:[#allocation2 + $0x58] sm:$0xe]
    %v2844 = vld [vmem:[#allocation2 + $0x60] sm:$0xe]
    %v2845 = vld [vmem:[#allocation2 + $0x68] sm:$0xe]
    %v2846 = vld [vmem:[#allocation2 + $0x70] sm:$0xe]
    %v2847 = vld [vmem:[#allocation2 + $0x78] sm:$0xe]
    %v2848 = vld [vmem:[#allocation2 + $0x80] sm:$0xe]
    %v2849 = vld [vmem:[#allocation2 + $0x88] sm:$0xe]
    %v2850 = vld [vmem:[%s495] sm:$0xf]
    %v2851 = vld [vmem:[%s495 + $0x8] sm:$0xf]
    %v2852 = vld [vmem:[%s495 + $0x10] sm:$0xf]
    %v2853 = vld [vmem:[%s495 + $0x18] sm:$0xf]
    %v2854 = vld [vmem:[%s495 + $0x20] sm:$0xf]
    %v2855 = vld [vmem:[%s495 + $0x28] sm:$0xf]
    %v2856 = vld [vmem:[%s495 + $0x30] sm:$0xf]
    %v2857 = vld [vmem:[%s495 + $0x38] sm:$0xf]
    %v2858 = vld [vmem:[%s495 + $0x50] sm:$0xf]
    %v2859 = vld [vmem:[%s495 + $0x58] sm:$0xf]
    %v2860 = vld [vmem:[%s495 + $0x60] sm:$0xf]
    %v2861 = vld [vmem:[%s495 + $0x68] sm:$0xf]
    %v2862 = vld [vmem:[%s495 + $0x70] sm:$0xf]
    %v2863 = vld [vmem:[%s495 + $0x78] sm:$0xf]
    %v2864 = vld [vmem:[%s495 + $0x80] sm:$0xf]
    %v2865 = vld [vmem:[%s495 + $0x88] sm:$0xf]
    %v2866 = vld [vmem:[%s495 + $0x4] sm:$0x1]
    %v2867 = vld [vmem:[%s495 + $0xc] sm:$0x1]
    %v2868 = vld [vmem:[%s495 + $0x14] sm:$0x1]
    %v2869 = vld [vmem:[%s495 + $0x1c] sm:$0x1]
    %v2870 = vld [vmem:[%s495 + $0x24] sm:$0x1]
    %v2871 = vld [vmem:[%s495 + $0x2c] sm:$0x1]
    %v2872 = vld [vmem:[%s495 + $0x34] sm:$0x1]
    %v2873 = vld [vmem:[%s495 + $0x3c] sm:$0x1]
    %v2874 = vld [vmem:[%s495 + $0x54] sm:$0x1]
    %v2875 = vld [vmem:[%s495 + $0x5c] sm:$0x1]
    %v2876 = vld [vmem:[%s495 + $0x64] sm:$0x1]
    %v2877 = vld [vmem:[%s495 + $0x6c] sm:$0x1]
    %v2878 = vld [vmem:[%s495 + $0x74] sm:$0x1]
    %v2879 = vld [vmem:[%s495 + $0x7c] sm:$0x1]
    %v2880 = vld [vmem:[%s495 + $0x84] sm:$0x1]
    %v2881 = vld [vmem:[%s495 + $0x8c] sm:$0x1]
    %v2882 = vld [vmem:[%s495] sm:$0xe]
    %v2883 = vld [vmem:[%s495 + $0x8] sm:$0xe]
    %v2884 = vld [vmem:[%s495 + $0x10] sm:$0xe]
    %v2885 = vld [vmem:[%s495 + $0x18] sm:$0xe]
    %v2886 = vld [vmem:[%s495 + $0x20] sm:$0xe]
    %v2887 = vld [vmem:[%s495 + $0x28] sm:$0xe]
    %v2888 = vld [vmem:[%s495 + $0x30] sm:$0xe]
    %v2889 = vld [vmem:[%s495 + $0x38] sm:$0xe]
    %v2890 = vld [vmem:[%s495 + $0x50] sm:$0xe]
    %v2891 = vld [vmem:[%s495 + $0x58] sm:$0xe]
    %v2892 = vld [vmem:[%s495 + $0x60] sm:$0xe]
    %v2893 = vld [vmem:[%s495 + $0x68] sm:$0xe]
    %v2894 = vld [vmem:[%s495 + $0x70] sm:$0xe]
    %v2895 = vld [vmem:[%s495 + $0x78] sm:$0xe]
    %v2896 = vld [vmem:[%s495 + $0x80] sm:$0xe]
    %v2897 = vld [vmem:[%s495 + $0x88] sm:$0xe]
    %v2898 = vld [vmem:[%s692] sm:$0xf]
    %v2899 = vld [vmem:[%s692 + $0x8] sm:$0xf]
    %v2900 = vld [vmem:[%s692 + $0x10] sm:$0xf]
    %v2901 = vld [vmem:[%s692 + $0x18] sm:$0xf]
    %v2902 = vld [vmem:[%s692 + $0x20] sm:$0xf]
    %v2903 = vld [vmem:[%s692 + $0x28] sm:$0xf]
    %v2904 = vld [vmem:[%s692 + $0x30] sm:$0xf]
    %v2905 = vld [vmem:[%s692 + $0x38] sm:$0xf]
    %v2906 = vld [vmem:[%s692 + $0x50] sm:$0xf]
    %v2907 = vld [vmem:[%s692 + $0x58] sm:$0xf]
    %v2908 = vld [vmem:[%s692 + $0x60] sm:$0xf]
    %v2909 = vld [vmem:[%s692 + $0x68] sm:$0xf]
    %v2910 = vld [vmem:[%s692 + $0x70] sm:$0xf]
    %v2911 = vld [vmem:[%s692 + $0x78] sm:$0xf]
    %v2912 = vld [vmem:[%s692 + $0x80] sm:$0xf]
    %v2913 = vld [vmem:[%s692 + $0x88] sm:$0xf]
    %v2914 = vld [vmem:[%s692 + $0x4] sm:$0x1]
    %v2915 = vld [vmem:[%s692 + $0xc] sm:$0x1]
    %v2916 = vld [vmem:[%s692 + $0x14] sm:$0x1]
    %v2917 = vld [vmem:[%s692 + $0x1c] sm:$0x1]
    %v2918 = vld [vmem:[%s692 + $0x24] sm:$0x1]
    %v2919 = vld [vmem:[%s692 + $0x2c] sm:$0x1]
    %v2920 = vld [vmem:[%s692 + $0x34] sm:$0x1]
    %v2921 = vld [vmem:[%s692 + $0x3c] sm:$0x1]
    %v2922 = vld [vmem:[%s692 + $0x54] sm:$0x1]
    %v2923 = vld [vmem:[%s692 + $0x5c] sm:$0x1]
    %v2924 = vld [vmem:[%s692 + $0x64] sm:$0x1]
    %v2925 = vld [vmem:[%s692 + $0x6c] sm:$0x1]
    %v2926 = vld [vmem:[%s692 + $0x74] sm:$0x1]
    %v2927 = vld [vmem:[%s692 + $0x7c] sm:$0x1]
    %v2928 = vld [vmem:[%s692 + $0x84] sm:$0x1]
    %v2929 = vld [vmem:[%s692 + $0x8c] sm:$0x1]
    %v2930 = vld [vmem:[%s692] sm:$0xe]
    %v2931 = vld [vmem:[%s692 + $0x8] sm:$0xe]
    %v2932 = vld [vmem:[%s692 + $0x10] sm:$0xe]
    %v2933 = vld [vmem:[%s692 + $0x18] sm:$0xe]
    %v2934 = vld [vmem:[%s692 + $0x20] sm:$0xe]
    %v2935 = vld [vmem:[%s692 + $0x28] sm:$0xe]
    %v2936 = vld [vmem:[%s692 + $0x30] sm:$0xe]
    %v2937 = vld [vmem:[%s692 + $0x38] sm:$0xe]
    %v2938 = vld [vmem:[%s692 + $0x50] sm:$0xe]
    %v2939 = vld [vmem:[%s692 + $0x58] sm:$0xe]
    %v2940 = vld [vmem:[%s692 + $0x60] sm:$0xe]
    %v2941 = vld [vmem:[%s692 + $0x68] sm:$0xe]
    %v2942 = vld [vmem:[%s692 + $0x70] sm:$0xe]
    %v2943 = vld [vmem:[%s692 + $0x78] sm:$0xe]
    %v2944 = vld [vmem:[%s692 + $0x80] sm:$0xe]
    %v2945 = vld [vmem:[%s692 + $0x88] sm:$0xe]
    %v2978 = vunpack.c.l.b16 %v2802
    %v2979 = vunpack.c.l.b16 %v2818
    %v2980 = vunpack.c.l.b16 %v2803
    %v2981 = vunpack.c.l.b16 %v2819
    %v2982 = vunpack.c.l.b16 %v2804
    %v2983 = vunpack.c.l.b16 %v2820
    %v2984 = vunpack.c.l.b16 %v2805
    %v2985 = vunpack.c.l.b16 %v2821
    %v2986 = vunpack.c.l.b16 %v2806
    %v2987 = vunpack.c.l.b16 %v2822
    %v2988 = vunpack.c.l.b16 %v2807
    %v2989 = vunpack.c.l.b16 %v2823
    %v2990 = vunpack.c.l.b16 %v2808
    %v2991 = vunpack.c.l.b16 %v2824
    %v2992 = vunpack.c.l.b16 %v2809
    %v2993 = vunpack.c.l.b16 %v2825
    %v2994 = vunpack.c.l.b16 %v2810
    %v2995 = vunpack.c.l.b16 %v2826
    %v2996 = vunpack.c.l.b16 %v2811
    %v2997 = vunpack.c.l.b16 %v2827
    %v2998 = vunpack.c.l.b16 %v2812
    %v2999 = vunpack.c.l.b16 %v2828
    %v3000 = vunpack.c.l.b16 %v2813
    %v3001 = vunpack.c.l.b16 %v2829
    %v3002 = vunpack.c.l.b16 %v2814
    %v3003 = vunpack.c.l.b16 %v2830
    %v3004 = vunpack.c.l.b16 %v2815
    %v3005 = vunpack.c.l.b16 %v2831
    %v3006 = vunpack.c.l.b16 %v2816
    %v3007 = vunpack.c.l.b16 %v2832
    %v3008 = vunpack.c.l.b16 %v2817
    %v3009 = vunpack.c.l.b16 %v2833
    %v3010 = vpack.c.b16 %v2979, %v2978
    %v3011 = vpack.c.b16 %v2981, %v2980
    %v3012 = vpack.c.b16 %v2983, %v2982
    %v3013 = vpack.c.b16 %v2985, %v2984
    %v3014 = vpack.c.b16 %v2987, %v2986
    %v3015 = vpack.c.b16 %v2989, %v2988
    %v3016 = vpack.c.b16 %v2991, %v2990
    %v3017 = vpack.c.b16 %v2993, %v2992
    %v3018 = vpack.c.b16 %v2995, %v2994
    %v3019 = vpack.c.b16 %v2997, %v2996
    %v3020 = vpack.c.b16 %v2999, %v2998
    %v3021 = vpack.c.b16 %v3001, %v3000
    %v3022 = vpack.c.b16 %v3003, %v3002
    %v3023 = vpack.c.b16 %v3005, %v3004
    %v3024 = vpack.c.b16 %v3007, %v3006
    %v3025 = vpack.c.b16 %v3009, %v3008
    %v3027 = vshrl.u32 %v3010, 16
    %v3029 = vshll.u32 %v3010, 16
    %v3031 = vrot.slane %v3029, 1
    %v3032 = vor.u32 %v3027, %v3031
    %v3034 = vshrl.u32 %v3011, 16
    %v3036 = vshll.u32 %v3011, 16
    %v3038 = vrot.slane %v3036, 1
    %v3039 = vor.u32 %v3034, %v3038
    %v3041 = vshrl.u32 %v3012, 16
    %v3043 = vshll.u32 %v3012, 16
    %v3045 = vrot.slane %v3043, 1
    %v3046 = vor.u32 %v3041, %v3045
    %v3048 = vshrl.u32 %v3013, 16
    %v3050 = vshll.u32 %v3013, 16
    %v3052 = vrot.slane %v3050, 1
    %v3053 = vor.u32 %v3048, %v3052
    %v3055 = vshrl.u32 %v3014, 16
    %v3057 = vshll.u32 %v3014, 16
    %v3059 = vrot.slane %v3057, 1
    %v3060 = vor.u32 %v3055, %v3059
    %v3062 = vshrl.u32 %v3015, 16
    %v3064 = vshll.u32 %v3015, 16
    %v3066 = vrot.slane %v3064, 1
    %v3067 = vor.u32 %v3062, %v3066
    %v3069 = vshrl.u32 %v3016, 16
    %v3071 = vshll.u32 %v3016, 16
    %v3073 = vrot.slane %v3071, 1
    %v3074 = vor.u32 %v3069, %v3073
    %v3076 = vshrl.u32 %v3017, 16
    %v3078 = vshll.u32 %v3017, 16
    %v3080 = vrot.slane %v3078, 1
    %v3081 = vor.u32 %v3076, %v3080
    %v3083 = vshrl.u32 %v3018, 16
    %v3085 = vshll.u32 %v3018, 16
    %v3087 = vrot.slane %v3085, 1
    %v3088 = vor.u32 %v3083, %v3087
    %v3090 = vshrl.u32 %v3019, 16
    %v3092 = vshll.u32 %v3019, 16
    %v3094 = vrot.slane %v3092, 1
    %v3095 = vor.u32 %v3090, %v3094
    %v3097 = vshrl.u32 %v3020, 16
    %v3099 = vshll.u32 %v3020, 16
    %v3101 = vrot.slane %v3099, 1
    %v3102 = vor.u32 %v3097, %v3101
    %v3104 = vshrl.u32 %v3021, 16
    %v3106 = vshll.u32 %v3021, 16
    %v3108 = vrot.slane %v3106, 1
    %v3109 = vor.u32 %v3104, %v3108
    %v3111 = vshrl.u32 %v3022, 16
    %v3113 = vshll.u32 %v3022, 16
    %v3115 = vrot.slane %v3113, 1
    %v3116 = vor.u32 %v3111, %v3115
    %v3118 = vshrl.u32 %v3023, 16
    %v3120 = vshll.u32 %v3023, 16
    %v3122 = vrot.slane %v3120, 1
    %v3123 = vor.u32 %v3118, %v3122
    %v3125 = vshrl.u32 %v3024, 16
    %v3127 = vshll.u32 %v3024, 16
    %v3129 = vrot.slane %v3127, 1
    %v3130 = vor.u32 %v3125, %v3129
    %v3132 = vshrl.u32 %v3025, 16
    %v3134 = vshll.u32 %v3025, 16
    %v3136 = vrot.slane %v3134, 1
    %v3137 = vor.u32 %v3132, %v3136
    %3138 = vrot.lane.b32.xlu0 %v3032, 32
    %v3139 = vpop.permute.xlu0 %3138
    %3140 = vrot.lane.b32.xlu0 %v3039, 32
    %v3141 = vpop.permute.xlu0 %3140
    %3142 = vrot.lane.b32.xlu0 %v3046, 32
    %v3143 = vpop.permute.xlu0 %3142
    %3144 = vrot.lane.b32.xlu0 %v3053, 32
    %v3145 = vpop.permute.xlu0 %3144
    %3146 = vrot.lane.b32.xlu0 %v3060, 32
    %v3147 = vpop.permute.xlu0 %3146
    %3148 = vrot.lane.b32.xlu0 %v3067, 32
    %v3149 = vpop.permute.xlu0 %3148
    %3150 = vrot.lane.b32.xlu0 %v3074, 32
    %v3151 = vpop.permute.xlu0 %3150
    %3152 = vrot.lane.b32.xlu0 %v3081, 32
    %v3153 = vpop.permute.xlu0 %3152
    %3154 = vrot.lane.b32.xlu0 %v3088, 32
    %v3155 = vpop.permute.xlu0 %3154
    %3156 = vrot.lane.b32.xlu0 %v3095, 32
    %v3157 = vpop.permute.xlu0 %3156
    %3158 = vrot.lane.b32.xlu0 %v3102, 32
    %v3159 = vpop.permute.xlu0 %3158
    %3160 = vrot.lane.b32.xlu0 %v3109, 32
    %v3161 = vpop.permute.xlu0 %3160
    %3162 = vrot.lane.b32.xlu0 %v3116, 32
    %v3163 = vpop.permute.xlu0 %3162
    %3164 = vrot.lane.b32.xlu0 %v3123, 32
    %v3165 = vpop.permute.xlu0 %3164
    %3166 = vrot.lane.b32.xlu0 %v3130, 32
    %v3167 = vpop.permute.xlu0 %3166
    %3168 = vrot.lane.b32.xlu0 %v3137, 32
    %v3169 = vpop.permute.xlu0 %3168
    %v3186 = vunpack.c.l.b16 %v2834
    %v3187 = vunpack.c.l.b16 %v2835
    %v3188 = vunpack.c.l.b16 %v2836
    %v3189 = vunpack.c.l.b16 %v2837
    %v3190 = vunpack.c.l.b16 %v2838
    %v3191 = vunpack.c.l.b16 %v2839
    %v3192 = vunpack.c.l.b16 %v2840
    %v3193 = vunpack.c.l.b16 %v2841
    %v3194 = vunpack.c.l.b16 %v2842
    %v3195 = vunpack.c.l.b16 %v2843
    %v3196 = vunpack.c.l.b16 %v2844
    %v3197 = vunpack.c.l.b16 %v2845
    %v3198 = vunpack.c.l.b16 %v2846
    %v3199 = vunpack.c.l.b16 %v2847
    %v3200 = vunpack.c.l.b16 %v2848
    %v3201 = vunpack.c.l.b16 %v2849
    %v3202 = vpack.c.b16 %v2979, %v3186
    %v3203 = vpack.c.b16 %v2981, %v3187
    %v3204 = vpack.c.b16 %v2983, %v3188
    %v3205 = vpack.c.b16 %v2985, %v3189
    %v3206 = vpack.c.b16 %v2987, %v3190
    %v3207 = vpack.c.b16 %v2989, %v3191
    %v3208 = vpack.c.b16 %v2991, %v3192
    %v3209 = vpack.c.b16 %v2993, %v3193
    %v3210 = vpack.c.b16 %v2995, %v3194
    %v3211 = vpack.c.b16 %v2997, %v3195
    %v3212 = vpack.c.b16 %v2999, %v3196
    %v3213 = vpack.c.b16 %v3001, %v3197
    %v3214 = vpack.c.b16 %v3003, %v3198
    %v3215 = vpack.c.b16 %v3005, %v3199
    %v3216 = vpack.c.b16 %v3007, %v3200
    %v3217 = vpack.c.b16 %v3009, %v3201
    %v3218 = vrot.slane %v3202, 1
    %v3219 = vrot.slane %v3203, 1
    %v3220 = vrot.slane %v3204, 1
    %v3221 = vrot.slane %v3205, 1
    %v3222 = vrot.slane %v3206, 1
    %v3223 = vrot.slane %v3207, 1
    %v3224 = vrot.slane %v3208, 1
    %v3225 = vrot.slane %v3209, 1
    %v3226 = vrot.slane %v3210, 1
    %v3227 = vrot.slane %v3211, 1
    %v3228 = vrot.slane %v3212, 1
    %v3229 = vrot.slane %v3213, 1
    %v3230 = vrot.slane %v3214, 1
    %v3231 = vrot.slane %v3215, 1
    %v3232 = vrot.slane %v3216, 1
    %v3233 = vrot.slane %v3217, 1
    %3234 = vrot.lane.b32.xlu0 %v3218, 64
    %v3235 = vpop.permute.xlu0 %3234
    %3236 = vrot.lane.b32.xlu0 %v3219, 64
    %v3237 = vpop.permute.xlu0 %3236
    %3238 = vrot.lane.b32.xlu0 %v3220, 64
    %v3239 = vpop.permute.xlu0 %3238
    %3240 = vrot.lane.b32.xlu0 %v3221, 64
    %v3241 = vpop.permute.xlu0 %3240
    %3242 = vrot.lane.b32.xlu0 %v3222, 64
    %v3243 = vpop.permute.xlu0 %3242
    %3244 = vrot.lane.b32.xlu0 %v3223, 64
    %v3245 = vpop.permute.xlu0 %3244
    %3246 = vrot.lane.b32.xlu0 %v3224, 64
    %v3247 = vpop.permute.xlu0 %3246
    %3248 = vrot.lane.b32.xlu0 %v3225, 64
    %v3249 = vpop.permute.xlu0 %3248
    %3250 = vrot.lane.b32.xlu0 %v3226, 64
    %v3251 = vpop.permute.xlu0 %3250
    %3252 = vrot.lane.b32.xlu0 %v3227, 64
    %v3253 = vpop.permute.xlu0 %3252
    %3254 = vrot.lane.b32.xlu0 %v3228, 64
    %v3255 = vpop.permute.xlu0 %3254
    %3256 = vrot.lane.b32.xlu0 %v3229, 64
    %v3257 = vpop.permute.xlu0 %3256
    %3258 = vrot.lane.b32.xlu0 %v3230, 64
    %v3259 = vpop.permute.xlu0 %3258
    %3260 = vrot.lane.b32.xlu0 %v3231, 64
    %v3261 = vpop.permute.xlu0 %3260
    %3262 = vrot.lane.b32.xlu0 %v3232, 64
    %v3263 = vpop.permute.xlu0 %3262
    %3264 = vrot.lane.b32.xlu0 %v3233, 64
    %v3265 = vpop.permute.xlu0 %3264
    %v3282 = vunpack.c.l.b16 %v2850
    %v3283 = vunpack.c.l.b16 %v2851
    %v3284 = vunpack.c.l.b16 %v2852
    %v3285 = vunpack.c.l.b16 %v2853
    %v3286 = vunpack.c.l.b16 %v2854
    %v3287 = vunpack.c.l.b16 %v2855
    %v3288 = vunpack.c.l.b16 %v2856
    %v3289 = vunpack.c.l.b16 %v2857
    %v3290 = vunpack.c.l.b16 %v2858
    %v3291 = vunpack.c.l.b16 %v2859
    %v3292 = vunpack.c.l.b16 %v2860
    %v3293 = vunpack.c.l.b16 %v2861
    %v3294 = vunpack.c.l.b16 %v2862
    %v3295 = vunpack.c.l.b16 %v2863
    %v3296 = vunpack.c.l.b16 %v2864
    %v3297 = vunpack.c.l.b16 %v2865
    %v3298 = vpack.c.b16 %v3282, %v3282
    %v3299 = vpack.c.b16 %v3283, %v3283
    %v3300 = vpack.c.b16 %v3284, %v3284
    %v3301 = vpack.c.b16 %v3285, %v3285
    %v3302 = vpack.c.b16 %v3286, %v3286
    %v3303 = vpack.c.b16 %v3287, %v3287
    %v3304 = vpack.c.b16 %v3288, %v3288
    %v3305 = vpack.c.b16 %v3289, %v3289
    %v3306 = vpack.c.b16 %v3290, %v3290
    %v3307 = vpack.c.b16 %v3291, %v3291
    %v3308 = vpack.c.b16 %v3292, %v3292
    %v3309 = vpack.c.b16 %v3293, %v3293
    %v3310 = vpack.c.b16 %v3294, %v3294
    %v3311 = vpack.c.b16 %v3295, %v3295
    %v3312 = vpack.c.b16 %v3296, %v3296
    %v3313 = vpack.c.b16 %v3297, %v3297
    %3314 = vrot.lane.b32.xlu0 %v3298, 96
    %v3315 = vpop.permute.xlu0 %3314
    %3316 = vrot.lane.b32.xlu0 %v3299, 96
    %v3317 = vpop.permute.xlu0 %3316
    %3318 = vrot.lane.b32.xlu0 %v3300, 96
    %v3319 = vpop.permute.xlu0 %3318
    %3320 = vrot.lane.b32.xlu0 %v3301, 96
    %v3321 = vpop.permute.xlu0 %3320
    %3322 = vrot.lane.b32.xlu0 %v3302, 96
    %v3323 = vpop.permute.xlu0 %3322
    %3324 = vrot.lane.b32.xlu0 %v3303, 96
    %v3325 = vpop.permute.xlu0 %3324
    %3326 = vrot.lane.b32.xlu0 %v3304, 96
    %v3327 = vpop.permute.xlu0 %3326
    %3328 = vrot.lane.b32.xlu0 %v3305, 96
    %v3329 = vpop.permute.xlu0 %3328
    %3330 = vrot.lane.b32.xlu0 %v3306, 96
    %v3331 = vpop.permute.xlu0 %3330
    %3332 = vrot.lane.b32.xlu0 %v3307, 96
    %v3333 = vpop.permute.xlu0 %3332
    %3334 = vrot.lane.b32.xlu0 %v3308, 96
    %v3335 = vpop.permute.xlu0 %3334
    %3336 = vrot.lane.b32.xlu0 %v3309, 96
    %v3337 = vpop.permute.xlu0 %3336
    %3338 = vrot.lane.b32.xlu0 %v3310, 96
    %v3339 = vpop.permute.xlu0 %3338
    %3340 = vrot.lane.b32.xlu0 %v3311, 96
    %v3341 = vpop.permute.xlu0 %3340
    %3342 = vrot.lane.b32.xlu0 %v3312, 96
    %v3343 = vpop.permute.xlu0 %3342
    %3344 = vrot.lane.b32.xlu0 %v3313, 96
    %v3345 = vpop.permute.xlu0 %3344
    %v3362 = vunpack.c.l.b16 %v2866
    %v3363 = vunpack.c.l.b16 %v2867
    %v3364 = vunpack.c.l.b16 %v2868
    %v3365 = vunpack.c.l.b16 %v2869
    %v3366 = vunpack.c.l.b16 %v2870
    %v3367 = vunpack.c.l.b16 %v2871
    %v3368 = vunpack.c.l.b16 %v2872
    %v3369 = vunpack.c.l.b16 %v2873
    %v3370 = vunpack.c.l.b16 %v2874
    %v3371 = vunpack.c.l.b16 %v2875
    %v3372 = vunpack.c.l.b16 %v2876
    %v3373 = vunpack.c.l.b16 %v2877
    %v3374 = vunpack.c.l.b16 %v2878
    %v3375 = vunpack.c.l.b16 %v2879
    %v3376 = vunpack.c.l.b16 %v2880
    %v3377 = vunpack.c.l.b16 %v2881
    %v3378 = vpack.c.b16 %v3362, %v3282
    %v3379 = vpack.c.b16 %v3363, %v3283
    %v3380 = vpack.c.b16 %v3364, %v3284
    %v3381 = vpack.c.b16 %v3365, %v3285
    %v3382 = vpack.c.b16 %v3366, %v3286
    %v3383 = vpack.c.b16 %v3367, %v3287
    %v3384 = vpack.c.b16 %v3368, %v3288
    %v3385 = vpack.c.b16 %v3369, %v3289
    %v3386 = vpack.c.b16 %v3370, %v3290
    %v3387 = vpack.c.b16 %v3371, %v3291
    %v3388 = vpack.c.b16 %v3372, %v3292
    %v3389 = vpack.c.b16 %v3373, %v3293
    %v3390 = vpack.c.b16 %v3374, %v3294
    %v3391 = vpack.c.b16 %v3375, %v3295
    %v3392 = vpack.c.b16 %v3376, %v3296
    %v3393 = vpack.c.b16 %v3377, %v3297
    %v3395 = vshrl.u32 %v3378, 16
    %v3397 = vshll.u32 %v3378, 16
    %v3399 = vrot.slane %v3397, 1
    %v3400 = vor.u32 %v3395, %v3399
    %v3402 = vshrl.u32 %v3379, 16
    %v3404 = vshll.u32 %v3379, 16
    %v3406 = vrot.slane %v3404, 1
    %v3407 = vor.u32 %v3402, %v3406
    %v3409 = vshrl.u32 %v3380, 16
    %v3411 = vshll.u32 %v3380, 16
    %v3413 = vrot.slane %v3411, 1
    %v3414 = vor.u32 %v3409, %v3413
    %v3416 = vshrl.u32 %v3381, 16
    %v3418 = vshll.u32 %v3381, 16
    %v3420 = vrot.slane %v3418, 1
    %v3421 = vor.u32 %v3416, %v3420
    %v3423 = vshrl.u32 %v3382, 16
    %v3425 = vshll.u32 %v3382, 16
    %v3427 = vrot.slane %v3425, 1
    %v3428 = vor.u32 %v3423, %v3427
    %v3430 = vshrl.u32 %v3383, 16
    %v3432 = vshll.u32 %v3383, 16
    %v3434 = vrot.slane %v3432, 1
    %v3435 = vor.u32 %v3430, %v3434
    %v3437 = vshrl.u32 %v3384, 16
    %v3439 = vshll.u32 %v3384, 16
    %v3441 = vrot.slane %v3439, 1
    %v3442 = vor.u32 %v3437, %v3441
    %v3444 = vshrl.u32 %v3385, 16
    %v3446 = vshll.u32 %v3385, 16
    %v3448 = vrot.slane %v3446, 1
    %v3449 = vor.u32 %v3444, %v3448
    %v3451 = vshrl.u32 %v3386, 16
    %v3453 = vshll.u32 %v3386, 16
    %v3455 = vrot.slane %v3453, 1
    %v3456 = vor.u32 %v3451, %v3455
    %v3458 = vshrl.u32 %v3387, 16
    %v3460 = vshll.u32 %v3387, 16
    %v3462 = vrot.slane %v3460, 1
    %v3463 = vor.u32 %v3458, %v3462
    %v3465 = vshrl.u32 %v3388, 16
    %v3467 = vshll.u32 %v3388, 16
    %v3469 = vrot.slane %v3467, 1
    %v3470 = vor.u32 %v3465, %v3469
    %v3472 = vshrl.u32 %v3389, 16
    %v3474 = vshll.u32 %v3389, 16
    %v3476 = vrot.slane %v3474, 1
    %v3477 = vor.u32 %v3472, %v3476
    %v3479 = vshrl.u32 %v3390, 16
    %v3481 = vshll.u32 %v3390, 16
    %v3483 = vrot.slane %v3481, 1
    %v3484 = vor.u32 %v3479, %v3483
    %v3486 = vshrl.u32 %v3391, 16
    %v3488 = vshll.u32 %v3391, 16
    %v3490 = vrot.slane %v3488, 1
    %v3491 = vor.u32 %v3486, %v3490
    %v3493 = vshrl.u32 %v3392, 16
    %v3495 = vshll.u32 %v3392, 16
    %v3497 = vrot.slane %v3495, 1
    %v3498 = vor.u32 %v3493, %v3497
    %v3500 = vshrl.u32 %v3393, 16
    %v3502 = vshll.u32 %v3393, 16
    %v3504 = vrot.slane %v3502, 1
    %v3505 = vor.u32 %v3500, %v3504
    %v3522 = vunpack.c.l.b16 %v2882
    %v3523 = vunpack.c.l.b16 %v2883
    %v3524 = vunpack.c.l.b16 %v2884
    %v3525 = vunpack.c.l.b16 %v2885
    %v3526 = vunpack.c.l.b16 %v2886
    %v3527 = vunpack.c.l.b16 %v2887
    %v3528 = vunpack.c.l.b16 %v2888
    %v3529 = vunpack.c.l.b16 %v2889
    %v3530 = vunpack.c.l.b16 %v2890
    %v3531 = vunpack.c.l.b16 %v2891
    %v3532 = vunpack.c.l.b16 %v2892
    %v3533 = vunpack.c.l.b16 %v2893
    %v3534 = vunpack.c.l.b16 %v2894
    %v3535 = vunpack.c.l.b16 %v2895
    %v3536 = vunpack.c.l.b16 %v2896
    %v3537 = vunpack.c.l.b16 %v2897
    %v3538 = vpack.c.b16 %v3362, %v3522
    %v3539 = vpack.c.b16 %v3363, %v3523
    %v3540 = vpack.c.b16 %v3364, %v3524
    %v3541 = vpack.c.b16 %v3365, %v3525
    %v3542 = vpack.c.b16 %v3366, %v3526
    %v3543 = vpack.c.b16 %v3367, %v3527
    %v3544 = vpack.c.b16 %v3368, %v3528
    %v3545 = vpack.c.b16 %v3369, %v3529
    %v3546 = vpack.c.b16 %v3370, %v3530
    %v3547 = vpack.c.b16 %v3371, %v3531
    %v3548 = vpack.c.b16 %v3372, %v3532
    %v3549 = vpack.c.b16 %v3373, %v3533
    %v3550 = vpack.c.b16 %v3374, %v3534
    %v3551 = vpack.c.b16 %v3375, %v3535
    %v3552 = vpack.c.b16 %v3376, %v3536
    %v3553 = vpack.c.b16 %v3377, %v3537
    %v3554 = vrot.slane %v3538, 1
    %v3555 = vrot.slane %v3539, 1
    %v3556 = vrot.slane %v3540, 1
    %v3557 = vrot.slane %v3541, 1
    %v3558 = vrot.slane %v3542, 1
    %v3559 = vrot.slane %v3543, 1
    %v3560 = vrot.slane %v3544, 1
    %v3561 = vrot.slane %v3545, 1
    %v3562 = vrot.slane %v3546, 1
    %v3563 = vrot.slane %v3547, 1
    %v3564 = vrot.slane %v3548, 1
    %v3565 = vrot.slane %v3549, 1
    %v3566 = vrot.slane %v3550, 1
    %v3567 = vrot.slane %v3551, 1
    %v3568 = vrot.slane %v3552, 1
    %v3569 = vrot.slane %v3553, 1
    %3570 = vrot.lane.b32.xlu0 %v3554, 32
    %v3571 = vpop.permute.xlu0 %3570
    %3572 = vrot.lane.b32.xlu0 %v3555, 32
    %v3573 = vpop.permute.xlu0 %3572
    %3574 = vrot.lane.b32.xlu0 %v3556, 32
    %v3575 = vpop.permute.xlu0 %3574
    %3576 = vrot.lane.b32.xlu0 %v3557, 32
    %v3577 = vpop.permute.xlu0 %3576
    %3578 = vrot.lane.b32.xlu0 %v3558, 32
    %v3579 = vpop.permute.xlu0 %3578
    %3580 = vrot.lane.b32.xlu0 %v3559, 32
    %v3581 = vpop.permute.xlu0 %3580
    %3582 = vrot.lane.b32.xlu0 %v3560, 32
    %v3583 = vpop.permute.xlu0 %3582
    %3584 = vrot.lane.b32.xlu0 %v3561, 32
    %v3585 = vpop.permute.xlu0 %3584
    %3586 = vrot.lane.b32.xlu0 %v3562, 32
    %v3587 = vpop.permute.xlu0 %3586
    %3588 = vrot.lane.b32.xlu0 %v3563, 32
    %v3589 = vpop.permute.xlu0 %3588
    %3590 = vrot.lane.b32.xlu0 %v3564, 32
    %v3591 = vpop.permute.xlu0 %3590
    %3592 = vrot.lane.b32.xlu0 %v3565, 32
    %v3593 = vpop.permute.xlu0 %3592
    %3594 = vrot.lane.b32.xlu0 %v3566, 32
    %v3595 = vpop.permute.xlu0 %3594
    %3596 = vrot.lane.b32.xlu0 %v3567, 32
    %v3597 = vpop.permute.xlu0 %3596
    %3598 = vrot.lane.b32.xlu0 %v3568, 32
    %v3599 = vpop.permute.xlu0 %3598
    %3600 = vrot.lane.b32.xlu0 %v3569, 32
    %v3601 = vpop.permute.xlu0 %3600
    %v3618 = vunpack.c.l.b16 %v2898
    %v3619 = vunpack.c.l.b16 %v2899
    %v3620 = vunpack.c.l.b16 %v2900
    %v3621 = vunpack.c.l.b16 %v2901
    %v3622 = vunpack.c.l.b16 %v2902
    %v3623 = vunpack.c.l.b16 %v2903
    %v3624 = vunpack.c.l.b16 %v2904
    %v3625 = vunpack.c.l.b16 %v2905
    %v3626 = vunpack.c.l.b16 %v2906
    %v3627 = vunpack.c.l.b16 %v2907
    %v3628 = vunpack.c.l.b16 %v2908
    %v3629 = vunpack.c.l.b16 %v2909
    %v3630 = vunpack.c.l.b16 %v2910
    %v3631 = vunpack.c.l.b16 %v2911
    %v3632 = vunpack.c.l.b16 %v2912
    %v3633 = vunpack.c.l.b16 %v2913
    %v3634 = vpack.c.b16 %v3618, %v3618
    %v3635 = vpack.c.b16 %v3619, %v3619
    %v3636 = vpack.c.b16 %v3620, %v3620
    %v3637 = vpack.c.b16 %v3621, %v3621
    %v3638 = vpack.c.b16 %v3622, %v3622
    %v3639 = vpack.c.b16 %v3623, %v3623
    %v3640 = vpack.c.b16 %v3624, %v3624
    %v3641 = vpack.c.b16 %v3625, %v3625
    %v3642 = vpack.c.b16 %v3626, %v3626
    %v3643 = vpack.c.b16 %v3627, %v3627
    %v3644 = vpack.c.b16 %v3628, %v3628
    %v3645 = vpack.c.b16 %v3629, %v3629
    %v3646 = vpack.c.b16 %v3630, %v3630
    %v3647 = vpack.c.b16 %v3631, %v3631
    %v3648 = vpack.c.b16 %v3632, %v3632
    %v3649 = vpack.c.b16 %v3633, %v3633
    %3650 = vrot.lane.b32.xlu0 %v3634, 64
    %v3651 = vpop.permute.xlu0 %3650
    %3652 = vrot.lane.b32.xlu0 %v3635, 64
    %v3653 = vpop.permute.xlu0 %3652
    %3654 = vrot.lane.b32.xlu0 %v3636, 64
    %v3655 = vpop.permute.xlu0 %3654
    %3656 = vrot.lane.b32.xlu0 %v3637, 64
    %v3657 = vpop.permute.xlu0 %3656
    %3658 = vrot.lane.b32.xlu0 %v3638, 64
    %v3659 = vpop.permute.xlu0 %3658
    %3660 = vrot.lane.b32.xlu0 %v3639, 64
    %v3661 = vpop.permute.xlu0 %3660
    %3662 = vrot.lane.b32.xlu0 %v3640, 64
    %v3663 = vpop.permute.xlu0 %3662
    %3664 = vrot.lane.b32.xlu0 %v3641, 64
    %v3665 = vpop.permute.xlu0 %3664
    %3666 = vrot.lane.b32.xlu0 %v3642, 64
    %v3667 = vpop.permute.xlu0 %3666
    %3668 = vrot.lane.b32.xlu0 %v3643, 64
    %v3669 = vpop.permute.xlu0 %3668
    %3670 = vrot.lane.b32.xlu0 %v3644, 64
    %v3671 = vpop.permute.xlu0 %3670
    %3672 = vrot.lane.b32.xlu0 %v3645, 64
    %v3673 = vpop.permute.xlu0 %3672
    %3674 = vrot.lane.b32.xlu0 %v3646, 64
    %v3675 = vpop.permute.xlu0 %3674
    %3676 = vrot.lane.b32.xlu0 %v3647, 64
    %v3677 = vpop.permute.xlu0 %3676
    %3678 = vrot.lane.b32.xlu0 %v3648, 64
    %v3679 = vpop.permute.xlu0 %3678
    %3680 = vrot.lane.b32.xlu0 %v3649, 64
    %v3681 = vpop.permute.xlu0 %3680
    %v3698 = vunpack.c.l.b16 %v2914
    %v3699 = vunpack.c.l.b16 %v2915
    %v3700 = vunpack.c.l.b16 %v2916
    %v3701 = vunpack.c.l.b16 %v2917
    %v3702 = vunpack.c.l.b16 %v2918
    %v3703 = vunpack.c.l.b16 %v2919
    %v3704 = vunpack.c.l.b16 %v2920
    %v3705 = vunpack.c.l.b16 %v2921
    %v3706 = vunpack.c.l.b16 %v2922
    %v3707 = vunpack.c.l.b16 %v2923
    %v3708 = vunpack.c.l.b16 %v2924
    %v3709 = vunpack.c.l.b16 %v2925
    %v3710 = vunpack.c.l.b16 %v2926
    %v3711 = vunpack.c.l.b16 %v2927
    %v3712 = vunpack.c.l.b16 %v2928
    %v3713 = vunpack.c.l.b16 %v2929
    %v3714 = vpack.c.b16 %v3698, %v3618
    %v3715 = vpack.c.b16 %v3699, %v3619
    %v3716 = vpack.c.b16 %v3700, %v3620
    %v3717 = vpack.c.b16 %v3701, %v3621
    %v3718 = vpack.c.b16 %v3702, %v3622
    %v3719 = vpack.c.b16 %v3703, %v3623
    %v3720 = vpack.c.b16 %v3704, %v3624
    %v3721 = vpack.c.b16 %v3705, %v3625
    %v3722 = vpack.c.b16 %v3706, %v3626
    %v3723 = vpack.c.b16 %v3707, %v3627
    %v3724 = vpack.c.b16 %v3708, %v3628
    %v3725 = vpack.c.b16 %v3709, %v3629
    %v3726 = vpack.c.b16 %v3710, %v3630
    %v3727 = vpack.c.b16 %v3711, %v3631
    %v3728 = vpack.c.b16 %v3712, %v3632
    %v3729 = vpack.c.b16 %v3713, %v3633
    %v3731 = vshrl.u32 %v3714, 16
    %v3733 = vshll.u32 %v3714, 16
    %v3735 = vrot.slane %v3733, 1
    %v3736 = vor.u32 %v3731, %v3735
    %v3738 = vshrl.u32 %v3715, 16
    %v3740 = vshll.u32 %v3715, 16
    %v3742 = vrot.slane %v3740, 1
    %v3743 = vor.u32 %v3738, %v3742
    %v3745 = vshrl.u32 %v3716, 16
    %v3747 = vshll.u32 %v3716, 16
    %v3749 = vrot.slane %v3747, 1
    %v3750 = vor.u32 %v3745, %v3749
    %v3752 = vshrl.u32 %v3717, 16
    %v3754 = vshll.u32 %v3717, 16
    %v3756 = vrot.slane %v3754, 1
    %v3757 = vor.u32 %v3752, %v3756
    %v3759 = vshrl.u32 %v3718, 16
    %v3761 = vshll.u32 %v3718, 16
    %v3763 = vrot.slane %v3761, 1
    %v3764 = vor.u32 %v3759, %v3763
    %v3766 = vshrl.u32 %v3719, 16
    %v3768 = vshll.u32 %v3719, 16
    %v3770 = vrot.slane %v3768, 1
    %v3771 = vor.u32 %v3766, %v3770
    %v3773 = vshrl.u32 %v3720, 16
    %v3775 = vshll.u32 %v3720, 16
    %v3777 = vrot.slane %v3775, 1
    %v3778 = vor.u32 %v3773, %v3777
    %v3780 = vshrl.u32 %v3721, 16
    %v3782 = vshll.u32 %v3721, 16
    %v3784 = vrot.slane %v3782, 1
    %v3785 = vor.u32 %v3780, %v3784
    %v3787 = vshrl.u32 %v3722, 16
    %v3789 = vshll.u32 %v3722, 16
    %v3791 = vrot.slane %v3789, 1
    %v3792 = vor.u32 %v3787, %v3791
    %v3794 = vshrl.u32 %v3723, 16
    %v3796 = vshll.u32 %v3723, 16
    %v3798 = vrot.slane %v3796, 1
    %v3799 = vor.u32 %v3794, %v3798
    %v3801 = vshrl.u32 %v3724, 16
    %v3803 = vshll.u32 %v3724, 16
    %v3805 = vrot.slane %v3803, 1
    %v3806 = vor.u32 %v3801, %v3805
    %v3808 = vshrl.u32 %v3725, 16
    %v3810 = vshll.u32 %v3725, 16
    %v3812 = vrot.slane %v3810, 1
    %v3813 = vor.u32 %v3808, %v3812
    %v3815 = vshrl.u32 %v3726, 16
    %v3817 = vshll.u32 %v3726, 16
    %v3819 = vrot.slane %v3817, 1
    %v3820 = vor.u32 %v3815, %v3819
    %v3822 = vshrl.u32 %v3727, 16
    %v3824 = vshll.u32 %v3727, 16
    %v3826 = vrot.slane %v3824, 1
    %v3827 = vor.u32 %v3822, %v3826
    %v3829 = vshrl.u32 %v3728, 16
    %v3831 = vshll.u32 %v3728, 16
    %v3833 = vrot.slane %v3831, 1
    %v3834 = vor.u32 %v3829, %v3833
    %v3836 = vshrl.u32 %v3729, 16
    %v3838 = vshll.u32 %v3729, 16
    %v3840 = vrot.slane %v3838, 1
    %v3841 = vor.u32 %v3836, %v3840
    %3842 = vrot.lane.b32.xlu0 %v3736, 96
    %v3843 = vpop.permute.xlu0 %3842
    %3844 = vrot.lane.b32.xlu0 %v3743, 96
    %v3845 = vpop.permute.xlu0 %3844
    %3846 = vrot.lane.b32.xlu0 %v3750, 96
    %v3847 = vpop.permute.xlu0 %3846
    %3848 = vrot.lane.b32.xlu0 %v3757, 96
    %v3849 = vpop.permute.xlu0 %3848
    %3850 = vrot.lane.b32.xlu0 %v3764, 96
    %v3851 = vpop.permute.xlu0 %3850
    %3852 = vrot.lane.b32.xlu0 %v3771, 96
    %v3853 = vpop.permute.xlu0 %3852
    %3854 = vrot.lane.b32.xlu0 %v3778, 96
    %v3855 = vpop.permute.xlu0 %3854
    %3856 = vrot.lane.b32.xlu0 %v3785, 96
    %v3857 = vpop.permute.xlu0 %3856
    %3858 = vrot.lane.b32.xlu0 %v3792, 96
    %v3859 = vpop.permute.xlu0 %3858
    %3860 = vrot.lane.b32.xlu0 %v3799, 96
    %v3861 = vpop.permute.xlu0 %3860
    %3862 = vrot.lane.b32.xlu0 %v3806, 96
    %v3863 = vpop.permute.xlu0 %3862
    %3864 = vrot.lane.b32.xlu0 %v3813, 96
    %v3865 = vpop.permute.xlu0 %3864
    %3866 = vrot.lane.b32.xlu0 %v3820, 96
    %v3867 = vpop.permute.xlu0 %3866
    %3868 = vrot.lane.b32.xlu0 %v3827, 96
    %v3869 = vpop.permute.xlu0 %3868
    %3870 = vrot.lane.b32.xlu0 %v3834, 96
    %v3871 = vpop.permute.xlu0 %3870
    %3872 = vrot.lane.b32.xlu0 %v3841, 96
    %v3873 = vpop.permute.xlu0 %3872
    %v3890 = vunpack.c.l.b16 %v2930
    %v3891 = vunpack.c.l.b16 %v2931
    %v3892 = vunpack.c.l.b16 %v2932
    %v3893 = vunpack.c.l.b16 %v2933
    %v3894 = vunpack.c.l.b16 %v2934
    %v3895 = vunpack.c.l.b16 %v2935
    %v3896 = vunpack.c.l.b16 %v2936
    %v3897 = vunpack.c.l.b16 %v2937
    %v3898 = vunpack.c.l.b16 %v2938
    %v3899 = vunpack.c.l.b16 %v2939
    %v3900 = vunpack.c.l.b16 %v2940
    %v3901 = vunpack.c.l.b16 %v2941
    %v3902 = vunpack.c.l.b16 %v2942
    %v3903 = vunpack.c.l.b16 %v2943
    %v3904 = vunpack.c.l.b16 %v2944
    %v3905 = vunpack.c.l.b16 %v2945
    %v3906 = vpack.c.b16 %v3698, %v3890
    %v3907 = vpack.c.b16 %v3699, %v3891
    %v3908 = vpack.c.b16 %v3700, %v3892
    %v3909 = vpack.c.b16 %v3701, %v3893
    %v3910 = vpack.c.b16 %v3702, %v3894
    %v3911 = vpack.c.b16 %v3703, %v3895
    %v3912 = vpack.c.b16 %v3704, %v3896
    %v3913 = vpack.c.b16 %v3705, %v3897
    %v3914 = vpack.c.b16 %v3706, %v3898
    %v3915 = vpack.c.b16 %v3707, %v3899
    %v3916 = vpack.c.b16 %v3708, %v3900
    %v3917 = vpack.c.b16 %v3709, %v3901
    %v3918 = vpack.c.b16 %v3710, %v3902
    %v3919 = vpack.c.b16 %v3711, %v3903
    %v3920 = vpack.c.b16 %v3712, %v3904
    %v3921 = vpack.c.b16 %v3713, %v3905
    %v3922 = vrot.slane %v3906, 1
    %v3923 = vrot.slane %v3907, 1
    %v3924 = vrot.slane %v3908, 1
    %v3925 = vrot.slane %v3909, 1
    %v3926 = vrot.slane %v3910, 1
    %v3927 = vrot.slane %v3911, 1
    %v3928 = vrot.slane %v3912, 1
    %v3929 = vrot.slane %v3913, 1
    %v3930 = vrot.slane %v3914, 1
    %v3931 = vrot.slane %v3915, 1
    %v3932 = vrot.slane %v3916, 1
    %v3933 = vrot.slane %v3917, 1
    %v3934 = vrot.slane %v3918, 1
    %v3935 = vrot.slane %v3919, 1
    %v3936 = vrot.slane %v3920, 1
    %v3937 = vrot.slane %v3921, 1
    %v3940 = vsel %vm2044, %v2802, %v3139
    %v3943 = vsel %vm2044, %v2803, %v3141
    %v3946 = vsel %vm2044, %v2804, %v3143
    %v3949 = vsel %vm2044, %v2805, %v3145
    %v3952 = vsel %vm2044, %v2806, %v3147
    %v3955 = vsel %vm2044, %v2807, %v3149
    %v3958 = vsel %vm2044, %v2808, %v3151
    %v3961 = vsel %vm2044, %v2809, %v3153
    %v3964 = vsel %vm2044, %v2810, %v3155
    %v3967 = vsel %vm2044, %v2811, %v3157
    %v3970 = vsel %vm2044, %v2812, %v3159
    %v3973 = vsel %vm2044, %v2813, %v3161
    %v3976 = vsel %vm2044, %v2814, %v3163
    %v3979 = vsel %vm2044, %v2815, %v3165
    %v3982 = vsel %vm2044, %v2816, %v3167
    %v3985 = vsel %vm2044, %v2817, %v3169
    %vm3986 = vcmask 523264
    %v3988 = vsel %vm3986, %v3940, %v3235
    %v3990 = vsel %vm3986, %v3943, %v3237
    %v3992 = vsel %vm3986, %v3946, %v3239
    %v3994 = vsel %vm3986, %v3949, %v3241
    %v3996 = vsel %vm3986, %v3952, %v3243
    %v3998 = vsel %vm3986, %v3955, %v3245
    %v4000 = vsel %vm3986, %v3958, %v3247
    %v4002 = vsel %vm3986, %v3961, %v3249
    %v4004 = vsel %vm3986, %v3964, %v3251
    %v4006 = vsel %vm3986, %v3967, %v3253
    %v4008 = vsel %vm3986, %v3970, %v3255
    %v4010 = vsel %vm3986, %v3973, %v3257
    %v4012 = vsel %vm3986, %v3976, %v3259
    %v4014 = vsel %vm3986, %v3979, %v3261
    %v4016 = vsel %vm3986, %v3982, %v3263
    %v4018 = vsel %vm3986, %v3985, %v3265
    %vm4019 = vcmask 785408
    %v4021 = vsel %vm4019, %v3988, %v3315
    %v4023 = vsel %vm4019, %v3990, %v3317
    %v4025 = vsel %vm4019, %v3992, %v3319
    %v4027 = vsel %vm4019, %v3994, %v3321
    %v4029 = vsel %vm4019, %v3996, %v3323
    %v4031 = vsel %vm4019, %v3998, %v3325
    %v4033 = vsel %vm4019, %v4000, %v3327
    %v4035 = vsel %vm4019, %v4002, %v3329
    %v4037 = vsel %vm4019, %v4004, %v3331
    %v4039 = vsel %vm4019, %v4006, %v3333
    %v4041 = vsel %vm4019, %v4008, %v3335
    %v4043 = vsel %vm4019, %v4010, %v3337
    %v4045 = vsel %vm4019, %v4012, %v3339
    %v4047 = vsel %vm4019, %v4014, %v3341
    %v4049 = vsel %vm4019, %v4016, %v3343
    %v4051 = vsel %vm4019, %v4018, %v3345
    %v4054 = vsel %vm2044, %v3400, %v3571
    %v4057 = vsel %vm2044, %v3407, %v3573
    %v4060 = vsel %vm2044, %v3414, %v3575
    %v4063 = vsel %vm2044, %v3421, %v3577
    %v4066 = vsel %vm2044, %v3428, %v3579
    %v4069 = vsel %vm2044, %v3435, %v3581
    %v4072 = vsel %vm2044, %v3442, %v3583
    %v4075 = vsel %vm2044, %v3449, %v3585
    %v4078 = vsel %vm2044, %v3456, %v3587
    %v4081 = vsel %vm2044, %v3463, %v3589
    %v4084 = vsel %vm2044, %v3470, %v3591
    %v4087 = vsel %vm2044, %v3477, %v3593
    %v4090 = vsel %vm2044, %v3484, %v3595
    %v4093 = vsel %vm2044, %v3491, %v3597
    %v4096 = vsel %vm2044, %v3498, %v3599
    %v4099 = vsel %vm2044, %v3505, %v3601
    %v4101 = vsel %vm3986, %v4054, %v3651
    %v4103 = vsel %vm3986, %v4057, %v3653
    %v4105 = vsel %vm3986, %v4060, %v3655
    %v4107 = vsel %vm3986, %v4063, %v3657
    %v4109 = vsel %vm3986, %v4066, %v3659
    %v4111 = vsel %vm3986, %v4069, %v3661
    %v4113 = vsel %vm3986, %v4072, %v3663
    %v4115 = vsel %vm3986, %v4075, %v3665
    %v4117 = vsel %vm3986, %v4078, %v3667
    %v4119 = vsel %vm3986, %v4081, %v3669
    %v4121 = vsel %vm3986, %v4084, %v3671
    %v4123 = vsel %vm3986, %v4087, %v3673
    %v4125 = vsel %vm3986, %v4090, %v3675
    %v4127 = vsel %vm3986, %v4093, %v3677
    %v4129 = vsel %vm3986, %v4096, %v3679
    %v4131 = vsel %vm3986, %v4099, %v3681
    %v4133 = vsel %vm4019, %v4101, %v3843
    %v4135 = vsel %vm4019, %v4103, %v3845
    %v4137 = vsel %vm4019, %v4105, %v3847
    %v4139 = vsel %vm4019, %v4107, %v3849
    %v4141 = vsel %vm4019, %v4109, %v3851
    %v4143 = vsel %vm4019, %v4111, %v3853
    %v4145 = vsel %vm4019, %v4113, %v3855
    %v4147 = vsel %vm4019, %v4115, %v3857
    %v4149 = vsel %vm4019, %v4117, %v3859
    %v4151 = vsel %vm4019, %v4119, %v3861
    %v4153 = vsel %vm4019, %v4121, %v3863
    %v4155 = vsel %vm4019, %v4123, %v3865
    %v4157 = vsel %vm4019, %v4125, %v3867
    %v4159 = vsel %vm4019, %v4127, %v3869
    %v4161 = vsel %vm4019, %v4129, %v3871
    %v4163 = vsel %vm4019, %v4131, %v3873
    %v4196 = vunpack.c.l.b16 %v4021
    %v4197 = vunpack.c.l.b16 %v4133
    %v4198 = vunpack.c.l.b16 %v3922
    %v4199 = vunpack.c.l.b16 %v4023
    %v4200 = vunpack.c.l.b16 %v4135
    %v4201 = vunpack.c.l.b16 %v3923
    %v4202 = vunpack.c.l.b16 %v4025
    %v4203 = vunpack.c.l.b16 %v4137
    %v4204 = vunpack.c.l.b16 %v3924
    %v4205 = vunpack.c.l.b16 %v4027
    %v4206 = vunpack.c.l.b16 %v4139
    %v4207 = vunpack.c.l.b16 %v3925
    %v4208 = vunpack.c.l.b16 %v4029
    %v4209 = vunpack.c.l.b16 %v4141
    %v4210 = vunpack.c.l.b16 %v3926
    %v4211 = vunpack.c.l.b16 %v4031
    %v4212 = vunpack.c.l.b16 %v4143
    %v4213 = vunpack.c.l.b16 %v3927
    %v4214 = vunpack.c.l.b16 %v4033
    %v4215 = vunpack.c.l.b16 %v4145
    %v4216 = vunpack.c.l.b16 %v3928
    %v4217 = vunpack.c.l.b16 %v4035
    %v4218 = vunpack.c.l.b16 %v4147
    %v4219 = vunpack.c.l.b16 %v3929
    %v4220 = vunpack.c.l.b16 %v4037
    %v4221 = vunpack.c.l.b16 %v4149
    %v4222 = vunpack.c.l.b16 %v3930
    %v4223 = vunpack.c.l.b16 %v4039
    %v4224 = vunpack.c.l.b16 %v4151
    %v4225 = vunpack.c.l.b16 %v3931
    %v4226 = vunpack.c.l.b16 %v4041
    %v4227 = vunpack.c.l.b16 %v4153
    %v4228 = vunpack.c.l.b16 %v3932
    %v4229 = vunpack.c.l.b16 %v4043
    %v4230 = vunpack.c.l.b16 %v4155
    %v4231 = vunpack.c.l.b16 %v3933
    %v4232 = vunpack.c.l.b16 %v4045
    %v4233 = vunpack.c.l.b16 %v4157
    %v4234 = vunpack.c.l.b16 %v3934
    %v4235 = vunpack.c.l.b16 %v4047
    %v4236 = vunpack.c.l.b16 %v4159
    %v4237 = vunpack.c.l.b16 %v3935
    %v4238 = vunpack.c.l.b16 %v4049
    %v4239 = vunpack.c.l.b16 %v4161
    %v4240 = vunpack.c.l.b16 %v3936
    %v4241 = vunpack.c.l.b16 %v4051
    %v4242 = vunpack.c.l.b16 %v4163
    %v4243 = vunpack.c.l.b16 %v3937
    %v4244 = vld [vmem:[%s2] sm:$0xf]
    %v4245 = vld [vmem:[%s2 + $0x4] sm:$0xf]
    %v4246 = vld [vmem:[%s2 + $0x8] sm:$0xf]
    %v4247 = vld [vmem:[%s2 + $0xc] sm:$0xf]
    %v4248 = vld [vmem:[%s2 + $0x10] sm:$0xf]
    %v4249 = vld [vmem:[%s2 + $0x14] sm:$0xf]
    %v4250 = vld [vmem:[%s2 + $0x18] sm:$0xf]
    %v4251 = vld [vmem:[%s2 + $0x1c] sm:$0xf]
    %v4252 = vld [vmem:[%s2 + $0x20] sm:$0xf]
    %v4253 = vld [vmem:[%s2 + $0x24] sm:$0xf]
    %v4254 = vld [vmem:[%s2 + $0x28] sm:$0xf]
    %v4255 = vld [vmem:[%s2 + $0x2c] sm:$0xf]
    %v4256 = vld [vmem:[%s2 + $0x30] sm:$0xf]
    %v4257 = vld [vmem:[%s2 + $0x34] sm:$0xf]
    %v4258 = vld [vmem:[%s2 + $0x38] sm:$0xf]
    %v4259 = vld [vmem:[%s2 + $0x3c] sm:$0xf]
    %v4260 = vld [vmem:[%s2 + $0x40] sm:$0xf]
    %v4261 = vld [vmem:[%s2 + $0x44] sm:$0xf]
    %v4262 = vld [vmem:[%s2 + $0x48] sm:$0xf]
    %v4263 = vld [vmem:[%s2 + $0x4c] sm:$0xf]
    %v4264 = vld [vmem:[%s2 + $0x50] sm:$0xf]
    %v4265 = vld [vmem:[%s2 + $0x54] sm:$0xf]
    %v4266 = vld [vmem:[%s2 + $0x58] sm:$0xf]
    %v4267 = vld [vmem:[%s2 + $0x5c] sm:$0xf]
    %v4268 = vld [vmem:[%s2 + $0x60] sm:$0xf]
    %v4269 = vld [vmem:[%s2 + $0x64] sm:$0xf]
    %v4270 = vld [vmem:[%s2 + $0x68] sm:$0xf]
    %v4271 = vld [vmem:[%s2 + $0x6c] sm:$0xf]
    %v4272 = vld [vmem:[%s2 + $0x70] sm:$0xf]
    %v4273 = vld [vmem:[%s2 + $0x74] sm:$0xf]
    %v4274 = vld [vmem:[%s2 + $0x78] sm:$0xf]
    %v4275 = vld [vmem:[%s2 + $0x7c] sm:$0xf]
    %v4276 = vld [vmem:[%s2 + $0x80] sm:$0xf]
    %v4277 = vld [vmem:[%s2 + $0x84] sm:$0xf]
    %v4278 = vld [vmem:[%s2 + $0x88] sm:$0xf]
    %v4279 = vld [vmem:[%s2 + $0x8c] sm:$0xf]
    %v4280 = vpack.c.b16 %v4199, %v4196
    %v4281 = vpack.c.b16 %v4200, %v4197
    %v4282 = vpack.c.b16 %v4201, %v4198
    %v4283 = vpack.c.b16 %v4205, %v4202
    %v4284 = vpack.c.b16 %v4206, %v4203
    %v4285 = vpack.c.b16 %v4207, %v4204
    %v4286 = vpack.c.b16 %v4211, %v4208
    %v4287 = vpack.c.b16 %v4212, %v4209
    %v4288 = vpack.c.b16 %v4213, %v4210
    %v4289 = vpack.c.b16 %v4217, %v4214
    %v4290 = vpack.c.b16 %v4218, %v4215
    %v4291 = vpack.c.b16 %v4219, %v4216
    %v4292 = vpack.c.b16 %v4223, %v4220
    %v4293 = vpack.c.b16 %v4224, %v4221
    %v4294 = vpack.c.b16 %v4225, %v4222
    %v4295 = vpack.c.b16 %v4229, %v4226
    %v4296 = vpack.c.b16 %v4230, %v4227
    %v4297 = vpack.c.b16 %v4231, %v4228
    %v4298 = vpack.c.b16 %v4235, %v4232
    %v4299 = vpack.c.b16 %v4236, %v4233
    %v4300 = vpack.c.b16 %v4237, %v4234
    %v4301 = vpack.c.b16 %v4241, %v4238
    %v4302 = vpack.c.b16 %v4242, %v4239
    %v4303 = vpack.c.b16 %v4243, %v4240
    %v4356 = vunpack.c.l.b16 %v4244
    %v4357 = vunpack.c.l.b16 %v4245
    %v4358 = vunpack.c.l.b16 %v4246
    %v4359 = vunpack.c.l.b16 %v4247
    %v4360 = vunpack.c.l.b16 %v4248
    %v4361 = vunpack.c.l.b16 %v4249
    %v4362 = vunpack.c.l.b16 %v4250
    %v4363 = vunpack.c.l.b16 %v4251
    %v4364 = vunpack.c.l.b16 %v4252
    %v4365 = vunpack.c.l.b16 %v4253
    %v4366 = vunpack.c.l.b16 %v4254
    %v4367 = vunpack.c.l.b16 %v4255
    %v4368 = vunpack.c.l.b16 %v4256
    %v4369 = vunpack.c.l.b16 %v4257
    %v4370 = vunpack.c.l.b16 %v4258
    %v4371 = vunpack.c.l.b16 %v4259
    %v4372 = vunpack.c.l.b16 %v4260
    %v4373 = vunpack.c.l.b16 %v4261
    %v4374 = vunpack.c.l.b16 %v4262
    %v4375 = vunpack.c.l.b16 %v4263
    %v4376 = vunpack.c.l.b16 %v4264
    %v4377 = vunpack.c.l.b16 %v4265
    %v4378 = vunpack.c.l.b16 %v4266
    %v4379 = vunpack.c.l.b16 %v4267
    %v4380 = vunpack.c.l.b16 %v4268
    %v4381 = vunpack.c.l.b16 %v4269
    %v4382 = vunpack.c.l.b16 %v4270
    %v4383 = vunpack.c.l.b16 %v4271
    %v4384 = vunpack.c.l.b16 %v4272
    %v4385 = vunpack.c.l.b16 %v4273
    %v4386 = vunpack.c.l.b16 %v4274
    %v4387 = vunpack.c.l.b16 %v4275
    %v4388 = vunpack.c.l.b16 %v4276
    %v4389 = vunpack.c.l.b16 %v4277
    %v4390 = vunpack.c.l.b16 %v4278
    %v4391 = vunpack.c.l.b16 %v4279
    %v4392 = vpack.c.b16 %v4357, %v4356
    %v4393 = vpack.c.b16 %v4359, %v4358
    %v4394 = vpack.c.b16 %v4361, %v4360
    %v4395 = vpack.c.b16 %v4363, %v4362
    %v4396 = vpack.c.b16 %v4365, %v4364
    %v4397 = vpack.c.b16 %v4367, %v4366
    %v4398 = vpack.c.b16 %v4369, %v4368
    %v4399 = vpack.c.b16 %v4371, %v4370
    %v4400 = vpack.c.b16 %v4373, %v4372
    %v4401 = vpack.c.b16 %v4375, %v4374
    %v4402 = vpack.c.b16 %v4377, %v4376
    %v4403 = vpack.c.b16 %v4379, %v4378
    %v4404 = vpack.c.b16 %v4381, %v4380
    %v4405 = vpack.c.b16 %v4383, %v4382
    %v4406 = vpack.c.b16 %v4385, %v4384
    %v4407 = vpack.c.b16 %v4387, %v4386
    %v4408 = vpack.c.b16 %v4389, %v4388
    %v4409 = vpack.c.b16 %v4391, %v4390
    %v4429 = vsel %vm2044, %v4282, 0
    %v4432 = vsel %vm2044, %v4285, 0
    %v4435 = vsel %vm2044, %v4288, 0
    %v4438 = vsel %vm2044, %v4291, 0
    %v4441 = vsel %vm2044, %v4294, 0
    %v4444 = vsel %vm2044, %v4297, 0
    %v4447 = vsel %vm2044, %v4300, 0
    %v4450 = vsel %vm2044, %v4303, 0
    %4452 = vmatprep.subr.bf16.mxu0 0
    %4453 = vmatpush1.bf16.msra.mxu0 %v4392
    %4454 = vmatprep.subr.bf16.mxu0 0
    %4455 = vmatpush1.bf16.msra.mxu0 %v4393
    %4456 = vmatprep.subr.bf16.mxu0 0
    %4457 = vmatpush1.bf16.msra.mxu0 %v4394
    %4458 = vmatprep.subr.bf16.mxu0 0
    %4459 = vmatpush1.bf16.msra.mxu0 %v4395
    %4460 = vmatprep.subr.bf16.mxu0 0
    %4461 = vmatpush1.bf16.msra.mxu0 %v4396
    %4462 = vmatprep.subr.bf16.mxu0 0
    %4463 = vmatpush1.bf16.msra.mxu0 %v4397
    %4464 = vmatprep.subr.bf16.mxu0 0
    %4465 = vmatpush1.bf16.msra.mxu0 %v4398
    %4466 = vmatprep.subr.bf16.mxu0 0
    %4467 = vmatpush1.bf16.msra.mxu0 %v4399
    %4468 = vmatprep.subr.bf16.mxu0 0
    %4469 = vmatpush1.bf16.msra.mxu0 %v4400
    %4470 = vmatprep.subr.bf16.mxu0 0
    %4471 = vmatpush1.bf16.msra.mxu0 %v4401
    %4472 = vmatprep.subr.bf16.mxu0 0
    %4473 = vmatpush1.bf16.msra.mxu0 %v4402
    %4474 = vmatprep.subr.bf16.mxu0 0
    %4475 = vmatpush1.bf16.msra.mxu0 %v4403
    %4476 = vmatprep.subr.bf16.mxu0 0
    %4477 = vmatpush1.bf16.msra.mxu0 %v4404
    %4478 = vmatprep.subr.bf16.mxu0 0
    %4479 = vmatpush1.bf16.msra.mxu0 %v4405
    %4480 = vmatprep.subr.bf16.mxu0 0
    %4481 = vmatpush1.bf16.msra.mxu0 %v4406
    %4482 = vmatprep.subr.bf16.mxu0 0
    %4483 = vmatpush1.bf16.msra.mxu0 %v4407
    %4484 = vmatprep.mubr.bf16.mxu0 %v4281
    %4485 = vmatmul.mubr.bf16.gmra.mrb[0].mxu0 %v4280
    %v4486 = vpop.f32.mrb[0].mxu0
    %v4487 = vadd.f32 0.0, %v4486
    %v4488 = vpop.f32.mrb[0].mxu0
    %v4489 = vpop.f32.mrb[0].mxu0
    %v4490 = vadd.f32 0.0, %v4489
    %v4491 = vpop.f32.mrb[0].mxu0
    %4492 = vmatprep.mubr.bf16.mxu0 %v4284
    %4493 = vmatmul.mubr.bf16.gmra.mrb[0].mxu0 %v4283
    %v4494 = vpop.f32.mrb[0].mxu0
    %v4495 = vadd.f32 0.0, %v4494
    %v4496 = vpop.f32.mrb[0].mxu0
    %v4497 = vpop.f32.mrb[0].mxu0
    %v4498 = vadd.f32 0.0, %v4497
    %v4499 = vpop.f32.mrb[0].mxu0
    %4500 = vmatprep.mubr.bf16.mxu0 %v4287
    %4501 = vmatmul.mubr.bf16.gmra.mrb[0].mxu0 %v4286
    %v4502 = vpop.f32.mrb[0].mxu0
    %v4503 = vadd.f32 0.0, %v4502
    %v4504 = vpop.f32.mrb[0].mxu0
    %v4505 = vpop.f32.mrb[0].mxu0
    %v4506 = vadd.f32 0.0, %v4505
    %v4507 = vpop.f32.mrb[0].mxu0
    %4508 = vmatprep.mubr.bf16.mxu0 %v4290
    %4509 = vmatmul.mubr.bf16.gmra.mrb[0].mxu0 %v4289
    %v4510 = vpop.f32.mrb[0].mxu0
    %v4511 = vadd.f32 0.0, %v4510
    %v4512 = vpop.f32.mrb[0].mxu0
    %v4513 = vpop.f32.mrb[0].mxu0
    %v4514 = vadd.f32 0.0, %v4513
    %v4515 = vpop.f32.mrb[0].mxu0
    %4516 = vmatprep.mubr.bf16.mxu0 %v4293
    %4517 = vmatmul.mubr.bf16.gmra.mrb[0].mxu0 %v4292
    %v4518 = vpop.f32.mrb[0].mxu0
    %v4519 = vadd.f32 0.0, %v4518
    %v4520 = vpop.f32.mrb[0].mxu0
    %v4521 = vpop.f32.mrb[0].mxu0
    %v4522 = vadd.f32 0.0, %v4521
    %v4523 = vpop.f32.mrb[0].mxu0
    %4524 = vmatprep.mubr.bf16.mxu0 %v4296
    %4525 = vmatmul.mubr.bf16.gmra.mrb[0].mxu0 %v4295
    %v4526 = vpop.f32.mrb[0].mxu0
    %v4527 = vadd.f32 0.0, %v4526
    %v4528 = vpop.f32.mrb[0].mxu0
    %v4529 = vpop.f32.mrb[0].mxu0
    %v4530 = vadd.f32 0.0, %v4529
    %v4531 = vpop.f32.mrb[0].mxu0
    %4532 = vmatprep.mubr.bf16.mxu0 %v4299
    %4533 = vmatmul.mubr.bf16.gmra.mrb[0].mxu0 %v4298
    %v4534 = vpop.f32.mrb[0].mxu0
    %v4535 = vadd.f32 0.0, %v4534
    %v4536 = vpop.f32.mrb[0].mxu0
    %v4537 = vpop.f32.mrb[0].mxu0
    %v4538 = vadd.f32 0.0, %v4537
    %v4539 = vpop.f32.mrb[0].mxu0
    %4540 = vmatprep.mubr.bf16.mxu0 %v4302
    %4541 = vmatmul.mubr.bf16.gmra.mrb[0].mxu0 %v4301
    %v4542 = vpop.f32.mrb[0].mxu0
    %v4543 = vadd.f32 0.0, %v4542
    %v4544 = vpop.f32.mrb[0].mxu0
    %v4545 = vpop.f32.mrb[0].mxu0
    %v4546 = vadd.f32 0.0, %v4545
    %v4547 = vpop.f32.mrb[0].mxu0
    %4548 = vdwg.mxu0
    %4549 = vmatprep.subr.bf16.mxu0 0
    %4550 = vmatpush1.bf16.msra.mxu0 %v4408
    %4551 = vmatprep.subr.bf16.mxu0 0
    %4552 = vmatpush1.bf16.msra.mxu0 %v4409
    %4553 = vmatprep.subr.bf16.mxu0 0
    %4554 = vmatpush1.bf16.msra.mxu0 0
    %4555 = vmatprep.subr.bf16.mxu0 0
    %4556 = vmatpush1.bf16.msra.mxu0 0
    %4557 = vmatprep.subr.bf16.mxu0 0
    %4558 = vmatpush1.bf16.msra.mxu0 0
    %4559 = vmatprep.subr.bf16.mxu0 0
    %4560 = vmatpush1.bf16.msra.mxu0 0
    %4561 = vmatprep.subr.bf16.mxu0 0
    %4562 = vmatpush1.bf16.msra.mxu0 0
    %4563 = vmatprep.subr.bf16.mxu0 0
    %4564 = vmatpush1.bf16.msra.mxu0 0
    %4565 = vmatprep.subr.bf16.mxu0 0
    %4566 = vmatpush1.bf16.msra.mxu0 0
    %4567 = vmatprep.subr.bf16.mxu0 0
    %4568 = vmatpush1.bf16.msra.mxu0 0
    %4569 = vmatprep.subr.bf16.mxu0 0
    %4570 = vmatpush1.bf16.msra.mxu0 0
    %4571 = vmatprep.subr.bf16.mxu0 0
    %4572 = vmatpush1.bf16.msra.mxu0 0
    %4573 = vmatprep.subr.bf16.mxu0 0
    %4574 = vmatpush1.bf16.msra.mxu0 0
    %4575 = vmatprep.subr.bf16.mxu0 0
    %4576 = vmatpush1.bf16.msra.mxu0 0
    %4577 = vmatprep.subr.bf16.mxu0 0
    %4578 = vmatpush1.bf16.msra.mxu0 0
    %4579 = vmatprep.subr.bf16.mxu0 0
    %4580 = vmatpush1.bf16.msra.mxu0 0
    %4581 = vmatprep.mubr.bf16.mxu0 0
    %4582 = vmatmul.mubr.bf16.gmra.mrb[0].mxu0 %v4429
    %v4583 = vpop.f32.mrb[0].mxu0
    %v4584 = vadd.f32 %v4487, %v4583
    %v4585 = vpop.f32.mrb[0].mxu0
    %v4586 = vpop.f32.mrb[0].mxu0
    %v4587 = vadd.f32 %v4490, %v4586
    %v4588 = vpop.f32.mrb[0].mxu0
    %4589 = vmatprep.mubr.bf16.mxu0 0
    %4590 = vmatmul.mubr.bf16.gmra.mrb[0].mxu0 %v4432
    %v4591 = vpop.f32.mrb[0].mxu0
    %v4592 = vadd.f32 %v4495, %v4591
    %v4593 = vpop.f32.mrb[0].mxu0
    %v4594 = vpop.f32.mrb[0].mxu0
    %v4595 = vadd.f32 %v4498, %v4594
    %v4596 = vpop.f32.mrb[0].mxu0
    %4597 = vmatprep.mubr.bf16.mxu0 0
    %4598 = vmatmul.mubr.bf16.gmra.mrb[0].mxu0 %v4435
    %v4599 = vpop.f32.mrb[0].mxu0
    %v4600 = vadd.f32 %v4503, %v4599
    %v4601 = vpop.f32.mrb[0].mxu0
    %v4602 = vpop.f32.mrb[0].mxu0
    %v4603 = vadd.f32 %v4506, %v4602
    %v4604 = vpop.f32.mrb[0].mxu0
    %4605 = vmatprep.mubr.bf16.mxu0 0
    %4606 = vmatmul.mubr.bf16.gmra.mrb[0].mxu0 %v4438
    %v4607 = vpop.f32.mrb[0].mxu0
    %v4608 = vadd.f32 %v4511, %v4607
    %v4609 = vpop.f32.mrb[0].mxu0
    %v4610 = vpop.f32.mrb[0].mxu0
    %v4611 = vadd.f32 %v4514, %v4610
    %v4612 = vpop.f32.mrb[0].mxu0
    %4613 = vmatprep.mubr.bf16.mxu0 0
    %4614 = vmatmul.mubr.bf16.gmra.mrb[0].mxu0 %v4441
    %v4615 = vpop.f32.mrb[0].mxu0
    %v4616 = vadd.f32 %v4519, %v4615
    %v4617 = vpop.f32.mrb[0].mxu0
    %v4618 = vpop.f32.mrb[0].mxu0
    %v4619 = vadd.f32 %v4522, %v4618
    %v4620 = vpop.f32.mrb[0].mxu0
    %4621 = vmatprep.mubr.bf16.mxu0 0
    %4622 = vmatmul.mubr.bf16.gmra.mrb[0].mxu0 %v4444
    %v4623 = vpop.f32.mrb[0].mxu0
    %v4624 = vadd.f32 %v4527, %v4623
    %v4625 = vpop.f32.mrb[0].mxu0
    %v4626 = vpop.f32.mrb[0].mxu0
    %v4627 = vadd.f32 %v4530, %v4626
    %v4628 = vpop.f32.mrb[0].mxu0
    %4629 = vmatprep.mubr.bf16.mxu0 0
    %4630 = vmatmul.mubr.bf16.gmra.mrb[0].mxu0 %v4447
    %v4631 = vpop.f32.mrb[0].mxu0
    %v4632 = vadd.f32 %v4535, %v4631
    %v4633 = vpop.f32.mrb[0].mxu0
    %v4634 = vpop.f32.mrb[0].mxu0
    %v4635 = vadd.f32 %v4538, %v4634
    %v4636 = vpop.f32.mrb[0].mxu0
    %4637 = vmatprep.mubr.bf16.mxu0 0
    %4638 = vmatmul.mubr.bf16.gmra.mrb[0].mxu0 %v4450
    %v4639 = vpop.f32.mrb[0].mxu0
    %v4640 = vadd.f32 %v4543, %v4639
    %v4641 = vpop.f32.mrb[0].mxu0
    %v4642 = vpop.f32.mrb[0].mxu0
    %v4643 = vadd.f32 %v4546, %v4642
    %v4644 = vpop.f32.mrb[0].mxu0
    %4645 = vdwg.mxu0
    %v4646 = vsel %vm2044, %v4584, 0.0
    %v4647 = vsel %vm2044, %v4587, 0.0
    %v4648 = vadd.f32 %v4646, %v4647
    %v4649 = vsel %vm2044, %v4592, 0.0
    %v4650 = vadd.f32 %v4648, %v4649
    %v4651 = vsel %vm2044, %v4595, 0.0
    %v4652 = vadd.f32 %v4650, %v4651
    %v4653 = vsel %vm2044, %v4600, 0.0
    %v4654 = vadd.f32 %v4652, %v4653
    %v4655 = vsel %vm2044, %v4603, 0.0
    %v4656 = vadd.f32 %v4654, %v4655
    %v4657 = vsel %vm2044, %v4608, 0.0
    %v4658 = vadd.f32 %v4656, %v4657
    %v4659 = vsel %vm2044, %v4611, 0.0
    %v4660 = vadd.f32 %v4658, %v4659
    %v4661 = vrot.slane %v4660, 4
    %v4662 = vadd.f32 %v4660, %v4661
    %v4663 = vrot.slane %v4662, 2
    %v4664 = vadd.f32 %v4662, %v4663
    %v4665 = vrot.slane %v4664, 1
    %v4666 = vadd.f32 %v4664, %v4665
    %v4667 = vsel %vm2044, %v4616, 0.0
    %v4668 = vsel %vm2044, %v4619, 0.0
    %v4669 = vadd.f32 %v4667, %v4668
    %v4670 = vsel %vm2044, %v4624, 0.0
    %v4671 = vadd.f32 %v4669, %v4670
    %v4672 = vsel %vm2044, %v4627, 0.0
    %v4673 = vadd.f32 %v4671, %v4672
    %v4674 = vsel %vm2044, %v4632, 0.0
    %v4675 = vadd.f32 %v4673, %v4674
    %v4676 = vsel %vm2044, %v4635, 0.0
    %v4677 = vadd.f32 %v4675, %v4676
    %v4678 = vsel %vm2044, %v4640, 0.0
    %v4679 = vadd.f32 %v4677, %v4678
    %v4680 = vsel %vm2044, %v4643, 0.0
    %v4681 = vadd.f32 %v4679, %v4680
    %v4682 = vrot.slane %v4681, 4
    %v4683 = vadd.f32 %v4681, %v4682
    %v4684 = vrot.slane %v4683, 2
    %v4685 = vadd.f32 %v4683, %v4684
    %v4686 = vrot.slane %v4685, 1
    %v4687 = vadd.f32 %v4685, %v4686
    %v4688 = vmul.f32 %v4666, 0.015625
    %v4689 = vmul.f32 %v4687, 0.015625
    %v4690 = vsub.f32 %v4584, %v4688
    %v4691 = vsub.f32 %v4587, %v4688
    %v4692 = vsub.f32 %v4592, %v4688
    %v4693 = vsub.f32 %v4595, %v4688
    %v4694 = vsub.f32 %v4600, %v4688
    %v4695 = vsub.f32 %v4603, %v4688
    %v4696 = vsub.f32 %v4608, %v4688
    %v4697 = vsub.f32 %v4611, %v4688
    %v4698 = vsub.f32 %v4616, %v4689
    %v4699 = vsub.f32 %v4619, %v4689
    %v4700 = vsub.f32 %v4624, %v4689
    %v4701 = vsub.f32 %v4627, %v4689
    %v4702 = vsub.f32 %v4632, %v4689
    %v4703 = vsub.f32 %v4635, %v4689
    %v4704 = vsub.f32 %v4640, %v4689
    %v4705 = vsub.f32 %v4643, %v4689
    %v4706 = vmul.f32 %v4690, %v4690
    %v4707 = vmul.f32 %v4691, %v4691
    %v4708 = vmul.f32 %v4692, %v4692
    %v4709 = vmul.f32 %v4693, %v4693
    %v4710 = vmul.f32 %v4694, %v4694
    %v4711 = vmul.f32 %v4695, %v4695
    %v4712 = vmul.f32 %v4696, %v4696
    %v4713 = vmul.f32 %v4697, %v4697
    %v4714 = vmul.f32 %v4698, %v4698
    %v4715 = vmul.f32 %v4699, %v4699
    %v4716 = vmul.f32 %v4700, %v4700
    %v4717 = vmul.f32 %v4701, %v4701
    %v4718 = vmul.f32 %v4702, %v4702
    %v4719 = vmul.f32 %v4703, %v4703
    %v4720 = vmul.f32 %v4704, %v4704
    %v4721 = vmul.f32 %v4705, %v4705
    %v4722 = vsel %vm2044, %v4706, 0.0
    %v4723 = vsel %vm2044, %v4707, 0.0
    %v4724 = vadd.f32 %v4722, %v4723
    %v4725 = vsel %vm2044, %v4708, 0.0
    %v4726 = vadd.f32 %v4724, %v4725
    %v4727 = vsel %vm2044, %v4709, 0.0
    %v4728 = vadd.f32 %v4726, %v4727
    %v4729 = vsel %vm2044, %v4710, 0.0
    %v4730 = vadd.f32 %v4728, %v4729
    %v4731 = vsel %vm2044, %v4711, 0.0
    %v4732 = vadd.f32 %v4730, %v4731
    %v4733 = vsel %vm2044, %v4712, 0.0
    %v4734 = vadd.f32 %v4732, %v4733
    %v4735 = vsel %vm2044, %v4713, 0.0
    %v4736 = vadd.f32 %v4734, %v4735
    %v4737 = vrot.slane %v4736, 4
    %v4738 = vadd.f32 %v4736, %v4737
    %v4739 = vrot.slane %v4738, 2
    %v4740 = vadd.f32 %v4738, %v4739
    %v4741 = vrot.slane %v4740, 1
    %v4742 = vadd.f32 %v4740, %v4741
    %v4743 = vsel %vm2044, %v4714, 0.0
    %v4744 = vsel %vm2044, %v4715, 0.0
    %v4745 = vadd.f32 %v4743, %v4744
    %v4746 = vsel %vm2044, %v4716, 0.0
    %v4747 = vadd.f32 %v4745, %v4746
    %v4748 = vsel %vm2044, %v4717, 0.0
    %v4749 = vadd.f32 %v4747, %v4748
    %v4750 = vsel %vm2044, %v4718, 0.0
    %v4751 = vadd.f32 %v4749, %v4750
    %v4752 = vsel %vm2044, %v4719, 0.0
    %v4753 = vadd.f32 %v4751, %v4752
    %v4754 = vsel %vm2044, %v4720, 0.0
    %v4755 = vadd.f32 %v4753, %v4754
    %v4756 = vsel %vm2044, %v4721, 0.0
    %v4757 = vadd.f32 %v4755, %v4756
    %v4758 = vrot.slane %v4757, 4
    %v4759 = vadd.f32 %v4757, %v4758
    %v4760 = vrot.slane %v4759, 2
    %v4761 = vadd.f32 %v4759, %v4760
    %v4762 = vrot.slane %v4761, 1
    %v4763 = vadd.f32 %v4761, %v4762
    %v4764 = vmul.f32 %v4742, 0.015625
    %v4765 = vmul.f32 %v4763, 0.015625
    %v4766 = vadd.f32 %v4764, 1e-05
    %v4767 = vadd.f32 %v4765, 1e-05
    %v4768 = vrsqrt.pop %v4766
    %v4769 = vrsqrt.pop %v4767
    %v4770 = vmul.f32 %v4768, %v21
    %v4771 = vmul.f32 %v4769, %v21
    %v4772 = vlaneseq
    %v4773 = vshrl.u32 %v4772, 7
    %v4774 = vsub.s32 0, %v4773
    %v4775 = vrot.slane %v4770, %v4774
    %v4776 = vlaneseq
    %v4777 = vshrl.u32 %v4776, 7
    %v4778 = vsub.s32 0, %v4777
    %v4779 = vrot.slane %v4771, %v4778
    %v4780 = vmul.f32 %v4690, %v4775
    %v4781 = vmul.f32 %v4691, %v4775
    %v4782 = vmul.f32 %v4692, %v4775
    %v4783 = vmul.f32 %v4693, %v4775
    %v4784 = vmul.f32 %v4694, %v4775
    %v4785 = vmul.f32 %v4695, %v4775
    %v4786 = vmul.f32 %v4696, %v4775
    %v4787 = vmul.f32 %v4697, %v4775
    %v4788 = vmul.f32 %v4698, %v4779
    %v4789 = vmul.f32 %v4699, %v4779
    %v4790 = vmul.f32 %v4700, %v4779
    %v4791 = vmul.f32 %v4701, %v4779
    %v4792 = vmul.f32 %v4702, %v4779
    %v4793 = vmul.f32 %v4703, %v4779
    %v4794 = vmul.f32 %v4704, %v4779
    %v4795 = vmul.f32 %v4705, %v4779
    %v4796 = vlaneseq
    %v4797 = vshrl.u32 %v4796, 7
    %v4798 = vsub.s32 0, %v4797
    %v4799 = vrot.slane %v22, %v4798
    %v4800 = vadd.f32 %v4780, %v4799
    %v4801 = vadd.f32 %v4781, %v4799
    %v4802 = vadd.f32 %v4782, %v4799
    %v4803 = vadd.f32 %v4783, %v4799
    %v4804 = vadd.f32 %v4784, %v4799
    %v4805 = vadd.f32 %v4785, %v4799
    %v4806 = vadd.f32 %v4786, %v4799
    %v4807 = vadd.f32 %v4787, %v4799
    %v4808 = vadd.f32 %v4788, %v4799
    %v4809 = vadd.f32 %v4789, %v4799
    %v4810 = vadd.f32 %v4790, %v4799
    %v4811 = vadd.f32 %v4791, %v4799
    %v4812 = vadd.f32 %v4792, %v4799
    %v4813 = vadd.f32 %v4793, %v4799
    %v4814 = vadd.f32 %v4794, %v4799
    %v4815 = vadd.f32 %v4795, %v4799
    %vm4816 = vcmp.gt.f32.partialorder %v4800, 0.0
    %vm4817 = vcmp.gt.f32.partialorder %v4801, 0.0
    %vm4818 = vcmp.gt.f32.partialorder %v4802, 0.0
    %vm4819 = vcmp.gt.f32.partialorder %v4803, 0.0
    %vm4820 = vcmp.gt.f32.partialorder %v4804, 0.0
    %vm4821 = vcmp.gt.f32.partialorder %v4805, 0.0
    %vm4822 = vcmp.gt.f32.partialorder %v4806, 0.0
    %vm4823 = vcmp.gt.f32.partialorder %v4807, 0.0
    %vm4824 = vcmp.gt.f32.partialorder %v4808, 0.0
    %vm4825 = vcmp.gt.f32.partialorder %v4809, 0.0
    %vm4826 = vcmp.gt.f32.partialorder %v4810, 0.0
    %vm4827 = vcmp.gt.f32.partialorder %v4811, 0.0
    %vm4828 = vcmp.gt.f32.partialorder %v4812, 0.0
    %vm4829 = vcmp.gt.f32.partialorder %v4813, 0.0
    %vm4830 = vcmp.gt.f32.partialorder %v4814, 0.0
    %vm4831 = vcmp.gt.f32.partialorder %v4815, 0.0
    %v4832 = vmul.f32 %v4800, 0.2
    %v4833 = vmul.f32 %v4801, 0.2
    %v4834 = vmul.f32 %v4802, 0.2
    %v4835 = vmul.f32 %v4803, 0.2
    %v4836 = vmul.f32 %v4804, 0.2
    %v4837 = vmul.f32 %v4805, 0.2
    %v4838 = vmul.f32 %v4806, 0.2
    %v4839 = vmul.f32 %v4807, 0.2
    %v4840 = vmul.f32 %v4808, 0.2
    %v4841 = vmul.f32 %v4809, 0.2
    %v4842 = vmul.f32 %v4810, 0.2
    %v4843 = vmul.f32 %v4811, 0.2
    %v4844 = vmul.f32 %v4812, 0.2
    %v4845 = vmul.f32 %v4813, 0.2
    %v4846 = vmul.f32 %v4814, 0.2
    %v4847 = vmul.f32 %v4815, 0.2
    %v4848 = vsel %vm4816, %v4800, %v4832
    %v4849 = vsel %vm4817, %v4801, %v4833
    %v4850 = vsel %vm4818, %v4802, %v4834
    %v4851 = vsel %vm4819, %v4803, %v4835
    %v4852 = vsel %vm4820, %v4804, %v4836
    %v4853 = vsel %vm4821, %v4805, %v4837
    %v4854 = vsel %vm4822, %v4806, %v4838
    %v4855 = vsel %vm4823, %v4807, %v4839
    %v4856 = vsel %vm4824, %v4808, %v4840
    %v4857 = vsel %vm4825, %v4809, %v4841
    %v4858 = vsel %vm4826, %v4810, %v4842
    %v4859 = vsel %vm4827, %v4811, %v4843
    %v4860 = vsel %vm4828, %v4812, %v4844
    %v4861 = vsel %vm4829, %v4813, %v4845
    %v4862 = vsel %vm4830, %v4814, %v4846
    %v4863 = vsel %vm4831, %v4815, %v4847
    %4864 = vxpose.xlu0.b32.start [1/16] %v4848, 128
    %4865 = vxpose.xlu0.b32.cont [2/16] %v4849, 128
    %4866 = vxpose.xlu0.b32.cont [3/16] %v4850, 128
    %4867 = vxpose.xlu0.b32.cont [4/16] %v4851, 128
    %4868 = vxpose.xlu0.b32.cont [5/16] %v4852, 128
    %4869 = vxpose.xlu0.b32.cont [6/16] %v4853, 128
    %4870 = vxpose.xlu0.b32.cont [7/16] %v4854, 128
    %4871 = vxpose.xlu0.b32.cont [8/16] %v4855, 128
    %4872 = vxpose.xlu0.b32.cont [9/16] 0.0, 128
    %4873 = vxpose.xlu0.b32.cont [10/16] 0.0, 128
    %4874 = vxpose.xlu0.b32.cont [11/16] 0.0, 128
    %4875 = vxpose.xlu0.b32.cont [12/16] 0.0, 128
    %4876 = vxpose.xlu0.b32.cont [13/16] 0.0, 128
    %4877 = vxpose.xlu0.b32.cont [14/16] 0.0, 128
    %4878 = vxpose.xlu0.b32.cont [15/16] 0.0, 128
    %4879 = vxpose.xlu0.b32.end [16/16] 0.0, 128
    %v4880 = vpop.trf.xlu0
    %v4881 = vpop.trf.xlu0
    %v4882 = vpop.trf.xlu0
    %v4883 = vpop.trf.xlu0
    %v4884 = vpop.trf.xlu0
    %v4885 = vpop.trf.xlu0
    %v4886 = vpop.trf.xlu0
    %v4887 = vpop.trf.xlu0
    %v4888 = vpop.trf.xlu0
    %v4889 = vpop.trf.xlu0
    %v4890 = vpop.trf.xlu0
    %v4891 = vpop.trf.xlu0
    %v4892 = vpop.trf.xlu0
    %v4893 = vpop.trf.xlu0
    %v4894 = vpop.trf.xlu0
    %v4895 = vpop.trf.xlu0
    %4896 = vst.msk [vmem:[#allocation3] sm:$0xff] %vm3986, %v4880
    %4897 = vst.msk [vmem:[#allocation3 + $0x8] sm:$0xff] %vm3986, %v4881
    %4898 = vst.msk [vmem:[#allocation3 + $0x10] sm:$0xff] %vm3986, %v4882
    %4899 = vst.msk [vmem:[#allocation3 + $0x18] sm:$0xff] %vm3986, %v4883
    %4900 = vxpose.xlu0.b32.start [1/16] %v4856, 128
    %4901 = vxpose.xlu0.b32.cont [2/16] %v4857, 128
    %4902 = vxpose.xlu0.b32.cont [3/16] %v4858, 128
    %4903 = vxpose.xlu0.b32.cont [4/16] %v4859, 128
    %4904 = vxpose.xlu0.b32.cont [5/16] %v4860, 128
    %4905 = vxpose.xlu0.b32.cont [6/16] %v4861, 128
    %4906 = vxpose.xlu0.b32.cont [7/16] %v4862, 128
    %4907 = vxpose.xlu0.b32.cont [8/16] %v4863, 128
    %4908 = vxpose.xlu0.b32.cont [9/16] 0.0, 128
    %4909 = vxpose.xlu0.b32.cont [10/16] 0.0, 128
    %4910 = vxpose.xlu0.b32.cont [11/16] 0.0, 128
    %4911 = vxpose.xlu0.b32.cont [12/16] 0.0, 128
    %4912 = vxpose.xlu0.b32.cont [13/16] 0.0, 128
    %4913 = vxpose.xlu0.b32.cont [14/16] 0.0, 128
    %4914 = vxpose.xlu0.b32.cont [15/16] 0.0, 128
    %4915 = vxpose.xlu0.b32.end [16/16] 0.0, 128
    %v4916 = vpop.trf.xlu0
    %v4917 = vpop.trf.xlu0
    %v4918 = vpop.trf.xlu0
    %v4919 = vpop.trf.xlu0
    %v4920 = vpop.trf.xlu0
    %v4921 = vpop.trf.xlu0
    %v4922 = vpop.trf.xlu0
    %v4923 = vpop.trf.xlu0
    %v4924 = vpop.trf.xlu0
    %v4925 = vpop.trf.xlu0
    %v4926 = vpop.trf.xlu0
    %v4927 = vpop.trf.xlu0
    %v4928 = vpop.trf.xlu0
    %v4929 = vpop.trf.xlu0
    %v4930 = vpop.trf.xlu0
    %v4931 = vpop.trf.xlu0
    %s4932 = scalar_lea.vmem [#allocation3], 32
    %4933 = vst.msk [vmem:[%s4932] sm:$0xff] %vm3986, %v4916
    %4934 = vst.msk [vmem:[%s4932 + $0x8] sm:$0xff] %vm3986, %v4917
    %4935 = vst.msk [vmem:[%s4932 + $0x10] sm:$0xff] %vm3986, %v4918
    %4936 = vst.msk [vmem:[%s4932 + $0x18] sm:$0xff] %vm3986, %v4919
    // Predicated region
    $region18: #{tpu_custom_call.1} parent=1 // pred_check
      _
    $region19: #{tpu_custom_call.1} parent=1 // pred_check_branch
      %4938 = sbr.rel (0) target = $region21
    $region20: #{tpu_custom_call.1} parent=1 // pred_region
      %s4940 = ssub.s32 1024, 1024
      %4941 = vsyncadd [#allocation4], %s4940
      %s4942 = sshll.u32 [#allocation3], 4
      %s4943 = int_to_ptr.vmem [resolvable:$true] %s4942
      %4948 = dma.vmem_to_hbm [thread:$0]  %s4943, 1024, %s4, [#allocation4], 128, 128, 8
    $region21: #{tpu_custom_call.1} parent=1 // pred_fallthru
      _
    // Predicated region
    $region22: #{tpu_custom_call.1} parent=1 // pred_check
      _
    $region23: #{tpu_custom_call.1} parent=1 // pred_check_branch
      %4950 = sbr.rel (0) target = $region25
    $region24: #{tpu_custom_call.1} parent=1 // pred_region
      %4951 = dma.done [#allocation4], 1024
    $region25: #{tpu_custom_call.1} parent=1 // pred_fallthru
      _
    %4952 = vsyncpa [#allocation4], 1

</llo_original>
